<compile_context>
chip_gen: v5e
topology: v5e:2x2
jax: 0.10.0
libtpu: 0.0.40
codegen_flags: <defaults>
</compile_context>

<pallas_src>
import functools

import jax
import jax.numpy as jnp
from jax.experimental import pallas as pl
from jax.experimental.pallas import tpu as pltpu


def _state_lstm_kernel(x_ref, abd_i_ref, abd_o_ref, w_ref, u_ref, b_ref,
                       out_ref, xg_ref, *, time_steps, mem_dim):
    D = mem_dim
    M = out_ref.shape[0]          # b_blk * N rows in this tile
    mdt = x_ref.dtype             # matmul input dtype (bf16 by default, f32 optional)

    # Loop-invariant x contribution to all 4 gates, computed once and parked in VMEM
    # scratch so it does not occupy vregs during the recurrence.
    xg_ref[...] = (jnp.dot(x_ref[...], w_ref[...],
                           preferred_element_type=jnp.float32) + b_ref[...])   # (M, 4D) f32

    def step(h, c):
        # Re-associated recurrence: ug = A_i @ (h @ U1) + A_o @ (h @ U2), with A_i/A_o
        # block-diagonal over the batch tile -> K = M MXU matmuls, 128-lane outputs,
        # zero in-kernel concatenation.
        hU = jnp.dot(h.astype(mdt), u_ref[...],
                     preferred_element_type=jnp.float32)          # (M, 8D) = [h@U1 | h@U2]
        hU1 = hU[:, :4 * D].astype(mdt)                           # lane-tile-aligned slice
        hU2 = hU[:, 4 * D:].astype(mdt)
        ug = (jnp.dot(abd_i_ref[0], hU1, preferred_element_type=jnp.float32)
              + jnp.dot(abd_o_ref[0], hU2, preferred_element_type=jnp.float32))  # (M, 4D)

        g = jax.nn.sigmoid(xg_ref[...] + ug)                      # all 4 gates: sigmoid
        gi = g[:, 0 * D:1 * D]
        go = g[:, 1 * D:2 * D]
        gf = g[:, 2 * D:3 * D]
        gu = g[:, 3 * D:4 * D]
        c_new = gf * c + gi * gu
        h_new = go * jnp.tanh(c_new)
        return h_new, c_new

    h = jnp.zeros((M, D), jnp.float32)
    c = jnp.zeros((M, D), jnp.float32)
    if time_steps <= 8:
        # Small static trip count: full unroll keeps LLO scheduling visibility.
        for _ in range(time_steps):
            h, c = step(h, c)
    else:
        # Larger T: bound live ranges with a real loop instead of unrolling.
        h, c = jax.lax.fori_loop(0, time_steps, lambda t, hc: step(*hc), (h, c))

    # TODO(synk): output last dim D=32 < 128 -> masked partial stores; lane-dense
    # (b_blk, N*D) out layout only worth it if the fold is free in h's final layout.
    out_ref[...] = h.astype(out_ref.dtype)


def _pick_b_blk(bs, n_nodes, matmul_dtype):
    """Pick a batch tile: >=128 rows per tile (fills MXU M); 2 balanced tiles when the
    batch allows it (feeds both v7x TensorCores; ~0.35us extra serial cost on v5e/v6e)."""
    sub = 16 if jnp.dtype(matmul_dtype).itemsize < 4 else 8

    def round_up(bb):
        bb = max(bb, 1)
        while (bb * n_nodes) % sub != 0:
            bb += 1
        return bb

    b_min = round_up(-(-128 // n_nodes))
    if bs >= 2 * b_min:
        return round_up(-(-bs // 2))      # two balanced tiles
    return round_up(bs)                   # single tile


def _block_diag_tiles(A, n_tiles, b_blk):
    """A: (n_tiles*b_blk, N, N) -> (n_tiles, b_blk*N, b_blk*N) block-diagonal per tile."""
    _, N, _ = A.shape
    A4 = A.reshape(n_tiles, b_blk, N, N)
    eye = jnp.eye(b_blk, dtype=A.dtype)
    out = jnp.einsum('pq,tpnm->tpnqm', eye, A4)
    return out.reshape(n_tiles, b_blk * N, b_blk * N)


def state_lstm_pallas(x_i, x_o, A_i, A_o, W1, W2, U1, U2, b, *,
                      time_steps, matmul_dtype=jnp.bfloat16, b_blk=None):
    """W1/W2/U1/U2: (D, 4D) with gate order [i|o|f|u]; b: (1, 4D)."""
    bs, N, D = x_i.shape
    if b_blk is None:
        b_blk = _pick_b_blk(bs, N, matmul_dtype)
    n_tiles = -(-bs // b_blk)
    bs_p = n_tiles * b_blk
    pad = bs_p - bs

    # Wrapper-side fusion / packing.
    x_cat = jnp.concatenate([x_i, x_o], axis=-1)        # (bs, N, 2D)
    if pad:
        x_cat = jnp.pad(x_cat, ((0, pad), (0, 0), (0, 0)))
        A_i = jnp.pad(A_i, ((0, pad), (0, 0), (0, 0)))
        A_o = jnp.pad(A_o, ((0, pad), (0, 0), (0, 0)))
    x_flat = x_cat.reshape(bs_p * N, 2 * D).astype(matmul_dtype)

    # Per-tile block-diagonal adjacency (lane-dense, K = b_blk*N for the recurrent matmul).
    A_bd_i = _block_diag_tiles(A_i, n_tiles, b_blk).astype(matmul_dtype)
    A_bd_o = _block_diag_tiles(A_o, n_tiles, b_blk).astype(matmul_dtype)

    W_cat = jnp.concatenate([W1, W2], axis=0).astype(matmul_dtype)   # (2D, 4D)
    U_hcat = jnp.concatenate([U1, U2], axis=1).astype(matmul_dtype)  # (D, 8D) = [U1 | U2]
    bias = b.astype(jnp.float32)                                     # (1, 4D)

    M = b_blk * N
    kernel = functools.partial(_state_lstm_kernel, time_steps=time_steps, mem_dim=D)

    out_flat = pl.pallas_call(
        kernel,
        out_shape=jax.ShapeDtypeStruct((bs_p * N, D), jnp.float32),
        grid_spec=pltpu.PrefetchScalarGridSpec(
            num_scalar_prefetch=0,
            grid=(n_tiles,),
            in_specs=[
                pl.BlockSpec((M, 2 * D), lambda i: (i, 0)),       # x (flattened [x_i|x_o])
                pl.BlockSpec((1, M, M), lambda i: (i, 0, 0)),     # block-diag A_i
                pl.BlockSpec((1, M, M), lambda i: (i, 0, 0)),     # block-diag A_o
                pl.BlockSpec((2 * D, 4 * D), lambda i: (0, 0)),   # [W1;W2]
                pl.BlockSpec((D, 8 * D), lambda i: (0, 0)),       # [U1|U2]
                pl.BlockSpec((1, 4 * D), lambda i: (0, 0)),       # bias
            ],
            out_specs=pl.BlockSpec((M, D), lambda i: (i, 0)),
            scratch_shapes=[pltpu.VMEM((M, 4 * D), jnp.float32)],  # loop-invariant xg
        ),
        compiler_params=pltpu.CompilerParams(dimension_semantics=("parallel",)),
    )(x_flat, A_bd_i, A_bd_o, W_cat, U_hcat, bias)

    return out_flat.reshape(bs_p, N, D)[:bs]


def state_lstm_ref(x_i, x_o, A_i, A_o, W1, W2, U1, U2, b, *, time_steps):
    """Pure-JAX reference mirroring the PyTorch forward."""
    bs, N, D = x_i.shape
    h = jnp.zeros((bs, N, D), jnp.float32)
    c = jnp.zeros((bs, N, D), jnp.float32)
    for _ in range(time_steps):
        h_i = jnp.einsum('bnm,bmd->bnd', A_i, h)
        h_o = jnp.einsum('bnm,bmd->bnd', A_o, h)
        g = (jnp.einsum('bnd,de->bne', x_i, W1)
             + jnp.einsum('bnd,de->bne', x_o, W2)
             + jnp.einsum('bnd,de->bne', h_i, U1)
             + jnp.einsum('bnd,de->bne', h_o, U2)
             + b[None, :, :])
        g = jax.nn.sigmoid(g)   # PyTorch module applies sigmoid to all 4 gates (incl. update)
        gi, go, gf, gu = g[..., 0:D], g[..., D:2*D], g[..., 2*D:3*D], g[..., 3*D:4*D]
        c = gf * c + gi * gu
        h = go * jnp.tanh(c)
    return h


def orthogonal(key, dim, gain):
    a = jax.random.normal(key, (dim, dim), jnp.float32)
    q, r = jnp.linalg.qr(a)
    q = q * jnp.sign(jnp.diagonal(r))[None, :]
    return gain * q


if __name__ == "__main__":
    bs, N, D = 16, 16, 32          # 16 graphs -> 2 batch tiles of 8 (128-row matmuls)
    time_steps = 3
    gain = 1.414

    key = jax.random.PRNGKey(0)
    keys = jax.random.split(key, 20)

    # 16 orthogonal (D, D) weights, deterministic; gate order i, o, f, u.
    ws = [orthogonal(keys[i], D, gain) for i in range(16)]
    W1 = jnp.concatenate(ws[0:4], axis=1)     # W_i1, W_o1, W_f1, W_u1
    W2 = jnp.concatenate(ws[4:8], axis=1)     # W_i2, W_o2, W_f2, W_u2
    U1 = jnp.concatenate(ws[8:12], axis=1)    # U_i1, U_o1, U_f1, U_u1
    U2 = jnp.concatenate(ws[12:16], axis=1)   # U_i2, U_o2, U_f2, U_u2
    b = jnp.zeros((1, 4 * D), jnp.float32)    # biases init to zero (as in torch)

    x_i = jax.random.normal(keys[16], (bs, N, D), jnp.float32)
    x_o = jax.random.normal(keys[17], (bs, N, D), jnp.float32)
    A_i = jax.random.uniform(keys[18], (bs, N, N), jnp.float32)
    A_o = jax.random.uniform(keys[19], (bs, N, N), jnp.float32)

    ref = state_lstm_ref(x_i, x_o, A_i, A_o, W1, W2, U1, U2, b,
                         time_steps=time_steps)

    # f32 matmul path: strict check against the reference (re-association only changes
    # f32 rounding order).
    out_f32 = state_lstm_pallas(x_i, x_o, A_i, A_o, W1, W2, U1, U2, b,
                                time_steps=time_steps, matmul_dtype=jnp.float32)
    out_f32 = jax.block_until_ready(out_f32)
    assert out_f32.shape == (bs, N, D)
    assert jnp.allclose(out_f32, ref, atol=1e-3, rtol=1e-3), "f32 mismatch vs reference"

    # Default path (bf16 matmul inputs, f32 accumulation & gate math): loose tolerance.
    out_bf16 = state_lstm_pallas(x_i, x_o, A_i, A_o, W1, W2, U1, U2, b,
                                 time_steps=time_steps)
    out_bf16 = jax.block_until_ready(out_bf16)
    assert out_bf16.shape == (bs, N, D)
    assert bool(jnp.isfinite(out_bf16).all())
    assert float(jnp.max(jnp.abs(out_bf16 - ref))) < 0.25, "bf16 path diverged from reference"

    print("KERNEL_OK")
</pallas_src>

<mosaic_0001>
module attributes {stable_mosaic.version = 11 : i64} {
  func.func @_state_lstm_kernel(%arg0: i32, %arg1: memref<128x64xf32, #tpu.memory_space<vmem>>, %arg2: memref<1x128x128xf32, #tpu.memory_space<vmem>>, %arg3: memref<1x128x128xf32, #tpu.memory_space<vmem>>, %arg4: memref<64x128xf32, #tpu.memory_space<vmem>>, %arg5: memref<32x256xf32, #tpu.memory_space<vmem>>, %arg6: memref<1x128xf32, #tpu.memory_space<vmem>>, %arg7: memref<128x32xf32, #tpu.memory_space<vmem>>, %arg8: memref<128x128xf32, #tpu.memory_space<vmem>>) attributes {dimension_semantics = [#tpu.dimension_semantics<parallel>], iteration_bounds = array<i64: 2>, scalar_prefetch = 0 : i64, scratch_operands = 1 : i64, tpu.core_type = #tpu.core_type<tc>, window_params = [{transform_indices = @transform_0, window_bounds = array<i64: 128, 64>}, {transform_indices = @transform_1, window_bounds = array<i64: 1, 128, 128>}, {transform_indices = @transform_2, window_bounds = array<i64: 1, 128, 128>}, {pipeline_mode = #tpu.pipeline_mode<synchronous>, transform_indices = @transform_3, window_bounds = array<i64: 64, 128>}, {pipeline_mode = #tpu.pipeline_mode<synchronous>, transform_indices = @transform_4, window_bounds = array<i64: 32, 256>}, {pipeline_mode = #tpu.pipeline_mode<synchronous>, transform_indices = @transform_5, window_bounds = array<i64: 1, 128>}, {transform_indices = @transform_6, window_bounds = array<i64: 128, 32>}]} {
    %c0 = arith.constant 0 : index
    %c0_0 = arith.constant 0 : index
    %0 = vector.load %arg1[%c0, %c0_0] : memref<128x64xf32, #tpu.memory_space<vmem>>, vector<128x64xf32>
    %c0_1 = arith.constant 0 : index
    %c0_2 = arith.constant 0 : index
    %1 = vector.load %arg4[%c0_1, %c0_2] : memref<64x128xf32, #tpu.memory_space<vmem>>, vector<64x128xf32>
    %cst = arith.constant dense<0.000000e+00> : vector<128x128xf32>
    %2 = tpu.matmul %0, %1, %cst {dimension_numbers = #tpu.dot_dimension_numbers<[1], [0], [0], [1], [0, 0, 1, 1], [], []>} : vector<128x64xf32>, vector<64x128xf32>, vector<128x128xf32> -> vector<128x128xf32>
    %c0_3 = arith.constant 0 : index
    %c0_4 = arith.constant 0 : index
    %3 = vector.load %arg6[%c0_3, %c0_4] : memref<1x128xf32, #tpu.memory_space<vmem>>, vector<1x128xf32>
    %4 = vector.broadcast %3 : vector<1x128xf32> to vector<128x128xf32>
    %5 = arith.addf %2, %4 : vector<128x128xf32>
    %c0_5 = arith.constant 0 : index
    %c0_6 = arith.constant 0 : index
    %6 = vector.load %arg8[%c0_5, %c0_6] : memref<128x128xf32, #tpu.memory_space<vmem>>, vector<128x128xf32>
    tpu.vector_store %arg8[%c0_5, %c0_6], %5 {strides = array<i32>} : memref<128x128xf32, #tpu.memory_space<vmem>>, vector<128x128xf32>,
    %cst_7 = arith.constant 0.000000e+00 : f32
    %7 = vector.broadcast %cst_7 : f32 to vector<128x32xf32>
    %cst_8 = arith.constant 0.000000e+00 : f32
    %8 = vector.broadcast %cst_8 : f32 to vector<128x32xf32>
    %c0_9 = arith.constant 0 : index
    %c0_10 = arith.constant 0 : index
    %9 = vector.load %arg5[%c0_9, %c0_10] : memref<32x256xf32, #tpu.memory_space<vmem>>, vector<32x256xf32>
    %cst_11 = arith.constant dense<0.000000e+00> : vector<128x256xf32>
    %10 = tpu.matmul %7, %9, %cst_11 {dimension_numbers = #tpu.dot_dimension_numbers<[1], [0], [0], [1], [0, 0, 1, 1], [], []>} : vector<128x32xf32>, vector<32x256xf32>, vector<128x256xf32> -> vector<128x256xf32>
    %11 = vector.extract_strided_slice %10 {offsets = [0, 0], sizes = [128, 128], strides = [1, 1]} : vector<128x256xf32> to vector<128x128xf32>
    %12 = vector.extract_strided_slice %10 {offsets = [0, 128], sizes = [128, 128], strides = [1, 1]} : vector<128x256xf32> to vector<128x128xf32>
    %c0_12 = arith.constant 0 : index
    %c0_13 = arith.constant 0 : index
    %c0_14 = arith.constant 0 : index
    %13 = vector.load %arg2[%c0_12, %c0_13, %c0_14] : memref<1x128x128xf32, #tpu.memory_space<vmem>>, vector<1x128x128xf32>
    %14 = vector.shape_cast %13 : vector<1x128x128xf32> to vector<128x128xf32>
    %cst_15 = arith.constant dense<0.000000e+00> : vector<128x128xf32>
    %15 = tpu.matmul %14, %11, %cst_15 {dimension_numbers = #tpu.dot_dimension_numbers<[1], [0], [0], [1], [0, 0, 1, 1], [], []>} : vector<128x128xf32>, vector<128x128xf32>, vector<128x128xf32> -> vector<128x128xf32>
    %c0_16 = arith.constant 0 : index
    %c0_17 = arith.constant 0 : index
    %c0_18 = arith.constant 0 : index
    %16 = vector.load %arg3[%c0_16, %c0_17, %c0_18] : memref<1x128x128xf32, #tpu.memory_space<vmem>>, vector<1x128x128xf32>
    %17 = vector.shape_cast %16 : vector<1x128x128xf32> to vector<128x128xf32>
    %cst_19 = arith.constant dense<0.000000e+00> : vector<128x128xf32>
    %18 = tpu.matmul %17, %12, %cst_19 {dimension_numbers = #tpu.dot_dimension_numbers<[1], [0], [0], [1], [0, 0, 1, 1], [], []>} : vector<128x128xf32>, vector<128x128xf32>, vector<128x128xf32> -> vector<128x128xf32>
    %19 = arith.addf %15, %18 : vector<128x128xf32>
    %c0_20 = arith.constant 0 : index
    %c0_21 = arith.constant 0 : index
    %20 = vector.load %arg8[%c0_20, %c0_21] : memref<128x128xf32, #tpu.memory_space<vmem>>, vector<128x128xf32>
    %21 = arith.addf %20, %19 : vector<128x128xf32>
    %22 = arith.negf %21 : vector<128x128xf32>
    %23 = math.exp %22 : vector<128x128xf32>
    %cst_22 = arith.constant 1.000000e+00 : f32
    %24 = vector.broadcast %cst_22 : f32 to vector<128x128xf32>
    %25 = arith.addf %24, %23 : vector<128x128xf32>
    %26 = arith.divf %24, %25 : vector<128x128xf32>
    %27 = vector.extract_strided_slice %26 {offsets = [0, 0], sizes = [128, 32], strides = [1, 1]} : vector<128x128xf32> to vector<128x32xf32>
    %28 = vector.extract_strided_slice %26 {offsets = [0, 32], sizes = [128, 32], strides = [1, 1]} : vector<128x128xf32> to vector<128x32xf32>
    %29 = vector.extract_strided_slice %26 {offsets = [0, 64], sizes = [128, 32], strides = [1, 1]} : vector<128x128xf32> to vector<128x32xf32>
    %30 = vector.extract_strided_slice %26 {offsets = [0, 96], sizes = [128, 32], strides = [1, 1]} : vector<128x128xf32> to vector<128x32xf32>
    %31 = arith.mulf %29, %8 : vector<128x32xf32>
    %32 = arith.mulf %27, %30 : vector<128x32xf32>
    %33 = arith.addf %31, %32 : vector<128x32xf32>
    %34 = math.tanh %33 : vector<128x32xf32>
    %35 = arith.mulf %28, %34 : vector<128x32xf32>
    %c0_23 = arith.constant 0 : index
    %c0_24 = arith.constant 0 : index
    %36 = vector.load %arg5[%c0_23, %c0_24] : memref<32x256xf32, #tpu.memory_space<vmem>>, vector<32x256xf32>
    %cst_25 = arith.constant dense<0.000000e+00> : vector<128x256xf32>
    %37 = tpu.matmul %35, %36, %cst_25 {dimension_numbers = #tpu.dot_dimension_numbers<[1], [0], [0], [1], [0, 0, 1, 1], [], []>} : vector<128x32xf32>, vector<32x256xf32>, vector<128x256xf32> -> vector<128x256xf32>
    %38 = vector.extract_strided_slice %37 {offsets = [0, 0], sizes = [128, 128], strides = [1, 1]} : vector<128x256xf32> to vector<128x128xf32>
    %39 = vector.extract_strided_slice %37 {offsets = [0, 128], sizes = [128, 128], strides = [1, 1]} : vector<128x256xf32> to vector<128x128xf32>
    %c0_26 = arith.constant 0 : index
    %c0_27 = arith.constant 0 : index
    %c0_28 = arith.constant 0 : index
    %40 = vector.load %arg2[%c0_26, %c0_27, %c0_28] : memref<1x128x128xf32, #tpu.memory_space<vmem>>, vector<1x128x128xf32>
    %41 = vector.shape_cast %40 : vector<1x128x128xf32> to vector<128x128xf32>
    %cst_29 = arith.constant dense<0.000000e+00> : vector<128x128xf32>
    %42 = tpu.matmul %41, %38, %cst_29 {dimension_numbers = #tpu.dot_dimension_numbers<[1], [0], [0], [1], [0, 0, 1, 1], [], []>} : vector<128x128xf32>, vector<128x128xf32>, vector<128x128xf32> -> vector<128x128xf32>
    %c0_30 = arith.constant 0 : index
    %c0_31 = arith.constant 0 : index
    %c0_32 = arith.constant 0 : index
    %43 = vector.load %arg3[%c0_30, %c0_31, %c0_32] : memref<1x128x128xf32, #tpu.memory_space<vmem>>, vector<1x128x128xf32>
    %44 = vector.shape_cast %43 : vector<1x128x128xf32> to vector<128x128xf32>
    %cst_33 = arith.constant dense<0.000000e+00> : vector<128x128xf32>
    %45 = tpu.matmul %44, %39, %cst_33 {dimension_numbers = #tpu.dot_dimension_numbers<[1], [0], [0], [1], [0, 0, 1, 1], [], []>} : vector<128x128xf32>, vector<128x128xf32>, vector<128x128xf32> -> vector<128x128xf32>
    %46 = arith.addf %42, %45 : vector<128x128xf32>
    %c0_34 = arith.constant 0 : index
    %c0_35 = arith.constant 0 : index
    %47 = vector.load %arg8[%c0_34, %c0_35] : memref<128x128xf32, #tpu.memory_space<vmem>>, vector<128x128xf32>
    %48 = arith.addf %47, %46 : vector<128x128xf32>
    %49 = arith.negf %48 : vector<128x128xf32>
    %50 = math.exp %49 : vector<128x128xf32>
    %cst_36 = arith.constant 1.000000e+00 : f32
    %51 = vector.broadcast %cst_36 : f32 to vector<128x128xf32>
    %52 = arith.addf %51, %50 : vector<128x128xf32>
    %53 = arith.divf %51, %52 : vector<128x128xf32>
    %54 = vector.extract_strided_slice %53 {offsets = [0, 0], sizes = [128, 32], strides = [1, 1]} : vector<128x128xf32> to vector<128x32xf32>
    %55 = vector.extract_strided_slice %53 {offsets = [0, 32], sizes = [128, 32], strides = [1, 1]} : vector<128x128xf32> to vector<128x32xf32>
    %56 = vector.extract_strided_slice %53 {offsets = [0, 64], sizes = [128, 32], strides = [1, 1]} : vector<128x128xf32> to vector<128x32xf32>
    %57 = vector.extract_strided_slice %53 {offsets = [0, 96], sizes = [128, 32], strides = [1, 1]} : vector<128x128xf32> to vector<128x32xf32>
    %58 = arith.mulf %56, %33 : vector<128x32xf32>
    %59 = arith.mulf %54, %57 : vector<128x32xf32>
    %60 = arith.addf %58, %59 : vector<128x32xf32>
    %61 = math.tanh %60 : vector<128x32xf32>
    %62 = arith.mulf %55, %61 : vector<128x32xf32>
    %c0_37 = arith.constant 0 : index
    %c0_38 = arith.constant 0 : index
    %63 = vector.load %arg5[%c0_37, %c0_38] : memref<32x256xf32, #tpu.memory_space<vmem>>, vector<32x256xf32>
    %cst_39 = arith.constant dense<0.000000e+00> : vector<128x256xf32>
    %64 = tpu.matmul %62, %63, %cst_39 {dimension_numbers = #tpu.dot_dimension_numbers<[1], [0], [0], [1], [0, 0, 1, 1], [], []>} : vector<128x32xf32>, vector<32x256xf32>, vector<128x256xf32> -> vector<128x256xf32>
    %65 = vector.extract_strided_slice %64 {offsets = [0, 0], sizes = [128, 128], strides = [1, 1]} : vector<128x256xf32> to vector<128x128xf32>
    %66 = vector.extract_strided_slice %64 {offsets = [0, 128], sizes = [128, 128], strides = [1, 1]} : vector<128x256xf32> to vector<128x128xf32>
    %c0_40 = arith.constant 0 : index
    %c0_41 = arith.constant 0 : index
    %c0_42 = arith.constant 0 : index
    %67 = vector.load %arg2[%c0_40, %c0_41, %c0_42] : memref<1x128x128xf32, #tpu.memory_space<vmem>>, vector<1x128x128xf32>
    %68 = vector.shape_cast %67 : vector<1x128x128xf32> to vector<128x128xf32>
    %cst_43 = arith.constant dense<0.000000e+00> : vector<128x128xf32>
    %69 = tpu.matmul %68, %65, %cst_43 {dimension_numbers = #tpu.dot_dimension_numbers<[1], [0], [0], [1], [0, 0, 1, 1], [], []>} : vector<128x128xf32>, vector<128x128xf32>, vector<128x128xf32> -> vector<128x128xf32>
    %c0_44 = arith.constant 0 : index
    %c0_45 = arith.constant 0 : index
    %c0_46 = arith.constant 0 : index
    %70 = vector.load %arg3[%c0_44, %c0_45, %c0_46] : memref<1x128x128xf32, #tpu.memory_space<vmem>>, vector<1x128x128xf32>
    %71 = vector.shape_cast %70 : vector<1x128x128xf32> to vector<128x128xf32>
    %cst_47 = arith.constant dense<0.000000e+00> : vector<128x128xf32>
    %72 = tpu.matmul %71, %66, %cst_47 {dimension_numbers = #tpu.dot_dimension_numbers<[1], [0], [0], [1], [0, 0, 1, 1], [], []>} : vector<128x128xf32>, vector<128x128xf32>, vector<128x128xf32> -> vector<128x128xf32>
    %73 = arith.addf %69, %72 : vector<128x128xf32>
    %c0_48 = arith.constant 0 : index
    %c0_49 = arith.constant 0 : index
    %74 = vector.load %arg8[%c0_48, %c0_49] : memref<128x128xf32, #tpu.memory_space<vmem>>, vector<128x128xf32>
    %75 = arith.addf %74, %73 : vector<128x128xf32>
    %76 = arith.negf %75 : vector<128x128xf32>
    %77 = math.exp %76 : vector<128x128xf32>
    %cst_50 = arith.constant 1.000000e+00 : f32
    %78 = vector.broadcast %cst_50 : f32 to vector<128x128xf32>
    %79 = arith.addf %78, %77 : vector<128x128xf32>
    %80 = arith.divf %78, %79 : vector<128x128xf32>
    %81 = vector.extract_strided_slice %80 {offsets = [0, 0], sizes = [128, 32], strides = [1, 1]} : vector<128x128xf32> to vector<128x32xf32>
    %82 = vector.extract_strided_slice %80 {offsets = [0, 32], sizes = [128, 32], strides = [1, 1]} : vector<128x128xf32> to vector<128x32xf32>
    %83 = vector.extract_strided_slice %80 {offsets = [0, 64], sizes = [128, 32], strides = [1, 1]} : vector<128x128xf32> to vector<128x32xf32>
    %84 = vector.extract_strided_slice %80 {offsets = [0, 96], sizes = [128, 32], strides = [1, 1]} : vector<128x128xf32> to vector<128x32xf32>
    %85 = arith.mulf %83, %60 : vector<128x32xf32>
    %86 = arith.mulf %81, %84 : vector<128x32xf32>
    %87 = arith.addf %85, %86 : vector<128x32xf32>
    %88 = math.tanh %87 : vector<128x32xf32>
    %89 = arith.mulf %82, %88 : vector<128x32xf32>
    %c0_51 = arith.constant 0 : index
    %c0_52 = arith.constant 0 : index
    %90 = vector.load %arg7[%c0_51, %c0_52] : memref<128x32xf32, #tpu.memory_space<vmem>>, vector<128x32xf32>
    tpu.vector_store %arg7[%c0_51, %c0_52], %89 {strides = array<i32>} : memref<128x32xf32, #tpu.memory_space<vmem>>, vector<128x32xf32>,
    return
  }
  func.func @transform_0(%arg0: i32) -> (i32, i32) {
    %c0_i32 = arith.constant 0 : i32
    %c0_i32_0 = arith.constant 0 : i32
    return %arg0, %c0_i32 : i32, i32
  }
  func.func @transform_1(%arg0: i32) -> (i32, i32, i32) {
    %c0_i32 = arith.constant 0 : i32
    %c0_i32_0 = arith.constant 0 : i32
    %c0_i32_1 = arith.constant 0 : i32
    return %arg0, %c0_i32, %c0_i32_0 : i32, i32, i32
  }
  func.func @transform_2(%arg0: i32) -> (i32, i32, i32) {
    %c0_i32 = arith.constant 0 : i32
    %c0_i32_0 = arith.constant 0 : i32
    %c0_i32_1 = arith.constant 0 : i32
    return %arg0, %c0_i32, %c0_i32_0 : i32, i32, i32
  }
  func.func @transform_3(%arg0: i32) -> (i32, i32) {
    %c0_i32 = arith.constant 0 : i32
    %c0_i32_0 = arith.constant 0 : i32
    %c0_i32_1 = arith.constant 0 : i32
    return %c0_i32, %c0_i32_0 : i32, i32
  }
  func.func @transform_4(%arg0: i32) -> (i32, i32) {
    %c0_i32 = arith.constant 0 : i32
    %c0_i32_0 = arith.constant 0 : i32
    %c0_i32_1 = arith.constant 0 : i32
    return %c0_i32, %c0_i32_0 : i32, i32
  }
  func.func @transform_5(%arg0: i32) -> (i32, i32) {
    %c0_i32 = arith.constant 0 : i32
    %c0_i32_0 = arith.constant 0 : i32
    %c0_i32_1 = arith.constant 0 : i32
    return %c0_i32, %c0_i32_0 : i32, i32
  }
  func.func @transform_6(%arg0: i32) -> (i32, i32) {
    %c0_i32 = arith.constant 0 : i32
    %c0_i32_0 = arith.constant 0 : i32
    return %arg0, %c0_i32 : i32, i32
  }
}

</mosaic_0001>

<llo_original>
// kernel: tpu_custom_call.1
$region0: #{tpu_custom_call.1}
  #allocation0 [shape = 'u32[]', space=smem, size = 0x4, offset = 0x4, fixed_abs, tag = 'smem constant byte address 0x4 - core index']
  #allocation1 [shape = 'u32[72,128]{1,0:T(1,128)}', space=vmem, size = 0x9000, scoped, tag = 'internal scratch']
  #allocation2 [shape = 'f32[128,128]{1,0:T(8,128)}', space=vmem, size = 0x10000, scoped, tag = 'scratch operand']
  %s0 = inlined_call_operand.vmem [shape: f32[256,64], index: 0, kind: input, shape index: {}]
  %s1 = inlined_call_operand.vmem [shape: f32[2,128,128], index: 1, kind: input, shape index: {}]
  %s2 = inlined_call_operand.hbm [shape: f32[2,128,128], index: 2, kind: input, shape index: {}]
  %s3 = inlined_call_operand.vmem [shape: f32[64,128], index: 3, kind: input, shape index: {}]
  %s4 = inlined_call_operand.vmem [shape: f32[32,256], index: 4, kind: input, shape index: {}]
  %s5 = inlined_call_operand.vmem [shape: f32[1,128], index: 5, kind: input, shape index: {}]
  %s6 = inlined_call_operand.vmem [shape: f32[256,32], index: 6, kind: output, shape index: {}]
  %s7 = sld [smem:[#allocation0]]
  $region61: #{tpu_custom_call.1} parent=0
    _
  %s9 = ssub.s32 1, %s7
  %s10 = scalar_select 0, %s9, %s7
  $region1: #{tpu_custom_call.1} parent=0
    #allocation3 [shape = 'u8[131072]{0}', space=vmem, size = 0x20000, scoped, tag = 'input window, operand 2']
    #allocation4 [shape = 's32[2]{0}', space=sflag, size = 0x8, scoped, tag = 'scoped memory for tpu_custom_call.1']
    %11 = vsyncpa [#allocation4], 0
    %s12 = scalar_lea.sflag [#allocation4], 1
    %13 = vsyncpa %s12, 0
    loop: start=0, step=1, limit=4
    $region2: #{tpu_custom_call.1} parent=1 // loop_pre_header
      _
    $region3: #{tpu_custom_call.1} parent=1 // loop_header
      %s15 = sphi 0, %s19
      %p16 = scmp.ge.s32.totalorder %s15, 4
      %s25 = sphi 0, %s27
      %s28 = sphi 0, %s25
      %s29 = sphi 0, %s28
      %s45 = sphi 0, %s29
      %s51 = sphi 0, %s53
      %s54 = sphi 0, %s51
      %s55 = sphi 0, %s54
      %s71 = sphi 0, %s55
      %s77 = sphi 0, %s79
      %s80 = sphi 0, %s77
      %s81 = sphi 0, %s80
      %s97 = sphi 0, %s81
      %s101 = sphi 0, %s101
      %s103 = sphi 0, %s101
      %s104 = sphi 0, %s103
      %s118 = sphi 0, %s104
      %s122 = sphi 0, %s122
      %s124 = sphi 0, %s122
      %s125 = sphi 0, %s124
      %s139 = sphi 0, %s125
      %s143 = sphi 0, %s143
      %s145 = sphi 0, %s143
      %s146 = sphi 0, %s145
      %s160 = sphi 0, %s146
      %s166 = sphi 0, %s168
      %s169 = sphi 0, %s166
      %s170 = sphi 0, %s169
      %s186 = sphi 0, %s170
    $region4: #{tpu_custom_call.1} parent=1 // loop_header_branch
      %18 = sbr.rel (%p16) target = $region8
    $region5: #{tpu_custom_call.1} parent=1 // loop_body
      %s20 = ssub.s32 %s15, 1
      %s21 = ssub.s32 %s15, 2
      %s22 = sadd.s32 %s15, 1
      %s23 = ssub.s32 %s15, %s22
      %p24 = scmp.eq.s32.totalorder %s23, 0
      %s26 = sadd.s32 %s25, 1
      %s27 = scalar_select %p24, %s25, %s26
      %p30 = pneg %p24
      %p31 = scmp.eq.s32.totalorder %s15, 1
      %p32 = por %p30, %p31
      %p33 = scmp.ne.s32.totalorder %s25, %s28
      %p34 = scmp.eq.s32.totalorder %s15, 0
      %p35 = por %p33, %p34
      %p36 = scmp.ne.s32.totalorder %s25, %s28
      %p37 = scmp.eq.s32.totalorder %s20, 1
      %p38 = por %p36, %p37
      %p39 = scmp.ne.s32.totalorder %s28, %s29
      %p40 = scmp.eq.s32.totalorder %s20, 0
      %p41 = por %p39, %p40
      %p42 = scmp.ne.s32.totalorder %s28, %s29
      %p43 = scmp.eq.s32.totalorder %s21, 1
      %p44 = por %p42, %p43
      %p46 = scmp.ne.s32.totalorder %s29, %s45
      %p47 = scmp.eq.s32.totalorder %s21, 0
      %p48 = por %p46, %p47
      %s49 = ssub.s32 %s15, %s22
      %p50 = scmp.eq.s32.totalorder %s49, 0
      %s52 = sadd.s32 %s51, 1
      %s53 = scalar_select %p50, %s51, %s52
      %p56 = pneg %p50
      %p57 = scmp.eq.s32.totalorder %s15, 1
      %p58 = por %p56, %p57
      %p59 = scmp.ne.s32.totalorder %s51, %s54
      %p60 = scmp.eq.s32.totalorder %s15, 0
      %p61 = por %p59, %p60
      %p62 = scmp.ne.s32.totalorder %s51, %s54
      %p63 = scmp.eq.s32.totalorder %s20, 1
      %p64 = por %p62, %p63
      %p65 = scmp.ne.s32.totalorder %s54, %s55
      %p66 = scmp.eq.s32.totalorder %s20, 0
      %p67 = por %p65, %p66
      %p68 = scmp.ne.s32.totalorder %s54, %s55
      %p69 = scmp.eq.s32.totalorder %s21, 1
      %p70 = por %p68, %p69
      %p72 = scmp.ne.s32.totalorder %s55, %s71
      %p73 = scmp.eq.s32.totalorder %s21, 0
      %p74 = por %p72, %p73
      %s75 = ssub.s32 %s15, %s22
      %p76 = scmp.eq.s32.totalorder %s75, 0
      %s78 = sadd.s32 %s77, 1
      %s79 = scalar_select %p76, %s77, %s78
      %p82 = pneg %p76
      %p83 = scmp.eq.s32.totalorder %s15, 1
      %p84 = por %p82, %p83
      %p85 = scmp.ne.s32.totalorder %s77, %s80
      %p86 = scmp.eq.s32.totalorder %s15, 0
      %p87 = por %p85, %p86
      %p88 = scmp.ne.s32.totalorder %s77, %s80
      %p89 = scmp.eq.s32.totalorder %s20, 1
      %p90 = por %p88, %p89
      %p91 = scmp.ne.s32.totalorder %s80, %s81
      %p92 = scmp.eq.s32.totalorder %s20, 0
      %p93 = por %p91, %p92
      %p94 = scmp.ne.s32.totalorder %s80, %s81
      %p95 = scmp.eq.s32.totalorder %s21, 1
      %p96 = por %p94, %p95
      %p98 = scmp.ne.s32.totalorder %s81, %s97
      %p99 = scmp.eq.s32.totalorder %s21, 0
      %p100 = por %p98, %p99
      %s102 = sadd.s32 %s101, 1
      %p105 = scmp.eq.s32.totalorder %s15, 1
      %p106 = scmp.ne.s32.totalorder %s101, %s103
      %p107 = scmp.eq.s32.totalorder %s15, 0
      %p108 = por %p106, %p107
      %p109 = scmp.ne.s32.totalorder %s101, %s103
      %p110 = scmp.eq.s32.totalorder %s20, 1
      %p111 = por %p109, %p110
      %p112 = scmp.ne.s32.totalorder %s103, %s104
      %p113 = scmp.eq.s32.totalorder %s20, 0
      %p114 = por %p112, %p113
      %p115 = scmp.ne.s32.totalorder %s103, %s104
      %p116 = scmp.eq.s32.totalorder %s21, 1
      %p117 = por %p115, %p116
      %p119 = scmp.ne.s32.totalorder %s104, %s118
      %p120 = scmp.eq.s32.totalorder %s21, 0
      %p121 = por %p119, %p120
      %s123 = sadd.s32 %s122, 1
      %p126 = scmp.eq.s32.totalorder %s15, 1
      %p127 = scmp.ne.s32.totalorder %s122, %s124
      %p128 = scmp.eq.s32.totalorder %s15, 0
      %p129 = por %p127, %p128
      %p130 = scmp.ne.s32.totalorder %s122, %s124
      %p131 = scmp.eq.s32.totalorder %s20, 1
      %p132 = por %p130, %p131
      %p133 = scmp.ne.s32.totalorder %s124, %s125
      %p134 = scmp.eq.s32.totalorder %s20, 0
      %p135 = por %p133, %p134
      %p136 = scmp.ne.s32.totalorder %s124, %s125
      %p137 = scmp.eq.s32.totalorder %s21, 1
      %p138 = por %p136, %p137
      %p140 = scmp.ne.s32.totalorder %s125, %s139
      %p141 = scmp.eq.s32.totalorder %s21, 0
      %p142 = por %p140, %p141
      %s144 = sadd.s32 %s143, 1
      %p147 = scmp.eq.s32.totalorder %s15, 1
      %p148 = scmp.ne.s32.totalorder %s143, %s145
      %p149 = scmp.eq.s32.totalorder %s15, 0
      %p150 = por %p148, %p149
      %p151 = scmp.ne.s32.totalorder %s143, %s145
      %p152 = scmp.eq.s32.totalorder %s20, 1
      %p153 = por %p151, %p152
      %p154 = scmp.ne.s32.totalorder %s145, %s146
      %p155 = scmp.eq.s32.totalorder %s20, 0
      %p156 = por %p154, %p155
      %p157 = scmp.ne.s32.totalorder %s145, %s146
      %p158 = scmp.eq.s32.totalorder %s21, 1
      %p159 = por %p157, %p158
      %p161 = scmp.ne.s32.totalorder %s146, %s160
      %p162 = scmp.eq.s32.totalorder %s21, 0
      %p163 = por %p161, %p162
      %s164 = ssub.s32 %s15, %s22
      %p165 = scmp.eq.s32.totalorder %s164, 0
      %s167 = sadd.s32 %s166, 1
      %s168 = scalar_select %p165, %s166, %s167
      %p171 = pneg %p165
      %p172 = scmp.eq.s32.totalorder %s15, 1
      %p173 = por %p171, %p172
      %p174 = scmp.ne.s32.totalorder %s166, %s169
      %p175 = scmp.eq.s32.totalorder %s15, 0
      %p176 = por %p174, %p175
      %p177 = scmp.ne.s32.totalorder %s166, %s169
      %p178 = scmp.eq.s32.totalorder %s20, 1
      %p179 = por %p177, %p178
      %p180 = scmp.ne.s32.totalorder %s169, %s170
      %p181 = scmp.eq.s32.totalorder %s20, 0
      %p182 = por %p180, %p181
      %p183 = scmp.ne.s32.totalorder %s169, %s170
      %p184 = scmp.eq.s32.totalorder %s21, 1
      %p185 = por %p183, %p184
      %p187 = scmp.ne.s32.totalorder %s170, %s186
      %p188 = scmp.eq.s32.totalorder %s21, 0
      %p189 = por %p187, %p188
      %p190 = scmp.le.s32.totalorder 1, %s15
      %p191 = scmp.lt.s32.totalorder %s15, 3
      %p192 = pnand %p190, %p191
      %p193 = pneg %p192
      // Predicated region
      $region9: #{tpu_custom_call.1} parent=5 // pred_check
        _
      $region10: #{tpu_custom_call.1} parent=5 // pred_check_branch
        %195 = sbr.rel (%p192) target = $region12
      $region11: #{tpu_custom_call.1} parent=5 // pred_region
        %s196 = ssub.s32 %s15, 1
        // Predicated region
        $region13: #{tpu_custom_call.1} parent=11 // pred_check
          %p197 = pneg %p114
        $region14: #{tpu_custom_call.1} parent=11 // pred_check_branch
          %199 = sbr.rel (%p197) target = $region16
        $region15: #{tpu_custom_call.1} parent=11 // pred_region
          _
        $region16: #{tpu_custom_call.1} parent=11 // pred_fallthru
          _
        // Predicated region
        $region17: #{tpu_custom_call.1} parent=11 // pred_check
          %p200 = pneg %p135
        $region18: #{tpu_custom_call.1} parent=11 // pred_check_branch
          %202 = sbr.rel (%p200) target = $region20
        $region19: #{tpu_custom_call.1} parent=11 // pred_region
          _
        $region20: #{tpu_custom_call.1} parent=11 // pred_fallthru
          _
        // Predicated region
        $region21: #{tpu_custom_call.1} parent=11 // pred_check
          %p203 = pneg %p156
        $region22: #{tpu_custom_call.1} parent=11 // pred_check_branch
          %205 = sbr.rel (%p203) target = $region24
        $region23: #{tpu_custom_call.1} parent=11 // pred_region
          _
        $region24: #{tpu_custom_call.1} parent=11 // pred_fallthru
          _
      $region12: #{tpu_custom_call.1} parent=5 // pred_fallthru
        _
      %p206 = scmp.lt.s32.totalorder %s15, 2
      // Predicated region
      $region25: #{tpu_custom_call.1} parent=5 // pred_check
        %p207 = pneg %p206
      $region26: #{tpu_custom_call.1} parent=5 // pred_check_branch
        %209 = sbr.rel (%p207) target = $region28
      $region27: #{tpu_custom_call.1} parent=5 // pred_region
        // Predicated region
        $region29: #{tpu_custom_call.1} parent=27 // pred_check
          %p210 = pneg %p35
        $region30: #{tpu_custom_call.1} parent=27 // pred_check_branch
          %212 = sbr.rel (%p210) target = $region32
        $region31: #{tpu_custom_call.1} parent=27 // pred_region
          %s213 = smul.u32 16, %s15
          %p214 = scmp.lt.s32.totalorder %s213, 31
          %s215 = scalar_select %p214, %s213, 31
          %s216 = smul.addr %s215, 8
          %s217 = scalar_lea.vmem %s0, %s216
          %s218 = smul.u32 16, %s15
        $region32: #{tpu_custom_call.1} parent=27 // pred_fallthru
          _
        // Predicated region
        $region33: #{tpu_custom_call.1} parent=27 // pred_check
          %p219 = pneg %p61
        $region34: #{tpu_custom_call.1} parent=27 // pred_check_branch
          %221 = sbr.rel (%p219) target = $region36
        $region35: #{tpu_custom_call.1} parent=27 // pred_region
          %p222 = scmp.lt.s32.totalorder %s15, 1
          %s223 = scalar_select %p222, %s15, 1
          %s224 = smul.addr %s223, 16
          %s225 = smul.addr %s224, 8
          %s226 = scalar_lea.vmem %s1, %s225
        $region36: #{tpu_custom_call.1} parent=27 // pred_fallthru
          _
        // Predicated region
        $region37: #{tpu_custom_call.1} parent=27 // pred_check
          %p227 = pneg %p87
        $region38: #{tpu_custom_call.1} parent=27 // pred_check_branch
          %229 = sbr.rel (%p227) target = $region40
        $region39: #{tpu_custom_call.1} parent=27 // pred_region
          %s230 = sand.u32 %s77, 1
          %s231 = scalar_lea.sflag [#allocation4], %s230
          %s232 = sand.u32 %s77, 1
          %s233 = smul.addr %s232, 128
          %s234 = scalar_lea.vmem [#allocation3], %s233
          %236 = vsyncadd %s231, 0
          %s237 = smul.addr %s15, 16
          %s238 = smul.addr %s237, 8
          %s239 = scalar_lea.hbm %s2, %s238
          %s240 = sshll.u32 %s239, 4
          %s241 = int_to_ptr.hbm [resolvable:$true] %s240
          %s242 = sshll.u32 %s234, 4
          %s243 = int_to_ptr.vmem [resolvable:$true] %s242
          %248 = dma.hbm_to_vmem [thread:$0]  %s241, 2048, %s243, %s231, 128, 128, 8
        $region40: #{tpu_custom_call.1} parent=27 // pred_fallthru
          _
      $region28: #{tpu_custom_call.1} parent=5 // pred_fallthru
        _
      %p249 = scmp.le.s32.totalorder 1, %s15
      %p250 = scmp.lt.s32.totalorder %s15, 3
      %p251 = pnand %p249, %p250
      %p252 = pneg %p251
      // Predicated region
      $region41: #{tpu_custom_call.1} parent=5 // pred_check
        _
      $region42: #{tpu_custom_call.1} parent=5 // pred_check_branch
        %254 = sbr.rel (%p251) target = $region44
      $region43: #{tpu_custom_call.1} parent=5 // pred_region
        %s255 = ssub.s32 %s15, 1
        %s256 = sand.u32 %s80, 1
        %s257 = scalar_lea.sflag [#allocation4], %s256
        %s258 = sand.u32 %s80, 1
        %s259 = smul.addr %s258, 128
        %s260 = scalar_lea.vmem [#allocation3], %s259
        // Predicated region
        $region45: #{tpu_custom_call.1} parent=43 // pred_check
          %p261 = pneg %p93
        $region46: #{tpu_custom_call.1} parent=43 // pred_check_branch
          %263 = sbr.rel (%p261) target = $region48
        $region47: #{tpu_custom_call.1} parent=43 // pred_region
          %265 = dma.done %s257, 2048
        $region48: #{tpu_custom_call.1} parent=43 // pred_fallthru
          _
        %s266 = smul.u32 16, %s20
        %p267 = scmp.lt.s32.totalorder %s266, 31
        %s268 = scalar_select %p267, %s266, 31
        %s269 = smul.addr %s268, 8
        %s270 = scalar_lea.vmem %s0, %s269
        %p271 = pneg %p41
        %p272 = pneg %p38
        %p273 = scmp.lt.s32.totalorder %s20, 1
        %s274 = scalar_select %p273, %s20, 1
        %s275 = smul.addr %s274, 16
        %s276 = smul.addr %s275, 8
        %s277 = scalar_lea.vmem %s1, %s276
        %p278 = pneg %p67
        %p279 = pneg %p64
        %s280 = sand.u32 %s80, 1
        %s281 = scalar_lea.sflag [#allocation4], %s280
        %s282 = sand.u32 %s80, 1
        %s283 = smul.addr %s282, 128
        %s284 = scalar_lea.vmem [#allocation3], %s283
        %p285 = pneg %p93
        %p286 = pneg %p90
        %p287 = pneg %p114
        %p288 = pneg %p111
        %p289 = pneg %p135
        %p290 = pneg %p132
        %p291 = pneg %p156
        %p292 = pneg %p153
        %p293 = pneg %p182
        %p294 = pneg %p179
        %s295 = smul.u32 16, %s20
        %p296 = scmp.lt.s32.totalorder %s295, 31
        %s297 = scalar_select %p296, %s295, 31
        %s298 = smul.addr %s297, 8
        %s299 = scalar_lea.vmem %s6, %s298
        %s300 = smul.u32 16, %s20
        %p301 = scmp.lt.s32.totalorder %s300, 31
        %s302 = scalar_select %p301, %s300, 31
        %s303 = smul.addr %s302, 8
        %s304 = scalar_lea.vmem %s0, %s303
        %s305 = smul.u32 16, %s20
        %p306 = scmp.lt.s32.totalorder %s20, 1
        %s307 = scalar_select %p306, %s20, 1
        %s308 = smul.addr %s307, 16
        %s309 = smul.addr %s308, 8
        %s310 = scalar_lea.vmem %s1, %s309
        %s311 = smul.u32 16, %s20
        %p312 = scmp.lt.s32.totalorder %s311, 31
        %s313 = scalar_select %p312, %s311, 31
        %s314 = smul.addr %s313, 8
        %s315 = scalar_lea.vmem %s6, %s314
        %s316 = smul.u32 16, %s20
        %v317 = vld [vmem:[%s304] sm:$0xff]
        %v318 = vld [vmem:[%s304 + $0x8] sm:$0xff]
        %v319 = vld [vmem:[%s304 + $0x10] sm:$0xff]
        %v320 = vld [vmem:[%s304 + $0x18] sm:$0xff]
        %v321 = vld [vmem:[%s304 + $0x20] sm:$0xff]
        %v322 = vld [vmem:[%s304 + $0x28] sm:$0xff]
        %v323 = vld [vmem:[%s304 + $0x30] sm:$0xff]
        %v324 = vld [vmem:[%s304 + $0x38] sm:$0xff]
        %v325 = vld [vmem:[%s304 + $0x40] sm:$0xff]
        %v326 = vld [vmem:[%s304 + $0x48] sm:$0xff]
        %v327 = vld [vmem:[%s304 + $0x50] sm:$0xff]
        %v328 = vld [vmem:[%s304 + $0x58] sm:$0xff]
        %v329 = vld [vmem:[%s304 + $0x60] sm:$0xff]
        %v330 = vld [vmem:[%s304 + $0x68] sm:$0xff]
        %v331 = vld [vmem:[%s304 + $0x70] sm:$0xff]
        %v332 = vld [vmem:[%s304 + $0x78] sm:$0xff]
        %v333 = vld [vmem:[%s3] sm:$0xff]
        %v334 = vld [vmem:[%s3 + $0x8] sm:$0xff]
        %v335 = vld [vmem:[%s3 + $0x10] sm:$0xff]
        %v336 = vld [vmem:[%s3 + $0x18] sm:$0xff]
        %v337 = vld [vmem:[%s3 + $0x20] sm:$0xff]
        %v338 = vld [vmem:[%s3 + $0x28] sm:$0xff]
        %v339 = vld [vmem:[%s3 + $0x30] sm:$0xff]
        %v340 = vld [vmem:[%s3 + $0x38] sm:$0xff]
        %v341 = vld [vmem:[%s5] sm:$0x1]
        %v343 = vperm.slane %v341, 0
        %vm345 = vcmask 523264
        %v347 = vsel %vm345, %v317, 0
        %v350 = vsel %vm345, %v318, 0
        %v353 = vsel %vm345, %v319, 0
        %v356 = vsel %vm345, %v320, 0
        %v359 = vsel %vm345, %v321, 0
        %v362 = vsel %vm345, %v322, 0
        %v365 = vsel %vm345, %v323, 0
        %v368 = vsel %vm345, %v324, 0
        %v371 = vsel %vm345, %v325, 0
        %v374 = vsel %vm345, %v326, 0
        %v377 = vsel %vm345, %v327, 0
        %v380 = vsel %vm345, %v328, 0
        %v383 = vsel %vm345, %v329, 0
        %v386 = vsel %vm345, %v330, 0
        %v389 = vsel %vm345, %v331, 0
        %v392 = vsel %vm345, %v332, 0
        %394 = vmatpush.msra.mxu0 0.0
        %395 = vmatpush.msra.mxu0 0.0
        %396 = vmatpush.msra.mxu0 0.0
        %397 = vmatpush.msra.mxu0 0.0
        %398 = vmatpush.msra.mxu0 0.0
        %399 = vmatpush.msra.mxu0 0.0
        %400 = vmatpush.msra.mxu0 0.0
        %401 = vmatpush.msra.mxu0 0.0
        %402 = vmatpush.msra.mxu0 %v340
        %403 = vmatpush.msra.mxu0 %v339
        %404 = vmatpush.msra.mxu0 %v338
        %405 = vmatpush.msra.mxu0 %v337
        %406 = vmatpush.msra.mxu0 %v336
        %407 = vmatpush.msra.mxu0 %v335
        %408 = vmatpush.msra.mxu0 %v334
        %409 = vmatpush.msra.mxu0 %v333
        %410 = vmatmul.f32.gmra.mxu0 %v347
        %v411 = vpop.f32.mrf.mxu0
        %v412 = vadd.f32 %v343, %v411
        %413 = vmatmul.f32.gmra.mxu0 %v350
        %v414 = vpop.f32.mrf.mxu0
        %v415 = vadd.f32 %v343, %v414
        %416 = vmatmul.f32.gmra.mxu0 %v353
        %v417 = vpop.f32.mrf.mxu0
        %v418 = vadd.f32 %v343, %v417
        %419 = vmatmul.f32.gmra.mxu0 %v356
        %v420 = vpop.f32.mrf.mxu0
        %v421 = vadd.f32 %v343, %v420
        %422 = vmatmul.f32.gmra.mxu0 %v359
        %v423 = vpop.f32.mrf.mxu0
        %v424 = vadd.f32 %v343, %v423
        %425 = vmatmul.f32.gmra.mxu0 %v362
        %v426 = vpop.f32.mrf.mxu0
        %v427 = vadd.f32 %v343, %v426
        %428 = vmatmul.f32.gmra.mxu0 %v365
        %v429 = vpop.f32.mrf.mxu0
        %v430 = vadd.f32 %v343, %v429
        %431 = vmatmul.f32.gmra.mxu0 %v368
        %v432 = vpop.f32.mrf.mxu0
        %v433 = vadd.f32 %v343, %v432
        %434 = vmatmul.f32.gmra.mxu0 %v371
        %v435 = vpop.f32.mrf.mxu0
        %v436 = vadd.f32 %v343, %v435
        %437 = vmatmul.f32.gmra.mxu0 %v374
        %v438 = vpop.f32.mrf.mxu0
        %v439 = vadd.f32 %v343, %v438
        %440 = vmatmul.f32.gmra.mxu0 %v377
        %v441 = vpop.f32.mrf.mxu0
        %v442 = vadd.f32 %v343, %v441
        %443 = vmatmul.f32.gmra.mxu0 %v380
        %v444 = vpop.f32.mrf.mxu0
        %v445 = vadd.f32 %v343, %v444
        %446 = vmatmul.f32.gmra.mxu0 %v383
        %v447 = vpop.f32.mrf.mxu0
        %v448 = vadd.f32 %v343, %v447
        %449 = vmatmul.f32.gmra.mxu0 %v386
        %v450 = vpop.f32.mrf.mxu0
        %v451 = vadd.f32 %v343, %v450
        %452 = vmatmul.f32.gmra.mxu0 %v389
        %v453 = vpop.f32.mrf.mxu0
        %v454 = vadd.f32 %v343, %v453
        %455 = vmatmul.f32.gmra.mxu0 %v392
        %v456 = vpop.f32.mrf.mxu0
        %v457 = vadd.f32 %v343, %v456
        %458 = vdwg.mxu0
        %459 = vst [vmem:[#allocation2] sm:$0xff] %v412
        %460 = vst [vmem:[#allocation2 + $0x8] sm:$0xff] %v415
        %461 = vst [vmem:[#allocation2 + $0x10] sm:$0xff] %v418
        %462 = vst [vmem:[#allocation2 + $0x18] sm:$0xff] %v421
        %463 = vst [vmem:[#allocation2 + $0x20] sm:$0xff] %v424
        %464 = vst [vmem:[#allocation2 + $0x28] sm:$0xff] %v427
        %465 = vst [vmem:[#allocation2 + $0x30] sm:$0xff] %v430
        %466 = vst [vmem:[#allocation2 + $0x38] sm:$0xff] %v433
        %467 = vst [vmem:[#allocation2 + $0x40] sm:$0xff] %v436
        %468 = vst [vmem:[#allocation2 + $0x48] sm:$0xff] %v439
        %469 = vst [vmem:[#allocation2 + $0x50] sm:$0xff] %v442
        %470 = vst [vmem:[#allocation2 + $0x58] sm:$0xff] %v445
        %471 = vst [vmem:[#allocation2 + $0x60] sm:$0xff] %v448
        %472 = vst [vmem:[#allocation2 + $0x68] sm:$0xff] %v451
        %473 = vst [vmem:[#allocation2 + $0x70] sm:$0xff] %v454
        %474 = vst [vmem:[#allocation2 + $0x78] sm:$0xff] %v457
        %v475 = vld [vmem:[%s4] sm:$0xff]
        %v476 = vld [vmem:[%s4 + $0x8] sm:$0xff]
        %v477 = vld [vmem:[%s4 + $0x10] sm:$0xff]
        %v478 = vld [vmem:[%s4 + $0x18] sm:$0xff]
        %v479 = vld [vmem:[%s4 + $0x20] sm:$0xff]
        %v480 = vld [vmem:[%s4 + $0x28] sm:$0xff]
        %v481 = vld [vmem:[%s4 + $0x30] sm:$0xff]
        %v482 = vld [vmem:[%s4 + $0x38] sm:$0xff]
        %vm483 = vcmask 261120
        %v485 = vsel %vm483, 0.0, 0
        %487 = vmatpush.msra.mxu0 0.0
        %488 = vmatpush.msra.mxu0 0.0
        %489 = vmatpush.msra.mxu0 0.0
        %490 = vmatpush.msra.mxu0 0.0
        %491 = vmatpush.msra.mxu0 0.0
        %492 = vmatpush.msra.mxu0 0.0
        %493 = vmatpush.msra.mxu0 0.0
        %494 = vmatpush.msra.mxu0 0.0
        %495 = vmatpush.msra.mxu0 0.0
        %496 = vmatpush.msra.mxu0 0.0
        %497 = vmatpush.msra.mxu0 0.0
        %498 = vmatpush.msra.mxu0 0.0
        %499 = vmatpush.msra.mxu0 %v481
        %500 = vmatpush.msra.mxu0 %v479
        %501 = vmatpush.msra.mxu0 %v477
        %502 = vmatpush.msra.mxu0 %v475
        %503 = vmatmul.f32.gmra.mxu0 %v485
        %v504 = vpop.f32.mrf.mxu0
        %v505 = vadd.f32 0.0, %v504
        %506 = vmatmul.f32.gmra.mxu0 %v485
        %v507 = vpop.f32.mrf.mxu0
        %v508 = vadd.f32 0.0, %v507
        %509 = vmatmul.f32.gmra.mxu0 %v485
        %v510 = vpop.f32.mrf.mxu0
        %v511 = vadd.f32 0.0, %v510
        %512 = vmatmul.f32.gmra.mxu0 %v485
        %v513 = vpop.f32.mrf.mxu0
        %v514 = vadd.f32 0.0, %v513
        %515 = vmatmul.f32.gmra.mxu0 %v485
        %v516 = vpop.f32.mrf.mxu0
        %v517 = vadd.f32 0.0, %v516
        %518 = vmatmul.f32.gmra.mxu0 %v485
        %v519 = vpop.f32.mrf.mxu0
        %v520 = vadd.f32 0.0, %v519
        %521 = vmatmul.f32.gmra.mxu0 %v485
        %v522 = vpop.f32.mrf.mxu0
        %v523 = vadd.f32 0.0, %v522
        %524 = vmatmul.f32.gmra.mxu0 %v485
        %v525 = vpop.f32.mrf.mxu0
        %v526 = vadd.f32 0.0, %v525
        %527 = vmatmul.f32.gmra.mxu0 %v485
        %v528 = vpop.f32.mrf.mxu0
        %v529 = vadd.f32 0.0, %v528
        %530 = vmatmul.f32.gmra.mxu0 %v485
        %v531 = vpop.f32.mrf.mxu0
        %v532 = vadd.f32 0.0, %v531
        %533 = vmatmul.f32.gmra.mxu0 %v485
        %v534 = vpop.f32.mrf.mxu0
        %v535 = vadd.f32 0.0, %v534
        %536 = vmatmul.f32.gmra.mxu0 %v485
        %v537 = vpop.f32.mrf.mxu0
        %v538 = vadd.f32 0.0, %v537
        %539 = vmatmul.f32.gmra.mxu0 %v485
        %v540 = vpop.f32.mrf.mxu0
        %v541 = vadd.f32 0.0, %v540
        %542 = vmatmul.f32.gmra.mxu0 %v485
        %v543 = vpop.f32.mrf.mxu0
        %v544 = vadd.f32 0.0, %v543
        %545 = vmatmul.f32.gmra.mxu0 %v485
        %v546 = vpop.f32.mrf.mxu0
        %v547 = vadd.f32 0.0, %v546
        %548 = vmatmul.f32.gmra.mxu0 %v485
        %v549 = vpop.f32.mrf.mxu0
        %v550 = vadd.f32 0.0, %v549
        %551 = vdwg.mxu0
        %552 = vmatpush.msra.mxu0 0.0
        %553 = vmatpush.msra.mxu0 0.0
        %554 = vmatpush.msra.mxu0 0.0
        %555 = vmatpush.msra.mxu0 0.0
        %556 = vmatpush.msra.mxu0 0.0
        %557 = vmatpush.msra.mxu0 0.0
        %558 = vmatpush.msra.mxu0 0.0
        %559 = vmatpush.msra.mxu0 0.0
        %560 = vmatpush.msra.mxu0 0.0
        %561 = vmatpush.msra.mxu0 0.0
        %562 = vmatpush.msra.mxu0 0.0
        %563 = vmatpush.msra.mxu0 0.0
        %564 = vmatpush.msra.mxu0 %v482
        %565 = vmatpush.msra.mxu0 %v480
        %566 = vmatpush.msra.mxu0 %v478
        %567 = vmatpush.msra.mxu0 %v476
        %568 = vmatmul.f32.gmra.mxu0 %v485
        %v569 = vpop.f32.mrf.mxu0
        %v570 = vadd.f32 0.0, %v569
        %571 = vmatmul.f32.gmra.mxu0 %v485
        %v572 = vpop.f32.mrf.mxu0
        %v573 = vadd.f32 0.0, %v572
        %574 = vmatmul.f32.gmra.mxu0 %v485
        %v575 = vpop.f32.mrf.mxu0
        %v576 = vadd.f32 0.0, %v575
        %577 = vmatmul.f32.gmra.mxu0 %v485
        %v578 = vpop.f32.mrf.mxu0
        %v579 = vadd.f32 0.0, %v578
        %580 = vmatmul.f32.gmra.mxu0 %v485
        %v581 = vpop.f32.mrf.mxu0
        %v582 = vadd.f32 0.0, %v581
        %583 = vmatmul.f32.gmra.mxu0 %v485
        %v584 = vpop.f32.mrf.mxu0
        %v585 = vadd.f32 0.0, %v584
        %586 = vmatmul.f32.gmra.mxu0 %v485
        %v587 = vpop.f32.mrf.mxu0
        %v588 = vadd.f32 0.0, %v587
        %589 = vmatmul.f32.gmra.mxu0 %v485
        %v590 = vpop.f32.mrf.mxu0
        %v591 = vadd.f32 0.0, %v590
        %592 = vmatmul.f32.gmra.mxu0 %v485
        %v593 = vpop.f32.mrf.mxu0
        %v594 = vadd.f32 0.0, %v593
        %595 = vmatmul.f32.gmra.mxu0 %v485
        %v596 = vpop.f32.mrf.mxu0
        %v597 = vadd.f32 0.0, %v596
        %598 = vmatmul.f32.gmra.mxu0 %v485
        %v599 = vpop.f32.mrf.mxu0
        %v600 = vadd.f32 0.0, %v599
        %601 = vmatmul.f32.gmra.mxu0 %v485
        %v602 = vpop.f32.mrf.mxu0
        %v603 = vadd.f32 0.0, %v602
        %604 = vmatmul.f32.gmra.mxu0 %v485
        %v605 = vpop.f32.mrf.mxu0
        %v606 = vadd.f32 0.0, %v605
        %607 = vmatmul.f32.gmra.mxu0 %v485
        %v608 = vpop.f32.mrf.mxu0
        %v609 = vadd.f32 0.0, %v608
        %610 = vmatmul.f32.gmra.mxu0 %v485
        %v611 = vpop.f32.mrf.mxu0
        %v612 = vadd.f32 0.0, %v611
        %613 = vmatmul.f32.gmra.mxu0 %v485
        %v614 = vpop.f32.mrf.mxu0
        %v615 = vadd.f32 0.0, %v614
        %616 = vdwg.mxu0
        %v617 = vld [vmem:[%s310] sm:$0xff]
        %v618 = vld [vmem:[%s310 + $0x8] sm:$0xff]
        %v619 = vld [vmem:[%s310 + $0x10] sm:$0xff]
        %v620 = vld [vmem:[%s310 + $0x18] sm:$0xff]
        %v621 = vld [vmem:[%s310 + $0x20] sm:$0xff]
        %v622 = vld [vmem:[%s310 + $0x28] sm:$0xff]
        %v623 = vld [vmem:[%s310 + $0x30] sm:$0xff]
        %v624 = vld [vmem:[%s310 + $0x38] sm:$0xff]
        %v625 = vld [vmem:[%s310 + $0x40] sm:$0xff]
        %v626 = vld [vmem:[%s310 + $0x48] sm:$0xff]
        %v627 = vld [vmem:[%s310 + $0x50] sm:$0xff]
        %v628 = vld [vmem:[%s310 + $0x58] sm:$0xff]
        %v629 = vld [vmem:[%s310 + $0x60] sm:$0xff]
        %v630 = vld [vmem:[%s310 + $0x68] sm:$0xff]
        %v631 = vld [vmem:[%s310 + $0x70] sm:$0xff]
        %v632 = vld [vmem:[%s310 + $0x78] sm:$0xff]
        %v633 = vld [vmem:[%s260] sm:$0xff]
        %v634 = vld [vmem:[%s260 + $0x8] sm:$0xff]
        %v635 = vld [vmem:[%s260 + $0x10] sm:$0xff]
        %v636 = vld [vmem:[%s260 + $0x18] sm:$0xff]
        %v637 = vld [vmem:[%s260 + $0x20] sm:$0xff]
        %v638 = vld [vmem:[%s260 + $0x28] sm:$0xff]
        %v639 = vld [vmem:[%s260 + $0x30] sm:$0xff]
        %v640 = vld [vmem:[%s260 + $0x38] sm:$0xff]
        %v641 = vld [vmem:[%s260 + $0x40] sm:$0xff]
        %v642 = vld [vmem:[%s260 + $0x48] sm:$0xff]
        %v643 = vld [vmem:[%s260 + $0x50] sm:$0xff]
        %v644 = vld [vmem:[%s260 + $0x58] sm:$0xff]
        %v645 = vld [vmem:[%s260 + $0x60] sm:$0xff]
        %v646 = vld [vmem:[%s260 + $0x68] sm:$0xff]
        %v647 = vld [vmem:[%s260 + $0x70] sm:$0xff]
        %v648 = vld [vmem:[%s260 + $0x78] sm:$0xff]
        %649 = vmatpush.msra.mxu0 %v615
        %650 = vmatpush.msra.mxu0 %v612
        %651 = vmatpush.msra.mxu0 %v609
        %652 = vmatpush.msra.mxu0 %v606
        %653 = vmatpush.msra.mxu0 %v603
        %654 = vmatpush.msra.mxu0 %v600
        %655 = vmatpush.msra.mxu0 %v597
        %656 = vmatpush.msra.mxu0 %v594
        %657 = vmatpush.msra.mxu0 %v591
        %658 = vmatpush.msra.mxu0 %v588
        %659 = vmatpush.msra.mxu0 %v585
        %660 = vmatpush.msra.mxu0 %v582
        %661 = vmatpush.msra.mxu0 %v579
        %662 = vmatpush.msra.mxu0 %v576
        %663 = vmatpush.msra.mxu0 %v573
        %664 = vmatpush.msra.mxu0 %v570
        %665 = vmatmul.f32.gmra.mxu0 %v633
        %v666 = vpop.f32.mrf.mxu0
        %v667 = vadd.f32 0.0, %v666
        %668 = vmatmul.f32.gmra.mxu0 %v634
        %v669 = vpop.f32.mrf.mxu0
        %v670 = vadd.f32 0.0, %v669
        %671 = vmatmul.f32.gmra.mxu0 %v635
        %v672 = vpop.f32.mrf.mxu0
        %v673 = vadd.f32 0.0, %v672
        %674 = vmatmul.f32.gmra.mxu0 %v636
        %v675 = vpop.f32.mrf.mxu0
        %v676 = vadd.f32 0.0, %v675
        %677 = vmatmul.f32.gmra.mxu0 %v637
        %v678 = vpop.f32.mrf.mxu0
        %v679 = vadd.f32 0.0, %v678
        %680 = vmatmul.f32.gmra.mxu0 %v638
        %v681 = vpop.f32.mrf.mxu0
        %v682 = vadd.f32 0.0, %v681
        %683 = vmatmul.f32.gmra.mxu0 %v639
        %v684 = vpop.f32.mrf.mxu0
        %v685 = vadd.f32 0.0, %v684
        %686 = vmatmul.f32.gmra.mxu0 %v640
        %v687 = vpop.f32.mrf.mxu0
        %v688 = vadd.f32 0.0, %v687
        %689 = vmatmul.f32.gmra.mxu0 %v641
        %v690 = vpop.f32.mrf.mxu0
        %v691 = vadd.f32 0.0, %v690
        %692 = vmatmul.f32.gmra.mxu0 %v642
        %v693 = vpop.f32.mrf.mxu0
        %v694 = vadd.f32 0.0, %v693
        %695 = vmatmul.f32.gmra.mxu0 %v643
        %v696 = vpop.f32.mrf.mxu0
        %v697 = vadd.f32 0.0, %v696
        %698 = vmatmul.f32.gmra.mxu0 %v644
        %v699 = vpop.f32.mrf.mxu0
        %v700 = vadd.f32 0.0, %v699
        %701 = vmatmul.f32.gmra.mxu0 %v645
        %v702 = vpop.f32.mrf.mxu0
        %v703 = vadd.f32 0.0, %v702
        %704 = vmatmul.f32.gmra.mxu0 %v646
        %v705 = vpop.f32.mrf.mxu0
        %v706 = vadd.f32 0.0, %v705
        %707 = vmatmul.f32.gmra.mxu0 %v647
        %v708 = vpop.f32.mrf.mxu0
        %v709 = vadd.f32 0.0, %v708
        %710 = vmatmul.f32.gmra.mxu0 %v648
        %v711 = vpop.f32.mrf.mxu0
        %v712 = vadd.f32 0.0, %v711
        %713 = vdwg.mxu0
        %714 = vmatpush.msra.mxu0 %v550
        %715 = vmatpush.msra.mxu0 %v547
        %716 = vmatpush.msra.mxu0 %v544
        %717 = vmatpush.msra.mxu0 %v541
        %718 = vmatpush.msra.mxu0 %v538
        %719 = vmatpush.msra.mxu0 %v535
        %720 = vmatpush.msra.mxu0 %v532
        %721 = vmatpush.msra.mxu0 %v529
        %722 = vmatpush.msra.mxu0 %v526
        %723 = vmatpush.msra.mxu0 %v523
        %724 = vmatpush.msra.mxu0 %v520
        %725 = vmatpush.msra.mxu0 %v517
        %726 = vmatpush.msra.mxu0 %v514
        %727 = vmatpush.msra.mxu0 %v511
        %728 = vmatpush.msra.mxu0 %v508
        %729 = vmatpush.msra.mxu0 %v505
        %730 = vmatmul.f32.gmra.mxu0 %v617
        %v731 = vpop.f32.mrf.mxu0
        %v732 = vadd.f32 %v667, %v731
        %733 = vmatmul.f32.gmra.mxu0 %v618
        %v734 = vpop.f32.mrf.mxu0
        %v735 = vadd.f32 %v670, %v734
        %736 = vmatmul.f32.gmra.mxu0 %v619
        %v737 = vpop.f32.mrf.mxu0
        %v738 = vadd.f32 %v673, %v737
        %739 = vmatmul.f32.gmra.mxu0 %v620
        %v740 = vpop.f32.mrf.mxu0
        %v741 = vadd.f32 %v676, %v740
        %742 = vmatmul.f32.gmra.mxu0 %v621
        %v743 = vpop.f32.mrf.mxu0
        %v744 = vadd.f32 %v679, %v743
        %745 = vmatmul.f32.gmra.mxu0 %v622
        %v746 = vpop.f32.mrf.mxu0
        %v747 = vadd.f32 %v682, %v746
        %748 = vmatmul.f32.gmra.mxu0 %v623
        %v749 = vpop.f32.mrf.mxu0
        %v750 = vadd.f32 %v685, %v749
        %751 = vmatmul.f32.gmra.mxu0 %v624
        %v752 = vpop.f32.mrf.mxu0
        %v753 = vadd.f32 %v688, %v752
        %754 = vmatmul.f32.gmra.mxu0 %v625
        %v755 = vpop.f32.mrf.mxu0
        %v756 = vadd.f32 %v691, %v755
        %757 = vmatmul.f32.gmra.mxu0 %v626
        %v758 = vpop.f32.mrf.mxu0
        %v759 = vadd.f32 %v694, %v758
        %760 = vmatmul.f32.gmra.mxu0 %v627
        %v761 = vpop.f32.mrf.mxu0
        %v762 = vadd.f32 %v697, %v761
        %763 = vmatmul.f32.gmra.mxu0 %v628
        %v764 = vpop.f32.mrf.mxu0
        %v765 = vadd.f32 %v700, %v764
        %766 = vmatmul.f32.gmra.mxu0 %v629
        %v767 = vpop.f32.mrf.mxu0
        %v768 = vadd.f32 %v703, %v767
        %769 = vmatmul.f32.gmra.mxu0 %v630
        %v770 = vpop.f32.mrf.mxu0
        %v771 = vadd.f32 %v706, %v770
        %772 = vmatmul.f32.gmra.mxu0 %v631
        %v773 = vpop.f32.mrf.mxu0
        %v774 = vadd.f32 %v709, %v773
        %775 = vmatmul.f32.gmra.mxu0 %v632
        %v776 = vpop.f32.mrf.mxu0
        %v777 = vadd.f32 %v712, %v776
        %778 = vdwg.mxu0
        %v779 = vld [vmem:[#allocation2] sm:$0xff]
        %v780 = vld [vmem:[#allocation2 + $0x8] sm:$0xff]
        %v781 = vld [vmem:[#allocation2 + $0x10] sm:$0xff]
        %v782 = vld [vmem:[#allocation2 + $0x18] sm:$0xff]
        %v783 = vld [vmem:[#allocation2 + $0x20] sm:$0xff]
        %v784 = vld [vmem:[#allocation2 + $0x28] sm:$0xff]
        %v785 = vld [vmem:[#allocation2 + $0x30] sm:$0xff]
        %v786 = vld [vmem:[#allocation2 + $0x38] sm:$0xff]
        %v787 = vld [vmem:[#allocation2 + $0x40] sm:$0xff]
        %v788 = vld [vmem:[#allocation2 + $0x48] sm:$0xff]
        %v789 = vld [vmem:[#allocation2 + $0x50] sm:$0xff]
        %v790 = vld [vmem:[#allocation2 + $0x58] sm:$0xff]
        %v791 = vld [vmem:[#allocation2 + $0x60] sm:$0xff]
        %v792 = vld [vmem:[#allocation2 + $0x68] sm:$0xff]
        %v793 = vld [vmem:[#allocation2 + $0x70] sm:$0xff]
        %v794 = vld [vmem:[#allocation2 + $0x78] sm:$0xff]
        %v795 = vadd.f32 %v779, %v732
        %v796 = vadd.f32 %v780, %v735
        %v797 = vadd.f32 %v781, %v738
        %v798 = vadd.f32 %v782, %v741
        %v799 = vadd.f32 %v783, %v744
        %v800 = vadd.f32 %v784, %v747
        %v801 = vadd.f32 %v785, %v750
        %v802 = vadd.f32 %v786, %v753
        %v803 = vadd.f32 %v787, %v756
        %v804 = vadd.f32 %v788, %v759
        %v805 = vadd.f32 %v789, %v762
        %v806 = vadd.f32 %v790, %v765
        %v807 = vadd.f32 %v791, %v768
        %v808 = vadd.f32 %v792, %v771
        %v809 = vadd.f32 %v793, %v774
        %v810 = vadd.f32 %v794, %v777
        %v811 = vxor.u32 %v795, 2147483648
        %v812 = vxor.u32 %v796, 2147483648
        %v813 = vxor.u32 %v797, 2147483648
        %v814 = vxor.u32 %v798, 2147483648
        %v815 = vxor.u32 %v799, 2147483648
        %v816 = vxor.u32 %v800, 2147483648
        %v817 = vxor.u32 %v801, 2147483648
        %v818 = vxor.u32 %v802, 2147483648
        %v819 = vxor.u32 %v803, 2147483648
        %v820 = vxor.u32 %v804, 2147483648
        %v821 = vxor.u32 %v805, 2147483648
        %v822 = vxor.u32 %v806, 2147483648
        %v823 = vxor.u32 %v807, 2147483648
        %v824 = vxor.u32 %v808, 2147483648
        %v825 = vxor.u32 %v809, 2147483648
        %v826 = vxor.u32 %v810, 2147483648
        %v827 = vmul.f32 %v811, 1.442695
        %v828 = vpow.pop %v827
        %v829 = vmul.f32 %v812, 1.442695
        %v830 = vpow.pop %v829
        %v831 = vmul.f32 %v813, 1.442695
        %v832 = vpow.pop %v831
        %v833 = vmul.f32 %v814, 1.442695
        %v834 = vpow.pop %v833
        %v835 = vmul.f32 %v815, 1.442695
        %v836 = vpow.pop %v835
        %v837 = vmul.f32 %v816, 1.442695
        %v838 = vpow.pop %v837
        %v839 = vmul.f32 %v817, 1.442695
        %v840 = vpow.pop %v839
        %v841 = vmul.f32 %v818, 1.442695
        %v842 = vpow.pop %v841
        %v843 = vmul.f32 %v819, 1.442695
        %v844 = vpow.pop %v843
        %v845 = vmul.f32 %v820, 1.442695
        %v846 = vpow.pop %v845
        %v847 = vmul.f32 %v821, 1.442695
        %v848 = vpow.pop %v847
        %v849 = vmul.f32 %v822, 1.442695
        %v850 = vpow.pop %v849
        %v851 = vmul.f32 %v823, 1.442695
        %v852 = vpow.pop %v851
        %v853 = vmul.f32 %v824, 1.442695
        %v854 = vpow.pop %v853
        %v855 = vmul.f32 %v825, 1.442695
        %v856 = vpow.pop %v855
        %v857 = vmul.f32 %v826, 1.442695
        %v858 = vpow.pop %v857
        %v859 = vadd.f32 %v828, 1.0
        %v860 = vadd.f32 %v830, 1.0
        %v861 = vadd.f32 %v832, 1.0
        %v862 = vadd.f32 %v834, 1.0
        %v863 = vadd.f32 %v836, 1.0
        %v864 = vadd.f32 %v838, 1.0
        %v865 = vadd.f32 %v840, 1.0
        %v866 = vadd.f32 %v842, 1.0
        %v867 = vadd.f32 %v844, 1.0
        %v868 = vadd.f32 %v846, 1.0
        %v869 = vadd.f32 %v848, 1.0
        %v870 = vadd.f32 %v850, 1.0
        %v871 = vadd.f32 %v852, 1.0
        %v872 = vadd.f32 %v854, 1.0
        %v873 = vadd.f32 %v856, 1.0
        %v874 = vadd.f32 %v858, 1.0
        %v875 = vrcp.pop %v859
        %v876 = vmul.f32 %v859, %v875
        %v877 = vsub.f32 1.0, %v876
        %v878 = vmul.f32 %v875, %v877
        %v879 = vadd.f32 %v875, %v878
        %vm880 = vweird.f32 %v859
        %vm881 = vweird.f32 %v875
        %vm882 = vmor %vm880, %vm881
        %v883 = vsel %vm882, %v875, %v879
        %v884 = vand.u32 2147483647, %v859
        %vm885 = vcmp.eq.f32.partialorder %v884, 8.507059e+37
        %v886 = vand.u32 %v859, 2147483648
        %v887 = vor.u32 1.1754944e-38, %v886
        %v888 = vsel %vm885, %v887, %v883
        %v889 = vmul.f32 1.0, %v888
        %v890 = vrcp.pop %v860
        %v891 = vmul.f32 %v860, %v890
        %v892 = vsub.f32 1.0, %v891
        %v893 = vmul.f32 %v890, %v892
        %v894 = vadd.f32 %v890, %v893
        %vm895 = vweird.f32 %v860
        %vm896 = vweird.f32 %v890
        %vm897 = vmor %vm895, %vm896
        %v898 = vsel %vm897, %v890, %v894
        %v899 = vand.u32 2147483647, %v860
        %vm900 = vcmp.eq.f32.partialorder %v899, 8.507059e+37
        %v901 = vand.u32 %v860, 2147483648
        %v902 = vor.u32 1.1754944e-38, %v901
        %v903 = vsel %vm900, %v902, %v898
        %v904 = vmul.f32 1.0, %v903
        %v905 = vrcp.pop %v861
        %v906 = vmul.f32 %v861, %v905
        %v907 = vsub.f32 1.0, %v906
        %v908 = vmul.f32 %v905, %v907
        %v909 = vadd.f32 %v905, %v908
        %vm910 = vweird.f32 %v861
        %vm911 = vweird.f32 %v905
        %vm912 = vmor %vm910, %vm911
        %v913 = vsel %vm912, %v905, %v909
        %v914 = vand.u32 2147483647, %v861
        %vm915 = vcmp.eq.f32.partialorder %v914, 8.507059e+37
        %v916 = vand.u32 %v861, 2147483648
        %v917 = vor.u32 1.1754944e-38, %v916
        %v918 = vsel %vm915, %v917, %v913
        %v919 = vmul.f32 1.0, %v918
        %v920 = vrcp.pop %v862
        %v921 = vmul.f32 %v862, %v920
        %v922 = vsub.f32 1.0, %v921
        %v923 = vmul.f32 %v920, %v922
        %v924 = vadd.f32 %v920, %v923
        %vm925 = vweird.f32 %v862
        %vm926 = vweird.f32 %v920
        %vm927 = vmor %vm925, %vm926
        %v928 = vsel %vm927, %v920, %v924
        %v929 = vand.u32 2147483647, %v862
        %vm930 = vcmp.eq.f32.partialorder %v929, 8.507059e+37
        %v931 = vand.u32 %v862, 2147483648
        %v932 = vor.u32 1.1754944e-38, %v931
        %v933 = vsel %vm930, %v932, %v928
        %v934 = vmul.f32 1.0, %v933
        %v935 = vrcp.pop %v863
        %v936 = vmul.f32 %v863, %v935
        %v937 = vsub.f32 1.0, %v936
        %v938 = vmul.f32 %v935, %v937
        %v939 = vadd.f32 %v935, %v938
        %vm940 = vweird.f32 %v863
        %vm941 = vweird.f32 %v935
        %vm942 = vmor %vm940, %vm941
        %v943 = vsel %vm942, %v935, %v939
        %v944 = vand.u32 2147483647, %v863
        %vm945 = vcmp.eq.f32.partialorder %v944, 8.507059e+37
        %v946 = vand.u32 %v863, 2147483648
        %v947 = vor.u32 1.1754944e-38, %v946
        %v948 = vsel %vm945, %v947, %v943
        %v949 = vmul.f32 1.0, %v948
        %v950 = vrcp.pop %v864
        %v951 = vmul.f32 %v864, %v950
        %v952 = vsub.f32 1.0, %v951
        %v953 = vmul.f32 %v950, %v952
        %v954 = vadd.f32 %v950, %v953
        %vm955 = vweird.f32 %v864
        %vm956 = vweird.f32 %v950
        %vm957 = vmor %vm955, %vm956
        %v958 = vsel %vm957, %v950, %v954
        %v959 = vand.u32 2147483647, %v864
        %vm960 = vcmp.eq.f32.partialorder %v959, 8.507059e+37
        %v961 = vand.u32 %v864, 2147483648
        %v962 = vor.u32 1.1754944e-38, %v961
        %v963 = vsel %vm960, %v962, %v958
        %v964 = vmul.f32 1.0, %v963
        %v965 = vrcp.pop %v865
        %v966 = vmul.f32 %v865, %v965
        %v967 = vsub.f32 1.0, %v966
        %v968 = vmul.f32 %v965, %v967
        %v969 = vadd.f32 %v965, %v968
        %vm970 = vweird.f32 %v865
        %vm971 = vweird.f32 %v965
        %vm972 = vmor %vm970, %vm971
        %v973 = vsel %vm972, %v965, %v969
        %v974 = vand.u32 2147483647, %v865
        %vm975 = vcmp.eq.f32.partialorder %v974, 8.507059e+37
        %v976 = vand.u32 %v865, 2147483648
        %v977 = vor.u32 1.1754944e-38, %v976
        %v978 = vsel %vm975, %v977, %v973
        %v979 = vmul.f32 1.0, %v978
        %v980 = vrcp.pop %v866
        %v981 = vmul.f32 %v866, %v980
        %v982 = vsub.f32 1.0, %v981
        %v983 = vmul.f32 %v980, %v982
        %v984 = vadd.f32 %v980, %v983
        %vm985 = vweird.f32 %v866
        %vm986 = vweird.f32 %v980
        %vm987 = vmor %vm985, %vm986
        %v988 = vsel %vm987, %v980, %v984
        %v989 = vand.u32 2147483647, %v866
        %vm990 = vcmp.eq.f32.partialorder %v989, 8.507059e+37
        %v991 = vand.u32 %v866, 2147483648
        %v992 = vor.u32 1.1754944e-38, %v991
        %v993 = vsel %vm990, %v992, %v988
        %v994 = vmul.f32 1.0, %v993
        %v995 = vrcp.pop %v867
        %v996 = vmul.f32 %v867, %v995
        %v997 = vsub.f32 1.0, %v996
        %v998 = vmul.f32 %v995, %v997
        %v999 = vadd.f32 %v995, %v998
        %vm1000 = vweird.f32 %v867
        %vm1001 = vweird.f32 %v995
        %vm1002 = vmor %vm1000, %vm1001
        %v1003 = vsel %vm1002, %v995, %v999
        %v1004 = vand.u32 2147483647, %v867
        %vm1005 = vcmp.eq.f32.partialorder %v1004, 8.507059e+37
        %v1006 = vand.u32 %v867, 2147483648
        %v1007 = vor.u32 1.1754944e-38, %v1006
        %v1008 = vsel %vm1005, %v1007, %v1003
        %v1009 = vmul.f32 1.0, %v1008
        %v1010 = vrcp.pop %v868
        %v1011 = vmul.f32 %v868, %v1010
        %v1012 = vsub.f32 1.0, %v1011
        %v1013 = vmul.f32 %v1010, %v1012
        %v1014 = vadd.f32 %v1010, %v1013
        %vm1015 = vweird.f32 %v868
        %vm1016 = vweird.f32 %v1010
        %vm1017 = vmor %vm1015, %vm1016
        %v1018 = vsel %vm1017, %v1010, %v1014
        %v1019 = vand.u32 2147483647, %v868
        %vm1020 = vcmp.eq.f32.partialorder %v1019, 8.507059e+37
        %v1021 = vand.u32 %v868, 2147483648
        %v1022 = vor.u32 1.1754944e-38, %v1021
        %v1023 = vsel %vm1020, %v1022, %v1018
        %v1024 = vmul.f32 1.0, %v1023
        %v1025 = vrcp.pop %v869
        %v1026 = vmul.f32 %v869, %v1025
        %v1027 = vsub.f32 1.0, %v1026
        %v1028 = vmul.f32 %v1025, %v1027
        %v1029 = vadd.f32 %v1025, %v1028
        %vm1030 = vweird.f32 %v869
        %vm1031 = vweird.f32 %v1025
        %vm1032 = vmor %vm1030, %vm1031
        %v1033 = vsel %vm1032, %v1025, %v1029
        %v1034 = vand.u32 2147483647, %v869
        %vm1035 = vcmp.eq.f32.partialorder %v1034, 8.507059e+37
        %v1036 = vand.u32 %v869, 2147483648
        %v1037 = vor.u32 1.1754944e-38, %v1036
        %v1038 = vsel %vm1035, %v1037, %v1033
        %v1039 = vmul.f32 1.0, %v1038
        %v1040 = vrcp.pop %v870
        %v1041 = vmul.f32 %v870, %v1040
        %v1042 = vsub.f32 1.0, %v1041
        %v1043 = vmul.f32 %v1040, %v1042
        %v1044 = vadd.f32 %v1040, %v1043
        %vm1045 = vweird.f32 %v870
        %vm1046 = vweird.f32 %v1040
        %vm1047 = vmor %vm1045, %vm1046
        %v1048 = vsel %vm1047, %v1040, %v1044
        %v1049 = vand.u32 2147483647, %v870
        %vm1050 = vcmp.eq.f32.partialorder %v1049, 8.507059e+37
        %v1051 = vand.u32 %v870, 2147483648
        %v1052 = vor.u32 1.1754944e-38, %v1051
        %v1053 = vsel %vm1050, %v1052, %v1048
        %v1054 = vmul.f32 1.0, %v1053
        %v1055 = vrcp.pop %v871
        %v1056 = vmul.f32 %v871, %v1055
        %v1057 = vsub.f32 1.0, %v1056
        %v1058 = vmul.f32 %v1055, %v1057
        %v1059 = vadd.f32 %v1055, %v1058
        %vm1060 = vweird.f32 %v871
        %vm1061 = vweird.f32 %v1055
        %vm1062 = vmor %vm1060, %vm1061
        %v1063 = vsel %vm1062, %v1055, %v1059
        %v1064 = vand.u32 2147483647, %v871
        %vm1065 = vcmp.eq.f32.partialorder %v1064, 8.507059e+37
        %v1066 = vand.u32 %v871, 2147483648
        %v1067 = vor.u32 1.1754944e-38, %v1066
        %v1068 = vsel %vm1065, %v1067, %v1063
        %v1069 = vmul.f32 1.0, %v1068
        %v1070 = vrcp.pop %v872
        %v1071 = vmul.f32 %v872, %v1070
        %v1072 = vsub.f32 1.0, %v1071
        %v1073 = vmul.f32 %v1070, %v1072
        %v1074 = vadd.f32 %v1070, %v1073
        %vm1075 = vweird.f32 %v872
        %vm1076 = vweird.f32 %v1070
        %vm1077 = vmor %vm1075, %vm1076
        %v1078 = vsel %vm1077, %v1070, %v1074
        %v1079 = vand.u32 2147483647, %v872
        %vm1080 = vcmp.eq.f32.partialorder %v1079, 8.507059e+37
        %v1081 = vand.u32 %v872, 2147483648
        %v1082 = vor.u32 1.1754944e-38, %v1081
        %v1083 = vsel %vm1080, %v1082, %v1078
        %v1084 = vmul.f32 1.0, %v1083
        %v1085 = vrcp.pop %v873
        %v1086 = vmul.f32 %v873, %v1085
        %v1087 = vsub.f32 1.0, %v1086
        %v1088 = vmul.f32 %v1085, %v1087
        %v1089 = vadd.f32 %v1085, %v1088
        %vm1090 = vweird.f32 %v873
        %vm1091 = vweird.f32 %v1085
        %vm1092 = vmor %vm1090, %vm1091
        %v1093 = vsel %vm1092, %v1085, %v1089
        %v1094 = vand.u32 2147483647, %v873
        %vm1095 = vcmp.eq.f32.partialorder %v1094, 8.507059e+37
        %v1096 = vand.u32 %v873, 2147483648
        %v1097 = vor.u32 1.1754944e-38, %v1096
        %v1098 = vsel %vm1095, %v1097, %v1093
        %v1099 = vmul.f32 1.0, %v1098
        %v1100 = vrcp.pop %v874
        %v1101 = vmul.f32 %v874, %v1100
        %v1102 = vsub.f32 1.0, %v1101
        %v1103 = vmul.f32 %v1100, %v1102
        %v1104 = vadd.f32 %v1100, %v1103
        %vm1105 = vweird.f32 %v874
        %vm1106 = vweird.f32 %v1100
        %vm1107 = vmor %vm1105, %vm1106
        %v1108 = vsel %vm1107, %v1100, %v1104
        %v1109 = vand.u32 2147483647, %v874
        %vm1110 = vcmp.eq.f32.partialorder %v1109, 8.507059e+37
        %v1111 = vand.u32 %v874, 2147483648
        %v1112 = vor.u32 1.1754944e-38, %v1111
        %v1113 = vsel %vm1110, %v1112, %v1108
        %v1114 = vmul.f32 1.0, %v1113
        %v1115 = vmul.f32 %v889, 0.0
        %v1116 = vmul.f32 %v904, 0.0
        %v1117 = vmul.f32 %v919, 0.0
        %v1118 = vmul.f32 %v934, 0.0
        %v1119 = vmul.f32 %v949, 0.0
        %v1120 = vmul.f32 %v964, 0.0
        %v1121 = vmul.f32 %v979, 0.0
        %v1122 = vmul.f32 %v994, 0.0
        %v1123 = vmul.f32 %v1009, 0.0
        %v1124 = vmul.f32 %v1024, 0.0
        %v1125 = vmul.f32 %v1039, 0.0
        %v1126 = vmul.f32 %v1054, 0.0
        %v1127 = vmul.f32 %v1069, 0.0
        %v1128 = vmul.f32 %v1084, 0.0
        %v1129 = vmul.f32 %v1099, 0.0
        %v1130 = vmul.f32 %v1114, 0.0
        %1147 = vrot.lane.b32.xlu0 %v889, 32
        %v1148 = vpop.permute.xlu0 %1147
        %1149 = vrot.lane.b32.xlu0 %v904, 32
        %v1150 = vpop.permute.xlu0 %1149
        %1151 = vrot.lane.b32.xlu0 %v919, 32
        %v1152 = vpop.permute.xlu0 %1151
        %1153 = vrot.lane.b32.xlu0 %v934, 32
        %v1154 = vpop.permute.xlu0 %1153
        %1155 = vrot.lane.b32.xlu0 %v949, 32
        %v1156 = vpop.permute.xlu0 %1155
        %1157 = vrot.lane.b32.xlu0 %v964, 32
        %v1158 = vpop.permute.xlu0 %1157
        %1159 = vrot.lane.b32.xlu0 %v979, 32
        %v1160 = vpop.permute.xlu0 %1159
        %1161 = vrot.lane.b32.xlu0 %v994, 32
        %v1162 = vpop.permute.xlu0 %1161
        %1163 = vrot.lane.b32.xlu0 %v1009, 32
        %v1164 = vpop.permute.xlu0 %1163
        %1165 = vrot.lane.b32.xlu0 %v1024, 32
        %v1166 = vpop.permute.xlu0 %1165
        %1167 = vrot.lane.b32.xlu0 %v1039, 32
        %v1168 = vpop.permute.xlu0 %1167
        %1169 = vrot.lane.b32.xlu0 %v1054, 32
        %v1170 = vpop.permute.xlu0 %1169
        %1171 = vrot.lane.b32.xlu0 %v1069, 32
        %v1172 = vpop.permute.xlu0 %1171
        %1173 = vrot.lane.b32.xlu0 %v1084, 32
        %v1174 = vpop.permute.xlu0 %1173
        %1175 = vrot.lane.b32.xlu0 %v1099, 32
        %v1176 = vpop.permute.xlu0 %1175
        %1177 = vrot.lane.b32.xlu0 %v1114, 32
        %v1178 = vpop.permute.xlu0 %1177
        %v1195 = vmul.f32 %v889, %v1148
        %v1196 = vmul.f32 %v904, %v1150
        %v1197 = vmul.f32 %v919, %v1152
        %v1198 = vmul.f32 %v934, %v1154
        %v1199 = vmul.f32 %v949, %v1156
        %v1200 = vmul.f32 %v964, %v1158
        %v1201 = vmul.f32 %v979, %v1160
        %v1202 = vmul.f32 %v994, %v1162
        %v1203 = vmul.f32 %v1009, %v1164
        %v1204 = vmul.f32 %v1024, %v1166
        %v1205 = vmul.f32 %v1039, %v1168
        %v1206 = vmul.f32 %v1054, %v1170
        %v1207 = vmul.f32 %v1069, %v1172
        %v1208 = vmul.f32 %v1084, %v1174
        %v1209 = vmul.f32 %v1099, %v1176
        %v1210 = vmul.f32 %v1114, %v1178
        %1227 = vrot.lane.b32.xlu0 %v1195, 64
        %v1228 = vpop.permute.xlu0 %1227
        %1229 = vrot.lane.b32.xlu0 %v1196, 64
        %v1230 = vpop.permute.xlu0 %1229
        %1231 = vrot.lane.b32.xlu0 %v1197, 64
        %v1232 = vpop.permute.xlu0 %1231
        %1233 = vrot.lane.b32.xlu0 %v1198, 64
        %v1234 = vpop.permute.xlu0 %1233
        %1235 = vrot.lane.b32.xlu0 %v1199, 64
        %v1236 = vpop.permute.xlu0 %1235
        %1237 = vrot.lane.b32.xlu0 %v1200, 64
        %v1238 = vpop.permute.xlu0 %1237
        %1239 = vrot.lane.b32.xlu0 %v1201, 64
        %v1240 = vpop.permute.xlu0 %1239
        %1241 = vrot.lane.b32.xlu0 %v1202, 64
        %v1242 = vpop.permute.xlu0 %1241
        %1243 = vrot.lane.b32.xlu0 %v1203, 64
        %v1244 = vpop.permute.xlu0 %1243
        %1245 = vrot.lane.b32.xlu0 %v1204, 64
        %v1246 = vpop.permute.xlu0 %1245
        %1247 = vrot.lane.b32.xlu0 %v1205, 64
        %v1248 = vpop.permute.xlu0 %1247
        %1249 = vrot.lane.b32.xlu0 %v1206, 64
        %v1250 = vpop.permute.xlu0 %1249
        %1251 = vrot.lane.b32.xlu0 %v1207, 64
        %v1252 = vpop.permute.xlu0 %1251
        %1253 = vrot.lane.b32.xlu0 %v1208, 64
        %v1254 = vpop.permute.xlu0 %1253
        %1255 = vrot.lane.b32.xlu0 %v1209, 64
        %v1256 = vpop.permute.xlu0 %1255
        %1257 = vrot.lane.b32.xlu0 %v1210, 64
        %v1258 = vpop.permute.xlu0 %1257
        %v1275 = vadd.f32 %v1115, %v1228
        %v1276 = vadd.f32 %v1116, %v1230
        %v1277 = vadd.f32 %v1117, %v1232
        %v1278 = vadd.f32 %v1118, %v1234
        %v1279 = vadd.f32 %v1119, %v1236
        %v1280 = vadd.f32 %v1120, %v1238
        %v1281 = vadd.f32 %v1121, %v1240
        %v1282 = vadd.f32 %v1122, %v1242
        %v1283 = vadd.f32 %v1123, %v1244
        %v1284 = vadd.f32 %v1124, %v1246
        %v1285 = vadd.f32 %v1125, %v1248
        %v1286 = vadd.f32 %v1126, %v1250
        %v1287 = vadd.f32 %v1127, %v1252
        %v1288 = vadd.f32 %v1128, %v1254
        %v1289 = vadd.f32 %v1129, %v1256
        %v1290 = vadd.f32 %v1130, %v1258
        %v1291 = vtanh.pop %v1275
        %v1292 = vtanh.pop %v1276
        %v1293 = vtanh.pop %v1277
        %v1294 = vtanh.pop %v1278
        %v1295 = vtanh.pop %v1279
        %v1296 = vtanh.pop %v1280
        %v1297 = vtanh.pop %v1281
        %v1298 = vtanh.pop %v1282
        %v1299 = vtanh.pop %v1283
        %v1300 = vtanh.pop %v1284
        %v1301 = vtanh.pop %v1285
        %v1302 = vtanh.pop %v1286
        %v1303 = vtanh.pop %v1287
        %v1304 = vtanh.pop %v1288
        %v1305 = vtanh.pop %v1289
        %v1306 = vtanh.pop %v1290
        %1323 = vrot.lane.b32.xlu0 %v1291, 96
        %v1324 = vpop.permute.xlu0 %1323
        %1325 = vrot.lane.b32.xlu0 %v1292, 96
        %v1326 = vpop.permute.xlu0 %1325
        %1327 = vrot.lane.b32.xlu0 %v1293, 96
        %v1328 = vpop.permute.xlu0 %1327
        %1329 = vrot.lane.b32.xlu0 %v1294, 96
        %v1330 = vpop.permute.xlu0 %1329
        %1331 = vrot.lane.b32.xlu0 %v1295, 96
        %v1332 = vpop.permute.xlu0 %1331
        %1333 = vrot.lane.b32.xlu0 %v1296, 96
        %v1334 = vpop.permute.xlu0 %1333
        %1335 = vrot.lane.b32.xlu0 %v1297, 96
        %v1336 = vpop.permute.xlu0 %1335
        %1337 = vrot.lane.b32.xlu0 %v1298, 96
        %v1338 = vpop.permute.xlu0 %1337
        %1339 = vrot.lane.b32.xlu0 %v1299, 96
        %v1340 = vpop.permute.xlu0 %1339
        %1341 = vrot.lane.b32.xlu0 %v1300, 96
        %v1342 = vpop.permute.xlu0 %1341
        %1343 = vrot.lane.b32.xlu0 %v1301, 96
        %v1344 = vpop.permute.xlu0 %1343
        %1345 = vrot.lane.b32.xlu0 %v1302, 96
        %v1346 = vpop.permute.xlu0 %1345
        %1347 = vrot.lane.b32.xlu0 %v1303, 96
        %v1348 = vpop.permute.xlu0 %1347
        %1349 = vrot.lane.b32.xlu0 %v1304, 96
        %v1350 = vpop.permute.xlu0 %1349
        %1351 = vrot.lane.b32.xlu0 %v1305, 96
        %v1352 = vpop.permute.xlu0 %1351
        %1353 = vrot.lane.b32.xlu0 %v1306, 96
        %v1354 = vpop.permute.xlu0 %1353
        %v1371 = vmul.f32 %v889, %v1324
        %v1372 = vmul.f32 %v904, %v1326
        %v1373 = vmul.f32 %v919, %v1328
        %v1374 = vmul.f32 %v934, %v1330
        %v1375 = vmul.f32 %v949, %v1332
        %v1376 = vmul.f32 %v964, %v1334
        %v1377 = vmul.f32 %v979, %v1336
        %v1378 = vmul.f32 %v994, %v1338
        %v1379 = vmul.f32 %v1009, %v1340
        %v1380 = vmul.f32 %v1024, %v1342
        %v1381 = vmul.f32 %v1039, %v1344
        %v1382 = vmul.f32 %v1054, %v1346
        %v1383 = vmul.f32 %v1069, %v1348
        %v1384 = vmul.f32 %v1084, %v1350
        %v1385 = vmul.f32 %v1099, %v1352
        %v1386 = vmul.f32 %v1114, %v1354
        %1403 = vrot.lane.b32.xlu0 %v1371, 96
        %v1404 = vpop.permute.xlu0 %1403
        %1405 = vrot.lane.b32.xlu0 %v1372, 96
        %v1406 = vpop.permute.xlu0 %1405
        %1407 = vrot.lane.b32.xlu0 %v1373, 96
        %v1408 = vpop.permute.xlu0 %1407
        %1409 = vrot.lane.b32.xlu0 %v1374, 96
        %v1410 = vpop.permute.xlu0 %1409
        %1411 = vrot.lane.b32.xlu0 %v1375, 96
        %v1412 = vpop.permute.xlu0 %1411
        %1413 = vrot.lane.b32.xlu0 %v1376, 96
        %v1414 = vpop.permute.xlu0 %1413
        %1415 = vrot.lane.b32.xlu0 %v1377, 96
        %v1416 = vpop.permute.xlu0 %1415
        %1417 = vrot.lane.b32.xlu0 %v1378, 96
        %v1418 = vpop.permute.xlu0 %1417
        %1419 = vrot.lane.b32.xlu0 %v1379, 96
        %v1420 = vpop.permute.xlu0 %1419
        %1421 = vrot.lane.b32.xlu0 %v1380, 96
        %v1422 = vpop.permute.xlu0 %1421
        %1423 = vrot.lane.b32.xlu0 %v1381, 96
        %v1424 = vpop.permute.xlu0 %1423
        %1425 = vrot.lane.b32.xlu0 %v1382, 96
        %v1426 = vpop.permute.xlu0 %1425
        %1427 = vrot.lane.b32.xlu0 %v1383, 96
        %v1428 = vpop.permute.xlu0 %1427
        %1429 = vrot.lane.b32.xlu0 %v1384, 96
        %v1430 = vpop.permute.xlu0 %1429
        %1431 = vrot.lane.b32.xlu0 %v1385, 96
        %v1432 = vpop.permute.xlu0 %1431
        %1433 = vrot.lane.b32.xlu0 %v1386, 96
        %v1434 = vpop.permute.xlu0 %1433
        %v1435 = vsel %vm483, %v1404, 0
        %v1437 = vsel %vm483, %v1406, 0
        %v1439 = vsel %vm483, %v1408, 0
        %v1441 = vsel %vm483, %v1410, 0
        %v1443 = vsel %vm483, %v1412, 0
        %v1445 = vsel %vm483, %v1414, 0
        %v1447 = vsel %vm483, %v1416, 0
        %v1449 = vsel %vm483, %v1418, 0
        %v1451 = vsel %vm483, %v1420, 0
        %v1453 = vsel %vm483, %v1422, 0
        %v1455 = vsel %vm483, %v1424, 0
        %v1457 = vsel %vm483, %v1426, 0
        %v1459 = vsel %vm483, %v1428, 0
        %v1461 = vsel %vm483, %v1430, 0
        %v1463 = vsel %vm483, %v1432, 0
        %v1465 = vsel %vm483, %v1434, 0
        %1467 = vmatpush.msra.mxu0 0.0
        %1468 = vmatpush.msra.mxu0 0.0
        %1469 = vmatpush.msra.mxu0 0.0
        %1470 = vmatpush.msra.mxu0 0.0
        %1471 = vmatpush.msra.mxu0 0.0
        %1472 = vmatpush.msra.mxu0 0.0
        %1473 = vmatpush.msra.mxu0 0.0
        %1474 = vmatpush.msra.mxu0 0.0
        %1475 = vmatpush.msra.mxu0 0.0
        %1476 = vmatpush.msra.mxu0 0.0
        %1477 = vmatpush.msra.mxu0 0.0
        %1478 = vmatpush.msra.mxu0 0.0
        %1479 = vmatpush.msra.mxu0 %v481
        %1480 = vmatpush.msra.mxu0 %v479
        %1481 = vmatpush.msra.mxu0 %v477
        %1482 = vmatpush.msra.mxu0 %v475
        %1483 = vmatmul.f32.gmra.mxu0 %v1435
        %v1484 = vpop.f32.mrf.mxu0
        %v1485 = vadd.f32 0.0, %v1484
        %1486 = vmatmul.f32.gmra.mxu0 %v1437
        %v1487 = vpop.f32.mrf.mxu0
        %v1488 = vadd.f32 0.0, %v1487
        %1489 = vmatmul.f32.gmra.mxu0 %v1439
        %v1490 = vpop.f32.mrf.mxu0
        %v1491 = vadd.f32 0.0, %v1490
        %1492 = vmatmul.f32.gmra.mxu0 %v1441
        %v1493 = vpop.f32.mrf.mxu0
        %v1494 = vadd.f32 0.0, %v1493
        %1495 = vmatmul.f32.gmra.mxu0 %v1443
        %v1496 = vpop.f32.mrf.mxu0
        %v1497 = vadd.f32 0.0, %v1496
        %1498 = vmatmul.f32.gmra.mxu0 %v1445
        %v1499 = vpop.f32.mrf.mxu0
        %v1500 = vadd.f32 0.0, %v1499
        %1501 = vmatmul.f32.gmra.mxu0 %v1447
        %v1502 = vpop.f32.mrf.mxu0
        %v1503 = vadd.f32 0.0, %v1502
        %1504 = vmatmul.f32.gmra.mxu0 %v1449
        %v1505 = vpop.f32.mrf.mxu0
        %v1506 = vadd.f32 0.0, %v1505
        %1507 = vmatmul.f32.gmra.mxu0 %v1451
        %v1508 = vpop.f32.mrf.mxu0
        %v1509 = vadd.f32 0.0, %v1508
        %1510 = vmatmul.f32.gmra.mxu0 %v1453
        %v1511 = vpop.f32.mrf.mxu0
        %v1512 = vadd.f32 0.0, %v1511
        %1513 = vmatmul.f32.gmra.mxu0 %v1455
        %v1514 = vpop.f32.mrf.mxu0
        %v1515 = vadd.f32 0.0, %v1514
        %1516 = vmatmul.f32.gmra.mxu0 %v1457
        %v1517 = vpop.f32.mrf.mxu0
        %v1518 = vadd.f32 0.0, %v1517
        %1519 = vmatmul.f32.gmra.mxu0 %v1459
        %v1520 = vpop.f32.mrf.mxu0
        %v1521 = vadd.f32 0.0, %v1520
        %1522 = vmatmul.f32.gmra.mxu0 %v1461
        %v1523 = vpop.f32.mrf.mxu0
        %v1524 = vadd.f32 0.0, %v1523
        %1525 = vmatmul.f32.gmra.mxu0 %v1463
        %v1526 = vpop.f32.mrf.mxu0
        %v1527 = vadd.f32 0.0, %v1526
        %1528 = vmatmul.f32.gmra.mxu0 %v1465
        %v1529 = vpop.f32.mrf.mxu0
        %v1530 = vadd.f32 0.0, %v1529
        %1531 = vdwg.mxu0
        %1532 = vmatpush.msra.mxu0 0.0
        %1533 = vmatpush.msra.mxu0 0.0
        %1534 = vmatpush.msra.mxu0 0.0
        %1535 = vmatpush.msra.mxu0 0.0
        %1536 = vmatpush.msra.mxu0 0.0
        %1537 = vmatpush.msra.mxu0 0.0
        %1538 = vmatpush.msra.mxu0 0.0
        %1539 = vmatpush.msra.mxu0 0.0
        %1540 = vmatpush.msra.mxu0 0.0
        %1541 = vmatpush.msra.mxu0 0.0
        %1542 = vmatpush.msra.mxu0 0.0
        %1543 = vmatpush.msra.mxu0 0.0
        %1544 = vmatpush.msra.mxu0 %v482
        %1545 = vmatpush.msra.mxu0 %v480
        %1546 = vmatpush.msra.mxu0 %v478
        %1547 = vmatpush.msra.mxu0 %v476
        %1548 = vmatmul.f32.gmra.mxu0 %v1435
        %v1549 = vpop.f32.mrf.mxu0
        %v1550 = vadd.f32 0.0, %v1549
        %1551 = vmatmul.f32.gmra.mxu0 %v1437
        %v1552 = vpop.f32.mrf.mxu0
        %v1553 = vadd.f32 0.0, %v1552
        %1554 = vmatmul.f32.gmra.mxu0 %v1439
        %v1555 = vpop.f32.mrf.mxu0
        %v1556 = vadd.f32 0.0, %v1555
        %1557 = vmatmul.f32.gmra.mxu0 %v1441
        %v1558 = vpop.f32.mrf.mxu0
        %v1559 = vadd.f32 0.0, %v1558
        %1560 = vmatmul.f32.gmra.mxu0 %v1443
        %v1561 = vpop.f32.mrf.mxu0
        %v1562 = vadd.f32 0.0, %v1561
        %1563 = vmatmul.f32.gmra.mxu0 %v1445
        %v1564 = vpop.f32.mrf.mxu0
        %v1565 = vadd.f32 0.0, %v1564
        %1566 = vmatmul.f32.gmra.mxu0 %v1447
        %v1567 = vpop.f32.mrf.mxu0
        %v1568 = vadd.f32 0.0, %v1567
        %1569 = vmatmul.f32.gmra.mxu0 %v1449
        %v1570 = vpop.f32.mrf.mxu0
        %v1571 = vadd.f32 0.0, %v1570
        %1572 = vmatmul.f32.gmra.mxu0 %v1451
        %v1573 = vpop.f32.mrf.mxu0
        %v1574 = vadd.f32 0.0, %v1573
        %1575 = vmatmul.f32.gmra.mxu0 %v1453
        %v1576 = vpop.f32.mrf.mxu0
        %v1577 = vadd.f32 0.0, %v1576
        %1578 = vmatmul.f32.gmra.mxu0 %v1455
        %v1579 = vpop.f32.mrf.mxu0
        %v1580 = vadd.f32 0.0, %v1579
        %1581 = vmatmul.f32.gmra.mxu0 %v1457
        %v1582 = vpop.f32.mrf.mxu0
        %v1583 = vadd.f32 0.0, %v1582
        %1584 = vmatmul.f32.gmra.mxu0 %v1459
        %v1585 = vpop.f32.mrf.mxu0
        %v1586 = vadd.f32 0.0, %v1585
        %1587 = vmatmul.f32.gmra.mxu0 %v1461
        %v1588 = vpop.f32.mrf.mxu0
        %v1589 = vadd.f32 0.0, %v1588
        %1590 = vmatmul.f32.gmra.mxu0 %v1463
        %v1591 = vpop.f32.mrf.mxu0
        %v1592 = vadd.f32 0.0, %v1591
        %1593 = vmatmul.f32.gmra.mxu0 %v1465
        %v1594 = vpop.f32.mrf.mxu0
        %v1595 = vadd.f32 0.0, %v1594
        %1596 = vdwg.mxu0
        %1597 = vmatpush.msra.mxu0 %v1595
        %1598 = vmatpush.msra.mxu0 %v1592
        %1599 = vmatpush.msra.mxu0 %v1589
        %1600 = vmatpush.msra.mxu0 %v1586
        %1601 = vmatpush.msra.mxu0 %v1583
        %1602 = vmatpush.msra.mxu0 %v1580
        %1603 = vmatpush.msra.mxu0 %v1577
        %1604 = vmatpush.msra.mxu0 %v1574
        %1605 = vmatpush.msra.mxu0 %v1571
        %1606 = vmatpush.msra.mxu0 %v1568
        %1607 = vmatpush.msra.mxu0 %v1565
        %1608 = vmatpush.msra.mxu0 %v1562
        %1609 = vmatpush.msra.mxu0 %v1559
        %1610 = vmatpush.msra.mxu0 %v1556
        %1611 = vmatpush.msra.mxu0 %v1553
        %1612 = vmatpush.msra.mxu0 %v1550
        %1613 = vmatmul.f32.gmra.mxu0 %v633
        %v1614 = vpop.f32.mrf.mxu0
        %v1615 = vadd.f32 0.0, %v1614
        %1616 = vmatmul.f32.gmra.mxu0 %v634
        %v1617 = vpop.f32.mrf.mxu0
        %v1618 = vadd.f32 0.0, %v1617
        %1619 = vmatmul.f32.gmra.mxu0 %v635
        %v1620 = vpop.f32.mrf.mxu0
        %v1621 = vadd.f32 0.0, %v1620
        %1622 = vmatmul.f32.gmra.mxu0 %v636
        %v1623 = vpop.f32.mrf.mxu0
        %v1624 = vadd.f32 0.0, %v1623
        %1625 = vmatmul.f32.gmra.mxu0 %v637
        %v1626 = vpop.f32.mrf.mxu0
        %v1627 = vadd.f32 0.0, %v1626
        %1628 = vmatmul.f32.gmra.mxu0 %v638
        %v1629 = vpop.f32.mrf.mxu0
        %v1630 = vadd.f32 0.0, %v1629
        %1631 = vmatmul.f32.gmra.mxu0 %v639
        %v1632 = vpop.f32.mrf.mxu0
        %v1633 = vadd.f32 0.0, %v1632
        %1634 = vmatmul.f32.gmra.mxu0 %v640
        %v1635 = vpop.f32.mrf.mxu0
        %v1636 = vadd.f32 0.0, %v1635
        %1637 = vmatmul.f32.gmra.mxu0 %v641
        %v1638 = vpop.f32.mrf.mxu0
        %v1639 = vadd.f32 0.0, %v1638
        %1640 = vmatmul.f32.gmra.mxu0 %v642
        %v1641 = vpop.f32.mrf.mxu0
        %v1642 = vadd.f32 0.0, %v1641
        %1643 = vmatmul.f32.gmra.mxu0 %v643
        %v1644 = vpop.f32.mrf.mxu0
        %v1645 = vadd.f32 0.0, %v1644
        %1646 = vmatmul.f32.gmra.mxu0 %v644
        %v1647 = vpop.f32.mrf.mxu0
        %v1648 = vadd.f32 0.0, %v1647
        %1649 = vmatmul.f32.gmra.mxu0 %v645
        %v1650 = vpop.f32.mrf.mxu0
        %v1651 = vadd.f32 0.0, %v1650
        %1652 = vmatmul.f32.gmra.mxu0 %v646
        %v1653 = vpop.f32.mrf.mxu0
        %v1654 = vadd.f32 0.0, %v1653
        %1655 = vmatmul.f32.gmra.mxu0 %v647
        %v1656 = vpop.f32.mrf.mxu0
        %v1657 = vadd.f32 0.0, %v1656
        %1658 = vmatmul.f32.gmra.mxu0 %v648
        %v1659 = vpop.f32.mrf.mxu0
        %v1660 = vadd.f32 0.0, %v1659
        %1661 = vdwg.mxu0
        %1662 = vmatpush.msra.mxu0 %v1530
        %1663 = vmatpush.msra.mxu0 %v1527
        %1664 = vmatpush.msra.mxu0 %v1524
        %1665 = vmatpush.msra.mxu0 %v1521
        %1666 = vmatpush.msra.mxu0 %v1518
        %1667 = vmatpush.msra.mxu0 %v1515
        %1668 = vmatpush.msra.mxu0 %v1512
        %1669 = vmatpush.msra.mxu0 %v1509
        %1670 = vmatpush.msra.mxu0 %v1506
        %1671 = vmatpush.msra.mxu0 %v1503
        %1672 = vmatpush.msra.mxu0 %v1500
        %1673 = vmatpush.msra.mxu0 %v1497
        %1674 = vmatpush.msra.mxu0 %v1494
        %1675 = vmatpush.msra.mxu0 %v1491
        %1676 = vmatpush.msra.mxu0 %v1488
        %1677 = vmatpush.msra.mxu0 %v1485
        %1678 = vmatmul.f32.gmra.mxu0 %v617
        %v1679 = vpop.f32.mrf.mxu0
        %v1680 = vadd.f32 %v1615, %v1679
        %1681 = vmatmul.f32.gmra.mxu0 %v618
        %v1682 = vpop.f32.mrf.mxu0
        %v1683 = vadd.f32 %v1618, %v1682
        %1684 = vmatmul.f32.gmra.mxu0 %v619
        %v1685 = vpop.f32.mrf.mxu0
        %v1686 = vadd.f32 %v1621, %v1685
        %1687 = vmatmul.f32.gmra.mxu0 %v620
        %v1688 = vpop.f32.mrf.mxu0
        %v1689 = vadd.f32 %v1624, %v1688
        %1690 = vmatmul.f32.gmra.mxu0 %v621
        %v1691 = vpop.f32.mrf.mxu0
        %v1692 = vadd.f32 %v1627, %v1691
        %1693 = vmatmul.f32.gmra.mxu0 %v622
        %v1694 = vpop.f32.mrf.mxu0
        %v1695 = vadd.f32 %v1630, %v1694
        %1696 = vmatmul.f32.gmra.mxu0 %v623
        %v1697 = vpop.f32.mrf.mxu0
        %v1698 = vadd.f32 %v1633, %v1697
        %1699 = vmatmul.f32.gmra.mxu0 %v624
        %v1700 = vpop.f32.mrf.mxu0
        %v1701 = vadd.f32 %v1636, %v1700
        %1702 = vmatmul.f32.gmra.mxu0 %v625
        %v1703 = vpop.f32.mrf.mxu0
        %v1704 = vadd.f32 %v1639, %v1703
        %1705 = vmatmul.f32.gmra.mxu0 %v626
        %v1706 = vpop.f32.mrf.mxu0
        %v1707 = vadd.f32 %v1642, %v1706
        %1708 = vmatmul.f32.gmra.mxu0 %v627
        %v1709 = vpop.f32.mrf.mxu0
        %v1710 = vadd.f32 %v1645, %v1709
        %1711 = vmatmul.f32.gmra.mxu0 %v628
        %v1712 = vpop.f32.mrf.mxu0
        %v1713 = vadd.f32 %v1648, %v1712
        %1714 = vmatmul.f32.gmra.mxu0 %v629
        %v1715 = vpop.f32.mrf.mxu0
        %v1716 = vadd.f32 %v1651, %v1715
        %1717 = vmatmul.f32.gmra.mxu0 %v630
        %v1718 = vpop.f32.mrf.mxu0
        %v1719 = vadd.f32 %v1654, %v1718
        %1720 = vmatmul.f32.gmra.mxu0 %v631
        %v1721 = vpop.f32.mrf.mxu0
        %v1722 = vadd.f32 %v1657, %v1721
        %1723 = vmatmul.f32.gmra.mxu0 %v632
        %v1724 = vpop.f32.mrf.mxu0
        %v1725 = vadd.f32 %v1660, %v1724
        %1726 = vdwg.mxu0
        %v1727 = vadd.f32 %v779, %v1680
        %v1728 = vadd.f32 %v780, %v1683
        %v1729 = vadd.f32 %v781, %v1686
        %v1730 = vadd.f32 %v782, %v1689
        %v1731 = vadd.f32 %v783, %v1692
        %v1732 = vadd.f32 %v784, %v1695
        %v1733 = vadd.f32 %v785, %v1698
        %v1734 = vadd.f32 %v786, %v1701
        %v1735 = vadd.f32 %v787, %v1704
        %v1736 = vadd.f32 %v788, %v1707
        %v1737 = vadd.f32 %v789, %v1710
        %v1738 = vadd.f32 %v790, %v1713
        %v1739 = vadd.f32 %v791, %v1716
        %v1740 = vadd.f32 %v792, %v1719
        %v1741 = vadd.f32 %v793, %v1722
        %v1742 = vadd.f32 %v794, %v1725
        %v1743 = vxor.u32 %v1727, 2147483648
        %v1744 = vxor.u32 %v1728, 2147483648
        %v1745 = vxor.u32 %v1729, 2147483648
        %v1746 = vxor.u32 %v1730, 2147483648
        %v1747 = vxor.u32 %v1731, 2147483648
        %v1748 = vxor.u32 %v1732, 2147483648
        %v1749 = vxor.u32 %v1733, 2147483648
        %v1750 = vxor.u32 %v1734, 2147483648
        %v1751 = vxor.u32 %v1735, 2147483648
        %v1752 = vxor.u32 %v1736, 2147483648
        %v1753 = vxor.u32 %v1737, 2147483648
        %v1754 = vxor.u32 %v1738, 2147483648
        %v1755 = vxor.u32 %v1739, 2147483648
        %v1756 = vxor.u32 %v1740, 2147483648
        %v1757 = vxor.u32 %v1741, 2147483648
        %v1758 = vxor.u32 %v1742, 2147483648
        %v1759 = vmul.f32 %v1743, 1.442695
        %v1760 = vpow.pop %v1759
        %v1761 = vmul.f32 %v1744, 1.442695
        %v1762 = vpow.pop %v1761
        %v1763 = vmul.f32 %v1745, 1.442695
        %v1764 = vpow.pop %v1763
        %v1765 = vmul.f32 %v1746, 1.442695
        %v1766 = vpow.pop %v1765
        %v1767 = vmul.f32 %v1747, 1.442695
        %v1768 = vpow.pop %v1767
        %v1769 = vmul.f32 %v1748, 1.442695
        %v1770 = vpow.pop %v1769
        %v1771 = vmul.f32 %v1749, 1.442695
        %v1772 = vpow.pop %v1771
        %v1773 = vmul.f32 %v1750, 1.442695
        %v1774 = vpow.pop %v1773
        %v1775 = vmul.f32 %v1751, 1.442695
        %v1776 = vpow.pop %v1775
        %v1777 = vmul.f32 %v1752, 1.442695
        %v1778 = vpow.pop %v1777
        %v1779 = vmul.f32 %v1753, 1.442695
        %v1780 = vpow.pop %v1779
        %v1781 = vmul.f32 %v1754, 1.442695
        %v1782 = vpow.pop %v1781
        %v1783 = vmul.f32 %v1755, 1.442695
        %v1784 = vpow.pop %v1783
        %v1785 = vmul.f32 %v1756, 1.442695
        %v1786 = vpow.pop %v1785
        %v1787 = vmul.f32 %v1757, 1.442695
        %v1788 = vpow.pop %v1787
        %v1789 = vmul.f32 %v1758, 1.442695
        %v1790 = vpow.pop %v1789
        %v1791 = vadd.f32 %v1760, 1.0
        %v1792 = vadd.f32 %v1762, 1.0
        %v1793 = vadd.f32 %v1764, 1.0
        %v1794 = vadd.f32 %v1766, 1.0
        %v1795 = vadd.f32 %v1768, 1.0
        %v1796 = vadd.f32 %v1770, 1.0
        %v1797 = vadd.f32 %v1772, 1.0
        %v1798 = vadd.f32 %v1774, 1.0
        %v1799 = vadd.f32 %v1776, 1.0
        %v1800 = vadd.f32 %v1778, 1.0
        %v1801 = vadd.f32 %v1780, 1.0
        %v1802 = vadd.f32 %v1782, 1.0
        %v1803 = vadd.f32 %v1784, 1.0
        %v1804 = vadd.f32 %v1786, 1.0
        %v1805 = vadd.f32 %v1788, 1.0
        %v1806 = vadd.f32 %v1790, 1.0
        %v1807 = vrcp.pop %v1791
        %v1808 = vmul.f32 %v1791, %v1807
        %v1809 = vsub.f32 1.0, %v1808
        %v1810 = vmul.f32 %v1807, %v1809
        %v1811 = vadd.f32 %v1807, %v1810
        %vm1812 = vweird.f32 %v1791
        %vm1813 = vweird.f32 %v1807
        %vm1814 = vmor %vm1812, %vm1813
        %v1815 = vsel %vm1814, %v1807, %v1811
        %v1816 = vand.u32 2147483647, %v1791
        %vm1817 = vcmp.eq.f32.partialorder %v1816, 8.507059e+37
        %v1818 = vand.u32 %v1791, 2147483648
        %v1819 = vor.u32 1.1754944e-38, %v1818
        %v1820 = vsel %vm1817, %v1819, %v1815
        %v1821 = vmul.f32 1.0, %v1820
        %v1822 = vrcp.pop %v1792
        %v1823 = vmul.f32 %v1792, %v1822
        %v1824 = vsub.f32 1.0, %v1823
        %v1825 = vmul.f32 %v1822, %v1824
        %v1826 = vadd.f32 %v1822, %v1825
        %vm1827 = vweird.f32 %v1792
        %vm1828 = vweird.f32 %v1822
        %vm1829 = vmor %vm1827, %vm1828
        %v1830 = vsel %vm1829, %v1822, %v1826
        %v1831 = vand.u32 2147483647, %v1792
        %vm1832 = vcmp.eq.f32.partialorder %v1831, 8.507059e+37
        %v1833 = vand.u32 %v1792, 2147483648
        %v1834 = vor.u32 1.1754944e-38, %v1833
        %v1835 = vsel %vm1832, %v1834, %v1830
        %v1836 = vmul.f32 1.0, %v1835
        %v1837 = vrcp.pop %v1793
        %v1838 = vmul.f32 %v1793, %v1837
        %v1839 = vsub.f32 1.0, %v1838
        %v1840 = vmul.f32 %v1837, %v1839
        %v1841 = vadd.f32 %v1837, %v1840
        %vm1842 = vweird.f32 %v1793
        %vm1843 = vweird.f32 %v1837
        %vm1844 = vmor %vm1842, %vm1843
        %v1845 = vsel %vm1844, %v1837, %v1841
        %v1846 = vand.u32 2147483647, %v1793
        %vm1847 = vcmp.eq.f32.partialorder %v1846, 8.507059e+37
        %v1848 = vand.u32 %v1793, 2147483648
        %v1849 = vor.u32 1.1754944e-38, %v1848
        %v1850 = vsel %vm1847, %v1849, %v1845
        %v1851 = vmul.f32 1.0, %v1850
        %v1852 = vrcp.pop %v1794
        %v1853 = vmul.f32 %v1794, %v1852
        %v1854 = vsub.f32 1.0, %v1853
        %v1855 = vmul.f32 %v1852, %v1854
        %v1856 = vadd.f32 %v1852, %v1855
        %vm1857 = vweird.f32 %v1794
        %vm1858 = vweird.f32 %v1852
        %vm1859 = vmor %vm1857, %vm1858
        %v1860 = vsel %vm1859, %v1852, %v1856
        %v1861 = vand.u32 2147483647, %v1794
        %vm1862 = vcmp.eq.f32.partialorder %v1861, 8.507059e+37
        %v1863 = vand.u32 %v1794, 2147483648
        %v1864 = vor.u32 1.1754944e-38, %v1863
        %v1865 = vsel %vm1862, %v1864, %v1860
        %v1866 = vmul.f32 1.0, %v1865
        %v1867 = vrcp.pop %v1795
        %v1868 = vmul.f32 %v1795, %v1867
        %v1869 = vsub.f32 1.0, %v1868
        %v1870 = vmul.f32 %v1867, %v1869
        %v1871 = vadd.f32 %v1867, %v1870
        %vm1872 = vweird.f32 %v1795
        %vm1873 = vweird.f32 %v1867
        %vm1874 = vmor %vm1872, %vm1873
        %v1875 = vsel %vm1874, %v1867, %v1871
        %v1876 = vand.u32 2147483647, %v1795
        %vm1877 = vcmp.eq.f32.partialorder %v1876, 8.507059e+37
        %v1878 = vand.u32 %v1795, 2147483648
        %v1879 = vor.u32 1.1754944e-38, %v1878
        %v1880 = vsel %vm1877, %v1879, %v1875
        %v1881 = vmul.f32 1.0, %v1880
        %v1882 = vrcp.pop %v1796
        %v1883 = vmul.f32 %v1796, %v1882
        %v1884 = vsub.f32 1.0, %v1883
        %v1885 = vmul.f32 %v1882, %v1884
        %v1886 = vadd.f32 %v1882, %v1885
        %vm1887 = vweird.f32 %v1796
        %vm1888 = vweird.f32 %v1882
        %vm1889 = vmor %vm1887, %vm1888
        %v1890 = vsel %vm1889, %v1882, %v1886
        %v1891 = vand.u32 2147483647, %v1796
        %vm1892 = vcmp.eq.f32.partialorder %v1891, 8.507059e+37
        %v1893 = vand.u32 %v1796, 2147483648
        %v1894 = vor.u32 1.1754944e-38, %v1893
        %v1895 = vsel %vm1892, %v1894, %v1890
        %v1896 = vmul.f32 1.0, %v1895
        %v1897 = vrcp.pop %v1797
        %v1898 = vmul.f32 %v1797, %v1897
        %v1899 = vsub.f32 1.0, %v1898
        %v1900 = vmul.f32 %v1897, %v1899
        %v1901 = vadd.f32 %v1897, %v1900
        %vm1902 = vweird.f32 %v1797
        %vm1903 = vweird.f32 %v1897
        %vm1904 = vmor %vm1902, %vm1903
        %v1905 = vsel %vm1904, %v1897, %v1901
        %v1906 = vand.u32 2147483647, %v1797
        %vm1907 = vcmp.eq.f32.partialorder %v1906, 8.507059e+37
        %v1908 = vand.u32 %v1797, 2147483648
        %v1909 = vor.u32 1.1754944e-38, %v1908
        %v1910 = vsel %vm1907, %v1909, %v1905
        %v1911 = vmul.f32 1.0, %v1910
        %v1912 = vrcp.pop %v1798
        %v1913 = vmul.f32 %v1798, %v1912
        %v1914 = vsub.f32 1.0, %v1913
        %v1915 = vmul.f32 %v1912, %v1914
        %v1916 = vadd.f32 %v1912, %v1915
        %vm1917 = vweird.f32 %v1798
        %vm1918 = vweird.f32 %v1912
        %vm1919 = vmor %vm1917, %vm1918
        %v1920 = vsel %vm1919, %v1912, %v1916
        %v1921 = vand.u32 2147483647, %v1798
        %vm1922 = vcmp.eq.f32.partialorder %v1921, 8.507059e+37
        %v1923 = vand.u32 %v1798, 2147483648
        %v1924 = vor.u32 1.1754944e-38, %v1923
        %v1925 = vsel %vm1922, %v1924, %v1920
        %v1926 = vmul.f32 1.0, %v1925
        %v1927 = vrcp.pop %v1799
        %v1928 = vmul.f32 %v1799, %v1927
        %v1929 = vsub.f32 1.0, %v1928
        %v1930 = vmul.f32 %v1927, %v1929
        %v1931 = vadd.f32 %v1927, %v1930
        %vm1932 = vweird.f32 %v1799
        %vm1933 = vweird.f32 %v1927
        %vm1934 = vmor %vm1932, %vm1933
        %v1935 = vsel %vm1934, %v1927, %v1931
        %v1936 = vand.u32 2147483647, %v1799
        %vm1937 = vcmp.eq.f32.partialorder %v1936, 8.507059e+37
        %v1938 = vand.u32 %v1799, 2147483648
        %v1939 = vor.u32 1.1754944e-38, %v1938
        %v1940 = vsel %vm1937, %v1939, %v1935
        %v1941 = vmul.f32 1.0, %v1940
        %v1942 = vrcp.pop %v1800
        %v1943 = vmul.f32 %v1800, %v1942
        %v1944 = vsub.f32 1.0, %v1943
        %v1945 = vmul.f32 %v1942, %v1944
        %v1946 = vadd.f32 %v1942, %v1945
        %vm1947 = vweird.f32 %v1800
        %vm1948 = vweird.f32 %v1942
        %vm1949 = vmor %vm1947, %vm1948
        %v1950 = vsel %vm1949, %v1942, %v1946
        %v1951 = vand.u32 2147483647, %v1800
        %vm1952 = vcmp.eq.f32.partialorder %v1951, 8.507059e+37
        %v1953 = vand.u32 %v1800, 2147483648
        %v1954 = vor.u32 1.1754944e-38, %v1953
        %v1955 = vsel %vm1952, %v1954, %v1950
        %v1956 = vmul.f32 1.0, %v1955
        %v1957 = vrcp.pop %v1801
        %v1958 = vmul.f32 %v1801, %v1957
        %v1959 = vsub.f32 1.0, %v1958
        %v1960 = vmul.f32 %v1957, %v1959
        %v1961 = vadd.f32 %v1957, %v1960
        %vm1962 = vweird.f32 %v1801
        %vm1963 = vweird.f32 %v1957
        %vm1964 = vmor %vm1962, %vm1963
        %v1965 = vsel %vm1964, %v1957, %v1961
        %v1966 = vand.u32 2147483647, %v1801
        %vm1967 = vcmp.eq.f32.partialorder %v1966, 8.507059e+37
        %v1968 = vand.u32 %v1801, 2147483648
        %v1969 = vor.u32 1.1754944e-38, %v1968
        %v1970 = vsel %vm1967, %v1969, %v1965
        %v1971 = vmul.f32 1.0, %v1970
        %v1972 = vrcp.pop %v1802
        %v1973 = vmul.f32 %v1802, %v1972
        %v1974 = vsub.f32 1.0, %v1973
        %v1975 = vmul.f32 %v1972, %v1974
        %v1976 = vadd.f32 %v1972, %v1975
        %vm1977 = vweird.f32 %v1802
        %vm1978 = vweird.f32 %v1972
        %vm1979 = vmor %vm1977, %vm1978
        %v1980 = vsel %vm1979, %v1972, %v1976
        %v1981 = vand.u32 2147483647, %v1802
        %vm1982 = vcmp.eq.f32.partialorder %v1981, 8.507059e+37
        %v1983 = vand.u32 %v1802, 2147483648
        %v1984 = vor.u32 1.1754944e-38, %v1983
        %v1985 = vsel %vm1982, %v1984, %v1980
        %v1986 = vmul.f32 1.0, %v1985
        %v1987 = vrcp.pop %v1803
        %v1988 = vmul.f32 %v1803, %v1987
        %v1989 = vsub.f32 1.0, %v1988
        %v1990 = vmul.f32 %v1987, %v1989
        %v1991 = vadd.f32 %v1987, %v1990
        %vm1992 = vweird.f32 %v1803
        %vm1993 = vweird.f32 %v1987
        %vm1994 = vmor %vm1992, %vm1993
        %v1995 = vsel %vm1994, %v1987, %v1991
        %v1996 = vand.u32 2147483647, %v1803
        %vm1997 = vcmp.eq.f32.partialorder %v1996, 8.507059e+37
        %v1998 = vand.u32 %v1803, 2147483648
        %v1999 = vor.u32 1.1754944e-38, %v1998
        %v2000 = vsel %vm1997, %v1999, %v1995
        %v2001 = vmul.f32 1.0, %v2000
        %v2002 = vrcp.pop %v1804
        %v2003 = vmul.f32 %v1804, %v2002
        %v2004 = vsub.f32 1.0, %v2003
        %v2005 = vmul.f32 %v2002, %v2004
        %v2006 = vadd.f32 %v2002, %v2005
        %vm2007 = vweird.f32 %v1804
        %vm2008 = vweird.f32 %v2002
        %vm2009 = vmor %vm2007, %vm2008
        %v2010 = vsel %vm2009, %v2002, %v2006
        %v2011 = vand.u32 2147483647, %v1804
        %vm2012 = vcmp.eq.f32.partialorder %v2011, 8.507059e+37
        %v2013 = vand.u32 %v1804, 2147483648
        %v2014 = vor.u32 1.1754944e-38, %v2013
        %v2015 = vsel %vm2012, %v2014, %v2010
        %v2016 = vmul.f32 1.0, %v2015
        %v2017 = vrcp.pop %v1805
        %v2018 = vmul.f32 %v1805, %v2017
        %v2019 = vsub.f32 1.0, %v2018
        %v2020 = vmul.f32 %v2017, %v2019
        %v2021 = vadd.f32 %v2017, %v2020
        %vm2022 = vweird.f32 %v1805
        %vm2023 = vweird.f32 %v2017
        %vm2024 = vmor %vm2022, %vm2023
        %v2025 = vsel %vm2024, %v2017, %v2021
        %v2026 = vand.u32 2147483647, %v1805
        %vm2027 = vcmp.eq.f32.partialorder %v2026, 8.507059e+37
        %v2028 = vand.u32 %v1805, 2147483648
        %v2029 = vor.u32 1.1754944e-38, %v2028
        %v2030 = vsel %vm2027, %v2029, %v2025
        %v2031 = vmul.f32 1.0, %v2030
        %v2032 = vrcp.pop %v1806
        %v2033 = vmul.f32 %v1806, %v2032
        %v2034 = vsub.f32 1.0, %v2033
        %v2035 = vmul.f32 %v2032, %v2034
        %v2036 = vadd.f32 %v2032, %v2035
        %vm2037 = vweird.f32 %v1806
        %vm2038 = vweird.f32 %v2032
        %vm2039 = vmor %vm2037, %vm2038
        %v2040 = vsel %vm2039, %v2032, %v2036
        %v2041 = vand.u32 2147483647, %v1806
        %vm2042 = vcmp.eq.f32.partialorder %v2041, 8.507059e+37
        %v2043 = vand.u32 %v1806, 2147483648
        %v2044 = vor.u32 1.1754944e-38, %v2043
        %v2045 = vsel %vm2042, %v2044, %v2040
        %v2046 = vmul.f32 1.0, %v2045
        %v2047 = vmul.f32 %v1821, %v1275
        %v2048 = vmul.f32 %v1836, %v1276
        %v2049 = vmul.f32 %v1851, %v1277
        %v2050 = vmul.f32 %v1866, %v1278
        %v2051 = vmul.f32 %v1881, %v1279
        %v2052 = vmul.f32 %v1896, %v1280
        %v2053 = vmul.f32 %v1911, %v1281
        %v2054 = vmul.f32 %v1926, %v1282
        %v2055 = vmul.f32 %v1941, %v1283
        %v2056 = vmul.f32 %v1956, %v1284
        %v2057 = vmul.f32 %v1971, %v1285
        %v2058 = vmul.f32 %v1986, %v1286
        %v2059 = vmul.f32 %v2001, %v1287
        %v2060 = vmul.f32 %v2016, %v1288
        %v2061 = vmul.f32 %v2031, %v1289
        %v2062 = vmul.f32 %v2046, %v1290
        %2079 = vrot.lane.b32.xlu0 %v1821, 32
        %v2080 = vpop.permute.xlu0 %2079
        %2081 = vrot.lane.b32.xlu0 %v1836, 32
        %v2082 = vpop.permute.xlu0 %2081
        %2083 = vrot.lane.b32.xlu0 %v1851, 32
        %v2084 = vpop.permute.xlu0 %2083
        %2085 = vrot.lane.b32.xlu0 %v1866, 32
        %v2086 = vpop.permute.xlu0 %2085
        %2087 = vrot.lane.b32.xlu0 %v1881, 32
        %v2088 = vpop.permute.xlu0 %2087
        %2089 = vrot.lane.b32.xlu0 %v1896, 32
        %v2090 = vpop.permute.xlu0 %2089
        %2091 = vrot.lane.b32.xlu0 %v1911, 32
        %v2092 = vpop.permute.xlu0 %2091
        %2093 = vrot.lane.b32.xlu0 %v1926, 32
        %v2094 = vpop.permute.xlu0 %2093
        %2095 = vrot.lane.b32.xlu0 %v1941, 32
        %v2096 = vpop.permute.xlu0 %2095
        %2097 = vrot.lane.b32.xlu0 %v1956, 32
        %v2098 = vpop.permute.xlu0 %2097
        %2099 = vrot.lane.b32.xlu0 %v1971, 32
        %v2100 = vpop.permute.xlu0 %2099
        %2101 = vrot.lane.b32.xlu0 %v1986, 32
        %v2102 = vpop.permute.xlu0 %2101
        %2103 = vrot.lane.b32.xlu0 %v2001, 32
        %v2104 = vpop.permute.xlu0 %2103
        %2105 = vrot.lane.b32.xlu0 %v2016, 32
        %v2106 = vpop.permute.xlu0 %2105
        %2107 = vrot.lane.b32.xlu0 %v2031, 32
        %v2108 = vpop.permute.xlu0 %2107
        %2109 = vrot.lane.b32.xlu0 %v2046, 32
        %v2110 = vpop.permute.xlu0 %2109
        %v2127 = vmul.f32 %v1821, %v2080
        %v2128 = vmul.f32 %v1836, %v2082
        %v2129 = vmul.f32 %v1851, %v2084
        %v2130 = vmul.f32 %v1866, %v2086
        %v2131 = vmul.f32 %v1881, %v2088
        %v2132 = vmul.f32 %v1896, %v2090
        %v2133 = vmul.f32 %v1911, %v2092
        %v2134 = vmul.f32 %v1926, %v2094
        %v2135 = vmul.f32 %v1941, %v2096
        %v2136 = vmul.f32 %v1956, %v2098
        %v2137 = vmul.f32 %v1971, %v2100
        %v2138 = vmul.f32 %v1986, %v2102
        %v2139 = vmul.f32 %v2001, %v2104
        %v2140 = vmul.f32 %v2016, %v2106
        %v2141 = vmul.f32 %v2031, %v2108
        %v2142 = vmul.f32 %v2046, %v2110
        %2159 = vrot.lane.b32.xlu0 %v2127, 64
        %v2160 = vpop.permute.xlu0 %2159
        %2161 = vrot.lane.b32.xlu0 %v2128, 64
        %v2162 = vpop.permute.xlu0 %2161
        %2163 = vrot.lane.b32.xlu0 %v2129, 64
        %v2164 = vpop.permute.xlu0 %2163
        %2165 = vrot.lane.b32.xlu0 %v2130, 64
        %v2166 = vpop.permute.xlu0 %2165
        %2167 = vrot.lane.b32.xlu0 %v2131, 64
        %v2168 = vpop.permute.xlu0 %2167
        %2169 = vrot.lane.b32.xlu0 %v2132, 64
        %v2170 = vpop.permute.xlu0 %2169
        %2171 = vrot.lane.b32.xlu0 %v2133, 64
        %v2172 = vpop.permute.xlu0 %2171
        %2173 = vrot.lane.b32.xlu0 %v2134, 64
        %v2174 = vpop.permute.xlu0 %2173
        %2175 = vrot.lane.b32.xlu0 %v2135, 64
        %v2176 = vpop.permute.xlu0 %2175
        %2177 = vrot.lane.b32.xlu0 %v2136, 64
        %v2178 = vpop.permute.xlu0 %2177
        %2179 = vrot.lane.b32.xlu0 %v2137, 64
        %v2180 = vpop.permute.xlu0 %2179
        %2181 = vrot.lane.b32.xlu0 %v2138, 64
        %v2182 = vpop.permute.xlu0 %2181
        %2183 = vrot.lane.b32.xlu0 %v2139, 64
        %v2184 = vpop.permute.xlu0 %2183
        %2185 = vrot.lane.b32.xlu0 %v2140, 64
        %v2186 = vpop.permute.xlu0 %2185
        %2187 = vrot.lane.b32.xlu0 %v2141, 64
        %v2188 = vpop.permute.xlu0 %2187
        %2189 = vrot.lane.b32.xlu0 %v2142, 64
        %v2190 = vpop.permute.xlu0 %2189
        %v2207 = vadd.f32 %v2047, %v2160
        %v2208 = vadd.f32 %v2048, %v2162
        %v2209 = vadd.f32 %v2049, %v2164
        %v2210 = vadd.f32 %v2050, %v2166
        %v2211 = vadd.f32 %v2051, %v2168
        %v2212 = vadd.f32 %v2052, %v2170
        %v2213 = vadd.f32 %v2053, %v2172
        %v2214 = vadd.f32 %v2054, %v2174
        %v2215 = vadd.f32 %v2055, %v2176
        %v2216 = vadd.f32 %v2056, %v2178
        %v2217 = vadd.f32 %v2057, %v2180
        %v2218 = vadd.f32 %v2058, %v2182
        %v2219 = vadd.f32 %v2059, %v2184
        %v2220 = vadd.f32 %v2060, %v2186
        %v2221 = vadd.f32 %v2061, %v2188
        %v2222 = vadd.f32 %v2062, %v2190
        %v2223 = vtanh.pop %v2207
        %v2224 = vtanh.pop %v2208
        %v2225 = vtanh.pop %v2209
        %v2226 = vtanh.pop %v2210
        %v2227 = vtanh.pop %v2211
        %v2228 = vtanh.pop %v2212
        %v2229 = vtanh.pop %v2213
        %v2230 = vtanh.pop %v2214
        %v2231 = vtanh.pop %v2215
        %v2232 = vtanh.pop %v2216
        %v2233 = vtanh.pop %v2217
        %v2234 = vtanh.pop %v2218
        %v2235 = vtanh.pop %v2219
        %v2236 = vtanh.pop %v2220
        %v2237 = vtanh.pop %v2221
        %v2238 = vtanh.pop %v2222
        %2255 = vrot.lane.b32.xlu0 %v2223, 96
        %v2256 = vpop.permute.xlu0 %2255
        %2257 = vrot.lane.b32.xlu0 %v2224, 96
        %v2258 = vpop.permute.xlu0 %2257
        %2259 = vrot.lane.b32.xlu0 %v2225, 96
        %v2260 = vpop.permute.xlu0 %2259
        %2261 = vrot.lane.b32.xlu0 %v2226, 96
        %v2262 = vpop.permute.xlu0 %2261
        %2263 = vrot.lane.b32.xlu0 %v2227, 96
        %v2264 = vpop.permute.xlu0 %2263
        %2265 = vrot.lane.b32.xlu0 %v2228, 96
        %v2266 = vpop.permute.xlu0 %2265
        %2267 = vrot.lane.b32.xlu0 %v2229, 96
        %v2268 = vpop.permute.xlu0 %2267
        %2269 = vrot.lane.b32.xlu0 %v2230, 96
        %v2270 = vpop.permute.xlu0 %2269
        %2271 = vrot.lane.b32.xlu0 %v2231, 96
        %v2272 = vpop.permute.xlu0 %2271
        %2273 = vrot.lane.b32.xlu0 %v2232, 96
        %v2274 = vpop.permute.xlu0 %2273
        %2275 = vrot.lane.b32.xlu0 %v2233, 96
        %v2276 = vpop.permute.xlu0 %2275
        %2277 = vrot.lane.b32.xlu0 %v2234, 96
        %v2278 = vpop.permute.xlu0 %2277
        %2279 = vrot.lane.b32.xlu0 %v2235, 96
        %v2280 = vpop.permute.xlu0 %2279
        %2281 = vrot.lane.b32.xlu0 %v2236, 96
        %v2282 = vpop.permute.xlu0 %2281
        %2283 = vrot.lane.b32.xlu0 %v2237, 96
        %v2284 = vpop.permute.xlu0 %2283
        %2285 = vrot.lane.b32.xlu0 %v2238, 96
        %v2286 = vpop.permute.xlu0 %2285
        %v2303 = vmul.f32 %v1821, %v2256
        %v2304 = vmul.f32 %v1836, %v2258
        %v2305 = vmul.f32 %v1851, %v2260
        %v2306 = vmul.f32 %v1866, %v2262
        %v2307 = vmul.f32 %v1881, %v2264
        %v2308 = vmul.f32 %v1896, %v2266
        %v2309 = vmul.f32 %v1911, %v2268
        %v2310 = vmul.f32 %v1926, %v2270
        %v2311 = vmul.f32 %v1941, %v2272
        %v2312 = vmul.f32 %v1956, %v2274
        %v2313 = vmul.f32 %v1971, %v2276
        %v2314 = vmul.f32 %v1986, %v2278
        %v2315 = vmul.f32 %v2001, %v2280
        %v2316 = vmul.f32 %v2016, %v2282
        %v2317 = vmul.f32 %v2031, %v2284
        %v2318 = vmul.f32 %v2046, %v2286
        %2335 = vrot.lane.b32.xlu0 %v2303, 96
        %v2336 = vpop.permute.xlu0 %2335
        %2337 = vrot.lane.b32.xlu0 %v2304, 96
        %v2338 = vpop.permute.xlu0 %2337
        %2339 = vrot.lane.b32.xlu0 %v2305, 96
        %v2340 = vpop.permute.xlu0 %2339
        %2341 = vrot.lane.b32.xlu0 %v2306, 96
        %v2342 = vpop.permute.xlu0 %2341
        %2343 = vrot.lane.b32.xlu0 %v2307, 96
        %v2344 = vpop.permute.xlu0 %2343
        %2345 = vrot.lane.b32.xlu0 %v2308, 96
        %v2346 = vpop.permute.xlu0 %2345
        %2347 = vrot.lane.b32.xlu0 %v2309, 96
        %v2348 = vpop.permute.xlu0 %2347
        %2349 = vrot.lane.b32.xlu0 %v2310, 96
        %v2350 = vpop.permute.xlu0 %2349
        %2351 = vrot.lane.b32.xlu0 %v2311, 96
        %v2352 = vpop.permute.xlu0 %2351
        %2353 = vrot.lane.b32.xlu0 %v2312, 96
        %v2354 = vpop.permute.xlu0 %2353
        %2355 = vrot.lane.b32.xlu0 %v2313, 96
        %v2356 = vpop.permute.xlu0 %2355
        %2357 = vrot.lane.b32.xlu0 %v2314, 96
        %v2358 = vpop.permute.xlu0 %2357
        %2359 = vrot.lane.b32.xlu0 %v2315, 96
        %v2360 = vpop.permute.xlu0 %2359
        %2361 = vrot.lane.b32.xlu0 %v2316, 96
        %v2362 = vpop.permute.xlu0 %2361
        %2363 = vrot.lane.b32.xlu0 %v2317, 96
        %v2364 = vpop.permute.xlu0 %2363
        %2365 = vrot.lane.b32.xlu0 %v2318, 96
        %v2366 = vpop.permute.xlu0 %2365
        %v2367 = vsel %vm483, %v2336, 0
        %v2369 = vsel %vm483, %v2338, 0
        %v2371 = vsel %vm483, %v2340, 0
        %v2373 = vsel %vm483, %v2342, 0
        %v2375 = vsel %vm483, %v2344, 0
        %v2377 = vsel %vm483, %v2346, 0
        %v2379 = vsel %vm483, %v2348, 0
        %v2381 = vsel %vm483, %v2350, 0
        %v2383 = vsel %vm483, %v2352, 0
        %v2385 = vsel %vm483, %v2354, 0
        %v2387 = vsel %vm483, %v2356, 0
        %v2389 = vsel %vm483, %v2358, 0
        %v2391 = vsel %vm483, %v2360, 0
        %v2393 = vsel %vm483, %v2362, 0
        %v2395 = vsel %vm483, %v2364, 0
        %v2397 = vsel %vm483, %v2366, 0
        %2399 = vmatpush.msra.mxu0 0.0
        %2400 = vmatpush.msra.mxu0 0.0
        %2401 = vmatpush.msra.mxu0 0.0
        %2402 = vmatpush.msra.mxu0 0.0
        %2403 = vmatpush.msra.mxu0 0.0
        %2404 = vmatpush.msra.mxu0 0.0
        %2405 = vmatpush.msra.mxu0 0.0
        %2406 = vmatpush.msra.mxu0 0.0
        %2407 = vmatpush.msra.mxu0 0.0
        %2408 = vmatpush.msra.mxu0 0.0
        %2409 = vmatpush.msra.mxu0 0.0
        %2410 = vmatpush.msra.mxu0 0.0
        %2411 = vmatpush.msra.mxu0 %v481
        %2412 = vmatpush.msra.mxu0 %v479
        %2413 = vmatpush.msra.mxu0 %v477
        %2414 = vmatpush.msra.mxu0 %v475
        %2415 = vmatmul.f32.gmra.mxu0 %v2367
        %v2416 = vpop.f32.mrf.mxu0
        %v2417 = vadd.f32 0.0, %v2416
        %2418 = vmatmul.f32.gmra.mxu0 %v2369
        %v2419 = vpop.f32.mrf.mxu0
        %v2420 = vadd.f32 0.0, %v2419
        %2421 = vmatmul.f32.gmra.mxu0 %v2371
        %v2422 = vpop.f32.mrf.mxu0
        %v2423 = vadd.f32 0.0, %v2422
        %2424 = vmatmul.f32.gmra.mxu0 %v2373
        %v2425 = vpop.f32.mrf.mxu0
        %v2426 = vadd.f32 0.0, %v2425
        %2427 = vmatmul.f32.gmra.mxu0 %v2375
        %v2428 = vpop.f32.mrf.mxu0
        %v2429 = vadd.f32 0.0, %v2428
        %2430 = vmatmul.f32.gmra.mxu0 %v2377
        %v2431 = vpop.f32.mrf.mxu0
        %v2432 = vadd.f32 0.0, %v2431
        %2433 = vmatmul.f32.gmra.mxu0 %v2379
        %v2434 = vpop.f32.mrf.mxu0
        %v2435 = vadd.f32 0.0, %v2434
        %2436 = vmatmul.f32.gmra.mxu0 %v2381
        %v2437 = vpop.f32.mrf.mxu0
        %v2438 = vadd.f32 0.0, %v2437
        %2439 = vmatmul.f32.gmra.mxu0 %v2383
        %v2440 = vpop.f32.mrf.mxu0
        %v2441 = vadd.f32 0.0, %v2440
        %2442 = vmatmul.f32.gmra.mxu0 %v2385
        %v2443 = vpop.f32.mrf.mxu0
        %v2444 = vadd.f32 0.0, %v2443
        %2445 = vmatmul.f32.gmra.mxu0 %v2387
        %v2446 = vpop.f32.mrf.mxu0
        %v2447 = vadd.f32 0.0, %v2446
        %2448 = vmatmul.f32.gmra.mxu0 %v2389
        %v2449 = vpop.f32.mrf.mxu0
        %v2450 = vadd.f32 0.0, %v2449
        %2451 = vmatmul.f32.gmra.mxu0 %v2391
        %v2452 = vpop.f32.mrf.mxu0
        %v2453 = vadd.f32 0.0, %v2452
        %2454 = vmatmul.f32.gmra.mxu0 %v2393
        %v2455 = vpop.f32.mrf.mxu0
        %v2456 = vadd.f32 0.0, %v2455
        %2457 = vmatmul.f32.gmra.mxu0 %v2395
        %v2458 = vpop.f32.mrf.mxu0
        %v2459 = vadd.f32 0.0, %v2458
        %2460 = vmatmul.f32.gmra.mxu0 %v2397
        %v2461 = vpop.f32.mrf.mxu0
        %v2462 = vadd.f32 0.0, %v2461
        %2463 = vdwg.mxu0
        %2464 = vmatpush.msra.mxu0 0.0
        %2465 = vmatpush.msra.mxu0 0.0
        %2466 = vmatpush.msra.mxu0 0.0
        %2467 = vmatpush.msra.mxu0 0.0
        %2468 = vmatpush.msra.mxu0 0.0
        %2469 = vmatpush.msra.mxu0 0.0
        %2470 = vmatpush.msra.mxu0 0.0
        %2471 = vmatpush.msra.mxu0 0.0
        %2472 = vmatpush.msra.mxu0 0.0
        %2473 = vmatpush.msra.mxu0 0.0
        %2474 = vmatpush.msra.mxu0 0.0
        %2475 = vmatpush.msra.mxu0 0.0
        %2476 = vmatpush.msra.mxu0 %v482
        %2477 = vmatpush.msra.mxu0 %v480
        %2478 = vmatpush.msra.mxu0 %v478
        %2479 = vmatpush.msra.mxu0 %v476
        %2480 = vmatmul.f32.gmra.mxu0 %v2367
        %v2481 = vpop.f32.mrf.mxu0
        %v2482 = vadd.f32 0.0, %v2481
        %2483 = vmatmul.f32.gmra.mxu0 %v2369
        %v2484 = vpop.f32.mrf.mxu0
        %v2485 = vadd.f32 0.0, %v2484
        %2486 = vmatmul.f32.gmra.mxu0 %v2371
        %v2487 = vpop.f32.mrf.mxu0
        %v2488 = vadd.f32 0.0, %v2487
        %2489 = vmatmul.f32.gmra.mxu0 %v2373
        %v2490 = vpop.f32.mrf.mxu0
        %v2491 = vadd.f32 0.0, %v2490
        %2492 = vmatmul.f32.gmra.mxu0 %v2375
        %v2493 = vpop.f32.mrf.mxu0
        %v2494 = vadd.f32 0.0, %v2493
        %2495 = vmatmul.f32.gmra.mxu0 %v2377
        %v2496 = vpop.f32.mrf.mxu0
        %v2497 = vadd.f32 0.0, %v2496
        %2498 = vmatmul.f32.gmra.mxu0 %v2379
        %v2499 = vpop.f32.mrf.mxu0
        %v2500 = vadd.f32 0.0, %v2499
        %2501 = vmatmul.f32.gmra.mxu0 %v2381
        %v2502 = vpop.f32.mrf.mxu0
        %v2503 = vadd.f32 0.0, %v2502
        %2504 = vmatmul.f32.gmra.mxu0 %v2383
        %v2505 = vpop.f32.mrf.mxu0
        %v2506 = vadd.f32 0.0, %v2505
        %2507 = vmatmul.f32.gmra.mxu0 %v2385
        %v2508 = vpop.f32.mrf.mxu0
        %v2509 = vadd.f32 0.0, %v2508
        %2510 = vmatmul.f32.gmra.mxu0 %v2387
        %v2511 = vpop.f32.mrf.mxu0
        %v2512 = vadd.f32 0.0, %v2511
        %2513 = vmatmul.f32.gmra.mxu0 %v2389
        %v2514 = vpop.f32.mrf.mxu0
        %v2515 = vadd.f32 0.0, %v2514
        %2516 = vmatmul.f32.gmra.mxu0 %v2391
        %v2517 = vpop.f32.mrf.mxu0
        %v2518 = vadd.f32 0.0, %v2517
        %2519 = vmatmul.f32.gmra.mxu0 %v2393
        %v2520 = vpop.f32.mrf.mxu0
        %v2521 = vadd.f32 0.0, %v2520
        %2522 = vmatmul.f32.gmra.mxu0 %v2395
        %v2523 = vpop.f32.mrf.mxu0
        %v2524 = vadd.f32 0.0, %v2523
        %2525 = vmatmul.f32.gmra.mxu0 %v2397
        %v2526 = vpop.f32.mrf.mxu0
        %v2527 = vadd.f32 0.0, %v2526
        %2528 = vdwg.mxu0
        %2529 = vmatpush.msra.mxu0 %v2527
        %2530 = vmatpush.msra.mxu0 %v2524
        %2531 = vmatpush.msra.mxu0 %v2521
        %2532 = vmatpush.msra.mxu0 %v2518
        %2533 = vmatpush.msra.mxu0 %v2515
        %2534 = vmatpush.msra.mxu0 %v2512
        %2535 = vmatpush.msra.mxu0 %v2509
        %2536 = vmatpush.msra.mxu0 %v2506
        %2537 = vmatpush.msra.mxu0 %v2503
        %2538 = vmatpush.msra.mxu0 %v2500
        %2539 = vmatpush.msra.mxu0 %v2497
        %2540 = vmatpush.msra.mxu0 %v2494
        %2541 = vmatpush.msra.mxu0 %v2491
        %2542 = vmatpush.msra.mxu0 %v2488
        %2543 = vmatpush.msra.mxu0 %v2485
        %2544 = vmatpush.msra.mxu0 %v2482
        %2545 = vmatmul.f32.gmra.mxu0 %v633
        %v2546 = vpop.f32.mrf.mxu0
        %v2547 = vadd.f32 0.0, %v2546
        %2548 = vmatmul.f32.gmra.mxu0 %v634
        %v2549 = vpop.f32.mrf.mxu0
        %v2550 = vadd.f32 0.0, %v2549
        %2551 = vmatmul.f32.gmra.mxu0 %v635
        %v2552 = vpop.f32.mrf.mxu0
        %v2553 = vadd.f32 0.0, %v2552
        %2554 = vmatmul.f32.gmra.mxu0 %v636
        %v2555 = vpop.f32.mrf.mxu0
        %v2556 = vadd.f32 0.0, %v2555
        %2557 = vmatmul.f32.gmra.mxu0 %v637
        %v2558 = vpop.f32.mrf.mxu0
        %v2559 = vadd.f32 0.0, %v2558
        %2560 = vmatmul.f32.gmra.mxu0 %v638
        %v2561 = vpop.f32.mrf.mxu0
        %v2562 = vadd.f32 0.0, %v2561
        %2563 = vmatmul.f32.gmra.mxu0 %v639
        %v2564 = vpop.f32.mrf.mxu0
        %v2565 = vadd.f32 0.0, %v2564
        %2566 = vmatmul.f32.gmra.mxu0 %v640
        %v2567 = vpop.f32.mrf.mxu0
        %v2568 = vadd.f32 0.0, %v2567
        %2569 = vmatmul.f32.gmra.mxu0 %v641
        %v2570 = vpop.f32.mrf.mxu0
        %v2571 = vadd.f32 0.0, %v2570
        %2572 = vmatmul.f32.gmra.mxu0 %v642
        %v2573 = vpop.f32.mrf.mxu0
        %v2574 = vadd.f32 0.0, %v2573
        %2575 = vmatmul.f32.gmra.mxu0 %v643
        %v2576 = vpop.f32.mrf.mxu0
        %v2577 = vadd.f32 0.0, %v2576
        %2578 = vmatmul.f32.gmra.mxu0 %v644
        %v2579 = vpop.f32.mrf.mxu0
        %v2580 = vadd.f32 0.0, %v2579
        %2581 = vmatmul.f32.gmra.mxu0 %v645
        %v2582 = vpop.f32.mrf.mxu0
        %v2583 = vadd.f32 0.0, %v2582
        %2584 = vmatmul.f32.gmra.mxu0 %v646
        %v2585 = vpop.f32.mrf.mxu0
        %v2586 = vadd.f32 0.0, %v2585
        %2587 = vmatmul.f32.gmra.mxu0 %v647
        %v2588 = vpop.f32.mrf.mxu0
        %v2589 = vadd.f32 0.0, %v2588
        %2590 = vmatmul.f32.gmra.mxu0 %v648
        %v2591 = vpop.f32.mrf.mxu0
        %v2592 = vadd.f32 0.0, %v2591
        %2593 = vdwg.mxu0
        %2594 = vmatpush.msra.mxu0 %v2462
        %2595 = vmatpush.msra.mxu0 %v2459
        %2596 = vmatpush.msra.mxu0 %v2456
        %2597 = vmatpush.msra.mxu0 %v2453
        %2598 = vmatpush.msra.mxu0 %v2450
        %2599 = vmatpush.msra.mxu0 %v2447
        %2600 = vmatpush.msra.mxu0 %v2444
        %2601 = vmatpush.msra.mxu0 %v2441
        %2602 = vmatpush.msra.mxu0 %v2438
        %2603 = vmatpush.msra.mxu0 %v2435
        %2604 = vmatpush.msra.mxu0 %v2432
        %2605 = vmatpush.msra.mxu0 %v2429
        %2606 = vmatpush.msra.mxu0 %v2426
        %2607 = vmatpush.msra.mxu0 %v2423
        %2608 = vmatpush.msra.mxu0 %v2420
        %2609 = vmatpush.msra.mxu0 %v2417
        %2610 = vmatmul.f32.gmra.mxu0 %v617
        %v2611 = vpop.f32.mrf.mxu0
        %v2612 = vadd.f32 %v2547, %v2611
        %2613 = vmatmul.f32.gmra.mxu0 %v618
        %v2614 = vpop.f32.mrf.mxu0
        %v2615 = vadd.f32 %v2550, %v2614
        %2616 = vmatmul.f32.gmra.mxu0 %v619
        %v2617 = vpop.f32.mrf.mxu0
        %v2618 = vadd.f32 %v2553, %v2617
        %2619 = vmatmul.f32.gmra.mxu0 %v620
        %v2620 = vpop.f32.mrf.mxu0
        %v2621 = vadd.f32 %v2556, %v2620
        %2622 = vmatmul.f32.gmra.mxu0 %v621
        %v2623 = vpop.f32.mrf.mxu0
        %v2624 = vadd.f32 %v2559, %v2623
        %2625 = vmatmul.f32.gmra.mxu0 %v622
        %v2626 = vpop.f32.mrf.mxu0
        %v2627 = vadd.f32 %v2562, %v2626
        %2628 = vmatmul.f32.gmra.mxu0 %v623
        %v2629 = vpop.f32.mrf.mxu0
        %v2630 = vadd.f32 %v2565, %v2629
        %2631 = vmatmul.f32.gmra.mxu0 %v624
        %v2632 = vpop.f32.mrf.mxu0
        %v2633 = vadd.f32 %v2568, %v2632
        %2634 = vmatmul.f32.gmra.mxu0 %v625
        %v2635 = vpop.f32.mrf.mxu0
        %v2636 = vadd.f32 %v2571, %v2635
        %2637 = vmatmul.f32.gmra.mxu0 %v626
        %v2638 = vpop.f32.mrf.mxu0
        %v2639 = vadd.f32 %v2574, %v2638
        %2640 = vmatmul.f32.gmra.mxu0 %v627
        %v2641 = vpop.f32.mrf.mxu0
        %v2642 = vadd.f32 %v2577, %v2641
        %2643 = vmatmul.f32.gmra.mxu0 %v628
        %v2644 = vpop.f32.mrf.mxu0
        %v2645 = vadd.f32 %v2580, %v2644
        %2646 = vmatmul.f32.gmra.mxu0 %v629
        %v2647 = vpop.f32.mrf.mxu0
        %v2648 = vadd.f32 %v2583, %v2647
        %2649 = vmatmul.f32.gmra.mxu0 %v630
        %v2650 = vpop.f32.mrf.mxu0
        %v2651 = vadd.f32 %v2586, %v2650
        %2652 = vmatmul.f32.gmra.mxu0 %v631
        %v2653 = vpop.f32.mrf.mxu0
        %v2654 = vadd.f32 %v2589, %v2653
        %2655 = vmatmul.f32.gmra.mxu0 %v632
        %v2656 = vpop.f32.mrf.mxu0
        %v2657 = vadd.f32 %v2592, %v2656
        %2658 = vdwg.mxu0
        %v2659 = vadd.f32 %v779, %v2612
        %v2660 = vadd.f32 %v780, %v2615
        %v2661 = vadd.f32 %v781, %v2618
        %v2662 = vadd.f32 %v782, %v2621
        %v2663 = vadd.f32 %v783, %v2624
        %v2664 = vadd.f32 %v784, %v2627
        %v2665 = vadd.f32 %v785, %v2630
        %v2666 = vadd.f32 %v786, %v2633
        %v2667 = vadd.f32 %v787, %v2636
        %v2668 = vadd.f32 %v788, %v2639
        %v2669 = vadd.f32 %v789, %v2642
        %v2670 = vadd.f32 %v790, %v2645
        %v2671 = vadd.f32 %v791, %v2648
        %v2672 = vadd.f32 %v792, %v2651
        %v2673 = vadd.f32 %v793, %v2654
        %v2674 = vadd.f32 %v794, %v2657
        %v2675 = vxor.u32 %v2659, 2147483648
        %v2676 = vxor.u32 %v2660, 2147483648
        %v2677 = vxor.u32 %v2661, 2147483648
        %v2678 = vxor.u32 %v2662, 2147483648
        %v2679 = vxor.u32 %v2663, 2147483648
        %v2680 = vxor.u32 %v2664, 2147483648
        %v2681 = vxor.u32 %v2665, 2147483648
        %v2682 = vxor.u32 %v2666, 2147483648
        %v2683 = vxor.u32 %v2667, 2147483648
        %v2684 = vxor.u32 %v2668, 2147483648
        %v2685 = vxor.u32 %v2669, 2147483648
        %v2686 = vxor.u32 %v2670, 2147483648
        %v2687 = vxor.u32 %v2671, 2147483648
        %v2688 = vxor.u32 %v2672, 2147483648
        %v2689 = vxor.u32 %v2673, 2147483648
        %v2690 = vxor.u32 %v2674, 2147483648
        %v2691 = vmul.f32 %v2675, 1.442695
        %v2692 = vpow.pop %v2691
        %v2693 = vmul.f32 %v2676, 1.442695
        %v2694 = vpow.pop %v2693
        %v2695 = vmul.f32 %v2677, 1.442695
        %v2696 = vpow.pop %v2695
        %v2697 = vmul.f32 %v2678, 1.442695
        %v2698 = vpow.pop %v2697
        %v2699 = vmul.f32 %v2679, 1.442695
        %v2700 = vpow.pop %v2699
        %v2701 = vmul.f32 %v2680, 1.442695
        %v2702 = vpow.pop %v2701
        %v2703 = vmul.f32 %v2681, 1.442695
        %v2704 = vpow.pop %v2703
        %v2705 = vmul.f32 %v2682, 1.442695
        %v2706 = vpow.pop %v2705
        %v2707 = vmul.f32 %v2683, 1.442695
        %v2708 = vpow.pop %v2707
        %v2709 = vmul.f32 %v2684, 1.442695
        %v2710 = vpow.pop %v2709
        %v2711 = vmul.f32 %v2685, 1.442695
        %v2712 = vpow.pop %v2711
        %v2713 = vmul.f32 %v2686, 1.442695
        %v2714 = vpow.pop %v2713
        %v2715 = vmul.f32 %v2687, 1.442695
        %v2716 = vpow.pop %v2715
        %v2717 = vmul.f32 %v2688, 1.442695
        %v2718 = vpow.pop %v2717
        %v2719 = vmul.f32 %v2689, 1.442695
        %v2720 = vpow.pop %v2719
        %v2721 = vmul.f32 %v2690, 1.442695
        %v2722 = vpow.pop %v2721
        %v2723 = vadd.f32 %v2692, 1.0
        %v2724 = vadd.f32 %v2694, 1.0
        %v2725 = vadd.f32 %v2696, 1.0
        %v2726 = vadd.f32 %v2698, 1.0
        %v2727 = vadd.f32 %v2700, 1.0
        %v2728 = vadd.f32 %v2702, 1.0
        %v2729 = vadd.f32 %v2704, 1.0
        %v2730 = vadd.f32 %v2706, 1.0
        %v2731 = vadd.f32 %v2708, 1.0
        %v2732 = vadd.f32 %v2710, 1.0
        %v2733 = vadd.f32 %v2712, 1.0
        %v2734 = vadd.f32 %v2714, 1.0
        %v2735 = vadd.f32 %v2716, 1.0
        %v2736 = vadd.f32 %v2718, 1.0
        %v2737 = vadd.f32 %v2720, 1.0
        %v2738 = vadd.f32 %v2722, 1.0
        %v2739 = vrcp.pop %v2723
        %v2740 = vmul.f32 %v2723, %v2739
        %v2741 = vsub.f32 1.0, %v2740
        %v2742 = vmul.f32 %v2739, %v2741
        %v2743 = vadd.f32 %v2739, %v2742
        %vm2744 = vweird.f32 %v2723
        %vm2745 = vweird.f32 %v2739
        %vm2746 = vmor %vm2744, %vm2745
        %v2747 = vsel %vm2746, %v2739, %v2743
        %v2748 = vand.u32 2147483647, %v2723
        %vm2749 = vcmp.eq.f32.partialorder %v2748, 8.507059e+37
        %v2750 = vand.u32 %v2723, 2147483648
        %v2751 = vor.u32 1.1754944e-38, %v2750
        %v2752 = vsel %vm2749, %v2751, %v2747
        %v2753 = vmul.f32 1.0, %v2752
        %v2754 = vrcp.pop %v2724
        %v2755 = vmul.f32 %v2724, %v2754
        %v2756 = vsub.f32 1.0, %v2755
        %v2757 = vmul.f32 %v2754, %v2756
        %v2758 = vadd.f32 %v2754, %v2757
        %vm2759 = vweird.f32 %v2724
        %vm2760 = vweird.f32 %v2754
        %vm2761 = vmor %vm2759, %vm2760
        %v2762 = vsel %vm2761, %v2754, %v2758
        %v2763 = vand.u32 2147483647, %v2724
        %vm2764 = vcmp.eq.f32.partialorder %v2763, 8.507059e+37
        %v2765 = vand.u32 %v2724, 2147483648
        %v2766 = vor.u32 1.1754944e-38, %v2765
        %v2767 = vsel %vm2764, %v2766, %v2762
        %v2768 = vmul.f32 1.0, %v2767
        %v2769 = vrcp.pop %v2725
        %v2770 = vmul.f32 %v2725, %v2769
        %v2771 = vsub.f32 1.0, %v2770
        %v2772 = vmul.f32 %v2769, %v2771
        %v2773 = vadd.f32 %v2769, %v2772
        %vm2774 = vweird.f32 %v2725
        %vm2775 = vweird.f32 %v2769
        %vm2776 = vmor %vm2774, %vm2775
        %v2777 = vsel %vm2776, %v2769, %v2773
        %v2778 = vand.u32 2147483647, %v2725
        %vm2779 = vcmp.eq.f32.partialorder %v2778, 8.507059e+37
        %v2780 = vand.u32 %v2725, 2147483648
        %v2781 = vor.u32 1.1754944e-38, %v2780
        %v2782 = vsel %vm2779, %v2781, %v2777
        %v2783 = vmul.f32 1.0, %v2782
        %v2784 = vrcp.pop %v2726
        %v2785 = vmul.f32 %v2726, %v2784
        %v2786 = vsub.f32 1.0, %v2785
        %v2787 = vmul.f32 %v2784, %v2786
        %v2788 = vadd.f32 %v2784, %v2787
        %vm2789 = vweird.f32 %v2726
        %vm2790 = vweird.f32 %v2784
        %vm2791 = vmor %vm2789, %vm2790
        %v2792 = vsel %vm2791, %v2784, %v2788
        %v2793 = vand.u32 2147483647, %v2726
        %vm2794 = vcmp.eq.f32.partialorder %v2793, 8.507059e+37
        %v2795 = vand.u32 %v2726, 2147483648
        %v2796 = vor.u32 1.1754944e-38, %v2795
        %v2797 = vsel %vm2794, %v2796, %v2792
        %v2798 = vmul.f32 1.0, %v2797
        %v2799 = vrcp.pop %v2727
        %v2800 = vmul.f32 %v2727, %v2799
        %v2801 = vsub.f32 1.0, %v2800
        %v2802 = vmul.f32 %v2799, %v2801
        %v2803 = vadd.f32 %v2799, %v2802
        %vm2804 = vweird.f32 %v2727
        %vm2805 = vweird.f32 %v2799
        %vm2806 = vmor %vm2804, %vm2805
        %v2807 = vsel %vm2806, %v2799, %v2803
        %v2808 = vand.u32 2147483647, %v2727
        %vm2809 = vcmp.eq.f32.partialorder %v2808, 8.507059e+37
        %v2810 = vand.u32 %v2727, 2147483648
        %v2811 = vor.u32 1.1754944e-38, %v2810
        %v2812 = vsel %vm2809, %v2811, %v2807
        %v2813 = vmul.f32 1.0, %v2812
        %v2814 = vrcp.pop %v2728
        %v2815 = vmul.f32 %v2728, %v2814
        %v2816 = vsub.f32 1.0, %v2815
        %v2817 = vmul.f32 %v2814, %v2816
        %v2818 = vadd.f32 %v2814, %v2817
        %vm2819 = vweird.f32 %v2728
        %vm2820 = vweird.f32 %v2814
        %vm2821 = vmor %vm2819, %vm2820
        %v2822 = vsel %vm2821, %v2814, %v2818
        %v2823 = vand.u32 2147483647, %v2728
        %vm2824 = vcmp.eq.f32.partialorder %v2823, 8.507059e+37
        %v2825 = vand.u32 %v2728, 2147483648
        %v2826 = vor.u32 1.1754944e-38, %v2825
        %v2827 = vsel %vm2824, %v2826, %v2822
        %v2828 = vmul.f32 1.0, %v2827
        %v2829 = vrcp.pop %v2729
        %v2830 = vmul.f32 %v2729, %v2829
        %v2831 = vsub.f32 1.0, %v2830
        %v2832 = vmul.f32 %v2829, %v2831
        %v2833 = vadd.f32 %v2829, %v2832
        %vm2834 = vweird.f32 %v2729
        %vm2835 = vweird.f32 %v2829
        %vm2836 = vmor %vm2834, %vm2835
        %v2837 = vsel %vm2836, %v2829, %v2833
        %v2838 = vand.u32 2147483647, %v2729
        %vm2839 = vcmp.eq.f32.partialorder %v2838, 8.507059e+37
        %v2840 = vand.u32 %v2729, 2147483648
        %v2841 = vor.u32 1.1754944e-38, %v2840
        %v2842 = vsel %vm2839, %v2841, %v2837
        %v2843 = vmul.f32 1.0, %v2842
        %v2844 = vrcp.pop %v2730
        %v2845 = vmul.f32 %v2730, %v2844
        %v2846 = vsub.f32 1.0, %v2845
        %v2847 = vmul.f32 %v2844, %v2846
        %v2848 = vadd.f32 %v2844, %v2847
        %vm2849 = vweird.f32 %v2730
        %vm2850 = vweird.f32 %v2844
        %vm2851 = vmor %vm2849, %vm2850
        %v2852 = vsel %vm2851, %v2844, %v2848
        %v2853 = vand.u32 2147483647, %v2730
        %vm2854 = vcmp.eq.f32.partialorder %v2853, 8.507059e+37
        %v2855 = vand.u32 %v2730, 2147483648
        %v2856 = vor.u32 1.1754944e-38, %v2855
        %v2857 = vsel %vm2854, %v2856, %v2852
        %v2858 = vmul.f32 1.0, %v2857
        %v2859 = vrcp.pop %v2731
        %v2860 = vmul.f32 %v2731, %v2859
        %v2861 = vsub.f32 1.0, %v2860
        %v2862 = vmul.f32 %v2859, %v2861
        %v2863 = vadd.f32 %v2859, %v2862
        %vm2864 = vweird.f32 %v2731
        %vm2865 = vweird.f32 %v2859
        %vm2866 = vmor %vm2864, %vm2865
        %v2867 = vsel %vm2866, %v2859, %v2863
        %v2868 = vand.u32 2147483647, %v2731
        %vm2869 = vcmp.eq.f32.partialorder %v2868, 8.507059e+37
        %v2870 = vand.u32 %v2731, 2147483648
        %v2871 = vor.u32 1.1754944e-38, %v2870
        %v2872 = vsel %vm2869, %v2871, %v2867
        %v2873 = vmul.f32 1.0, %v2872
        %v2874 = vrcp.pop %v2732
        %v2875 = vmul.f32 %v2732, %v2874
        %v2876 = vsub.f32 1.0, %v2875
        %v2877 = vmul.f32 %v2874, %v2876
        %v2878 = vadd.f32 %v2874, %v2877
        %vm2879 = vweird.f32 %v2732
        %vm2880 = vweird.f32 %v2874
        %vm2881 = vmor %vm2879, %vm2880
        %v2882 = vsel %vm2881, %v2874, %v2878
        %v2883 = vand.u32 2147483647, %v2732
        %vm2884 = vcmp.eq.f32.partialorder %v2883, 8.507059e+37
        %v2885 = vand.u32 %v2732, 2147483648
        %v2886 = vor.u32 1.1754944e-38, %v2885
        %v2887 = vsel %vm2884, %v2886, %v2882
        %v2888 = vmul.f32 1.0, %v2887
        %v2889 = vrcp.pop %v2733
        %v2890 = vmul.f32 %v2733, %v2889
        %v2891 = vsub.f32 1.0, %v2890
        %v2892 = vmul.f32 %v2889, %v2891
        %v2893 = vadd.f32 %v2889, %v2892
        %vm2894 = vweird.f32 %v2733
        %vm2895 = vweird.f32 %v2889
        %vm2896 = vmor %vm2894, %vm2895
        %v2897 = vsel %vm2896, %v2889, %v2893
        %v2898 = vand.u32 2147483647, %v2733
        %vm2899 = vcmp.eq.f32.partialorder %v2898, 8.507059e+37
        %v2900 = vand.u32 %v2733, 2147483648
        %v2901 = vor.u32 1.1754944e-38, %v2900
        %v2902 = vsel %vm2899, %v2901, %v2897
        %v2903 = vmul.f32 1.0, %v2902
        %v2904 = vrcp.pop %v2734
        %v2905 = vmul.f32 %v2734, %v2904
        %v2906 = vsub.f32 1.0, %v2905
        %v2907 = vmul.f32 %v2904, %v2906
        %v2908 = vadd.f32 %v2904, %v2907
        %vm2909 = vweird.f32 %v2734
        %vm2910 = vweird.f32 %v2904
        %vm2911 = vmor %vm2909, %vm2910
        %v2912 = vsel %vm2911, %v2904, %v2908
        %v2913 = vand.u32 2147483647, %v2734
        %vm2914 = vcmp.eq.f32.partialorder %v2913, 8.507059e+37
        %v2915 = vand.u32 %v2734, 2147483648
        %v2916 = vor.u32 1.1754944e-38, %v2915
        %v2917 = vsel %vm2914, %v2916, %v2912
        %v2918 = vmul.f32 1.0, %v2917
        %v2919 = vrcp.pop %v2735
        %v2920 = vmul.f32 %v2735, %v2919
        %v2921 = vsub.f32 1.0, %v2920
        %v2922 = vmul.f32 %v2919, %v2921
        %v2923 = vadd.f32 %v2919, %v2922
        %vm2924 = vweird.f32 %v2735
        %vm2925 = vweird.f32 %v2919
        %vm2926 = vmor %vm2924, %vm2925
        %v2927 = vsel %vm2926, %v2919, %v2923
        %v2928 = vand.u32 2147483647, %v2735
        %vm2929 = vcmp.eq.f32.partialorder %v2928, 8.507059e+37
        %v2930 = vand.u32 %v2735, 2147483648
        %v2931 = vor.u32 1.1754944e-38, %v2930
        %v2932 = vsel %vm2929, %v2931, %v2927
        %v2933 = vmul.f32 1.0, %v2932
        %v2934 = vrcp.pop %v2736
        %v2935 = vmul.f32 %v2736, %v2934
        %v2936 = vsub.f32 1.0, %v2935
        %v2937 = vmul.f32 %v2934, %v2936
        %v2938 = vadd.f32 %v2934, %v2937
        %vm2939 = vweird.f32 %v2736
        %vm2940 = vweird.f32 %v2934
        %vm2941 = vmor %vm2939, %vm2940
        %v2942 = vsel %vm2941, %v2934, %v2938
        %v2943 = vand.u32 2147483647, %v2736
        %vm2944 = vcmp.eq.f32.partialorder %v2943, 8.507059e+37
        %v2945 = vand.u32 %v2736, 2147483648
        %v2946 = vor.u32 1.1754944e-38, %v2945
        %v2947 = vsel %vm2944, %v2946, %v2942
        %v2948 = vmul.f32 1.0, %v2947
        %v2949 = vrcp.pop %v2737
        %v2950 = vmul.f32 %v2737, %v2949
        %v2951 = vsub.f32 1.0, %v2950
        %v2952 = vmul.f32 %v2949, %v2951
        %v2953 = vadd.f32 %v2949, %v2952
        %vm2954 = vweird.f32 %v2737
        %vm2955 = vweird.f32 %v2949
        %vm2956 = vmor %vm2954, %vm2955
        %v2957 = vsel %vm2956, %v2949, %v2953
        %v2958 = vand.u32 2147483647, %v2737
        %vm2959 = vcmp.eq.f32.partialorder %v2958, 8.507059e+37
        %v2960 = vand.u32 %v2737, 2147483648
        %v2961 = vor.u32 1.1754944e-38, %v2960
        %v2962 = vsel %vm2959, %v2961, %v2957
        %v2963 = vmul.f32 1.0, %v2962
        %v2964 = vrcp.pop %v2738
        %v2965 = vmul.f32 %v2738, %v2964
        %v2966 = vsub.f32 1.0, %v2965
        %v2967 = vmul.f32 %v2964, %v2966
        %v2968 = vadd.f32 %v2964, %v2967
        %vm2969 = vweird.f32 %v2738
        %vm2970 = vweird.f32 %v2964
        %vm2971 = vmor %vm2969, %vm2970
        %v2972 = vsel %vm2971, %v2964, %v2968
        %v2973 = vand.u32 2147483647, %v2738
        %vm2974 = vcmp.eq.f32.partialorder %v2973, 8.507059e+37
        %v2975 = vand.u32 %v2738, 2147483648
        %v2976 = vor.u32 1.1754944e-38, %v2975
        %v2977 = vsel %vm2974, %v2976, %v2972
        %v2978 = vmul.f32 1.0, %v2977
        %v2979 = vmul.f32 %v2753, %v2207
        %v2980 = vmul.f32 %v2768, %v2208
        %v2981 = vmul.f32 %v2783, %v2209
        %v2982 = vmul.f32 %v2798, %v2210
        %v2983 = vmul.f32 %v2813, %v2211
        %v2984 = vmul.f32 %v2828, %v2212
        %v2985 = vmul.f32 %v2843, %v2213
        %v2986 = vmul.f32 %v2858, %v2214
        %v2987 = vmul.f32 %v2873, %v2215
        %v2988 = vmul.f32 %v2888, %v2216
        %v2989 = vmul.f32 %v2903, %v2217
        %v2990 = vmul.f32 %v2918, %v2218
        %v2991 = vmul.f32 %v2933, %v2219
        %v2992 = vmul.f32 %v2948, %v2220
        %v2993 = vmul.f32 %v2963, %v2221
        %v2994 = vmul.f32 %v2978, %v2222
        %3011 = vrot.lane.b32.xlu0 %v2753, 32
        %v3012 = vpop.permute.xlu0 %3011
        %3013 = vrot.lane.b32.xlu0 %v2768, 32
        %v3014 = vpop.permute.xlu0 %3013
        %3015 = vrot.lane.b32.xlu0 %v2783, 32
        %v3016 = vpop.permute.xlu0 %3015
        %3017 = vrot.lane.b32.xlu0 %v2798, 32
        %v3018 = vpop.permute.xlu0 %3017
        %3019 = vrot.lane.b32.xlu0 %v2813, 32
        %v3020 = vpop.permute.xlu0 %3019
        %3021 = vrot.lane.b32.xlu0 %v2828, 32
        %v3022 = vpop.permute.xlu0 %3021
        %3023 = vrot.lane.b32.xlu0 %v2843, 32
        %v3024 = vpop.permute.xlu0 %3023
        %3025 = vrot.lane.b32.xlu0 %v2858, 32
        %v3026 = vpop.permute.xlu0 %3025
        %3027 = vrot.lane.b32.xlu0 %v2873, 32
        %v3028 = vpop.permute.xlu0 %3027
        %3029 = vrot.lane.b32.xlu0 %v2888, 32
        %v3030 = vpop.permute.xlu0 %3029
        %3031 = vrot.lane.b32.xlu0 %v2903, 32
        %v3032 = vpop.permute.xlu0 %3031
        %3033 = vrot.lane.b32.xlu0 %v2918, 32
        %v3034 = vpop.permute.xlu0 %3033
        %3035 = vrot.lane.b32.xlu0 %v2933, 32
        %v3036 = vpop.permute.xlu0 %3035
        %3037 = vrot.lane.b32.xlu0 %v2948, 32
        %v3038 = vpop.permute.xlu0 %3037
        %3039 = vrot.lane.b32.xlu0 %v2963, 32
        %v3040 = vpop.permute.xlu0 %3039
        %3041 = vrot.lane.b32.xlu0 %v2978, 32
        %v3042 = vpop.permute.xlu0 %3041
        %v3059 = vmul.f32 %v2753, %v3012
        %v3060 = vmul.f32 %v2768, %v3014
        %v3061 = vmul.f32 %v2783, %v3016
        %v3062 = vmul.f32 %v2798, %v3018
        %v3063 = vmul.f32 %v2813, %v3020
        %v3064 = vmul.f32 %v2828, %v3022
        %v3065 = vmul.f32 %v2843, %v3024
        %v3066 = vmul.f32 %v2858, %v3026
        %v3067 = vmul.f32 %v2873, %v3028
        %v3068 = vmul.f32 %v2888, %v3030
        %v3069 = vmul.f32 %v2903, %v3032
        %v3070 = vmul.f32 %v2918, %v3034
        %v3071 = vmul.f32 %v2933, %v3036
        %v3072 = vmul.f32 %v2948, %v3038
        %v3073 = vmul.f32 %v2963, %v3040
        %v3074 = vmul.f32 %v2978, %v3042
        %3091 = vrot.lane.b32.xlu0 %v3059, 64
        %v3092 = vpop.permute.xlu0 %3091
        %3093 = vrot.lane.b32.xlu0 %v3060, 64
        %v3094 = vpop.permute.xlu0 %3093
        %3095 = vrot.lane.b32.xlu0 %v3061, 64
        %v3096 = vpop.permute.xlu0 %3095
        %3097 = vrot.lane.b32.xlu0 %v3062, 64
        %v3098 = vpop.permute.xlu0 %3097
        %3099 = vrot.lane.b32.xlu0 %v3063, 64
        %v3100 = vpop.permute.xlu0 %3099
        %3101 = vrot.lane.b32.xlu0 %v3064, 64
        %v3102 = vpop.permute.xlu0 %3101
        %3103 = vrot.lane.b32.xlu0 %v3065, 64
        %v3104 = vpop.permute.xlu0 %3103
        %3105 = vrot.lane.b32.xlu0 %v3066, 64
        %v3106 = vpop.permute.xlu0 %3105
        %3107 = vrot.lane.b32.xlu0 %v3067, 64
        %v3108 = vpop.permute.xlu0 %3107
        %3109 = vrot.lane.b32.xlu0 %v3068, 64
        %v3110 = vpop.permute.xlu0 %3109
        %3111 = vrot.lane.b32.xlu0 %v3069, 64
        %v3112 = vpop.permute.xlu0 %3111
        %3113 = vrot.lane.b32.xlu0 %v3070, 64
        %v3114 = vpop.permute.xlu0 %3113
        %3115 = vrot.lane.b32.xlu0 %v3071, 64
        %v3116 = vpop.permute.xlu0 %3115
        %3117 = vrot.lane.b32.xlu0 %v3072, 64
        %v3118 = vpop.permute.xlu0 %3117
        %3119 = vrot.lane.b32.xlu0 %v3073, 64
        %v3120 = vpop.permute.xlu0 %3119
        %3121 = vrot.lane.b32.xlu0 %v3074, 64
        %v3122 = vpop.permute.xlu0 %3121
        %v3139 = vadd.f32 %v2979, %v3092
        %v3140 = vadd.f32 %v2980, %v3094
        %v3141 = vadd.f32 %v2981, %v3096
        %v3142 = vadd.f32 %v2982, %v3098
        %v3143 = vadd.f32 %v2983, %v3100
        %v3144 = vadd.f32 %v2984, %v3102
        %v3145 = vadd.f32 %v2985, %v3104
        %v3146 = vadd.f32 %v2986, %v3106
        %v3147 = vadd.f32 %v2987, %v3108
        %v3148 = vadd.f32 %v2988, %v3110
        %v3149 = vadd.f32 %v2989, %v3112
        %v3150 = vadd.f32 %v2990, %v3114
        %v3151 = vadd.f32 %v2991, %v3116
        %v3152 = vadd.f32 %v2992, %v3118
        %v3153 = vadd.f32 %v2993, %v3120
        %v3154 = vadd.f32 %v2994, %v3122
        %v3155 = vtanh.pop %v3139
        %v3156 = vtanh.pop %v3140
        %v3157 = vtanh.pop %v3141
        %v3158 = vtanh.pop %v3142
        %v3159 = vtanh.pop %v3143
        %v3160 = vtanh.pop %v3144
        %v3161 = vtanh.pop %v3145
        %v3162 = vtanh.pop %v3146
        %v3163 = vtanh.pop %v3147
        %v3164 = vtanh.pop %v3148
        %v3165 = vtanh.pop %v3149
        %v3166 = vtanh.pop %v3150
        %v3167 = vtanh.pop %v3151
        %v3168 = vtanh.pop %v3152
        %v3169 = vtanh.pop %v3153
        %v3170 = vtanh.pop %v3154
        %3187 = vrot.lane.b32.xlu0 %v3155, 96
        %v3188 = vpop.permute.xlu0 %3187
        %3189 = vrot.lane.b32.xlu0 %v3156, 96
        %v3190 = vpop.permute.xlu0 %3189
        %3191 = vrot.lane.b32.xlu0 %v3157, 96
        %v3192 = vpop.permute.xlu0 %3191
        %3193 = vrot.lane.b32.xlu0 %v3158, 96
        %v3194 = vpop.permute.xlu0 %3193
        %3195 = vrot.lane.b32.xlu0 %v3159, 96
        %v3196 = vpop.permute.xlu0 %3195
        %3197 = vrot.lane.b32.xlu0 %v3160, 96
        %v3198 = vpop.permute.xlu0 %3197
        %3199 = vrot.lane.b32.xlu0 %v3161, 96
        %v3200 = vpop.permute.xlu0 %3199
        %3201 = vrot.lane.b32.xlu0 %v3162, 96
        %v3202 = vpop.permute.xlu0 %3201
        %3203 = vrot.lane.b32.xlu0 %v3163, 96
        %v3204 = vpop.permute.xlu0 %3203
        %3205 = vrot.lane.b32.xlu0 %v3164, 96
        %v3206 = vpop.permute.xlu0 %3205
        %3207 = vrot.lane.b32.xlu0 %v3165, 96
        %v3208 = vpop.permute.xlu0 %3207
        %3209 = vrot.lane.b32.xlu0 %v3166, 96
        %v3210 = vpop.permute.xlu0 %3209
        %3211 = vrot.lane.b32.xlu0 %v3167, 96
        %v3212 = vpop.permute.xlu0 %3211
        %3213 = vrot.lane.b32.xlu0 %v3168, 96
        %v3214 = vpop.permute.xlu0 %3213
        %3215 = vrot.lane.b32.xlu0 %v3169, 96
        %v3216 = vpop.permute.xlu0 %3215
        %3217 = vrot.lane.b32.xlu0 %v3170, 96
        %v3218 = vpop.permute.xlu0 %3217
        %v3235 = vmul.f32 %v2753, %v3188
        %v3236 = vmul.f32 %v2768, %v3190
        %v3237 = vmul.f32 %v2783, %v3192
        %v3238 = vmul.f32 %v2798, %v3194
        %v3239 = vmul.f32 %v2813, %v3196
        %v3240 = vmul.f32 %v2828, %v3198
        %v3241 = vmul.f32 %v2843, %v3200
        %v3242 = vmul.f32 %v2858, %v3202
        %v3243 = vmul.f32 %v2873, %v3204
        %v3244 = vmul.f32 %v2888, %v3206
        %v3245 = vmul.f32 %v2903, %v3208
        %v3246 = vmul.f32 %v2918, %v3210
        %v3247 = vmul.f32 %v2933, %v3212
        %v3248 = vmul.f32 %v2948, %v3214
        %v3249 = vmul.f32 %v2963, %v3216
        %v3250 = vmul.f32 %v2978, %v3218
        %3267 = vrot.lane.b32.xlu0 %v3235, 96
        %v3268 = vpop.permute.xlu0 %3267
        %3269 = vrot.lane.b32.xlu0 %v3236, 96
        %v3270 = vpop.permute.xlu0 %3269
        %3271 = vrot.lane.b32.xlu0 %v3237, 96
        %v3272 = vpop.permute.xlu0 %3271
        %3273 = vrot.lane.b32.xlu0 %v3238, 96
        %v3274 = vpop.permute.xlu0 %3273
        %3275 = vrot.lane.b32.xlu0 %v3239, 96
        %v3276 = vpop.permute.xlu0 %3275
        %3277 = vrot.lane.b32.xlu0 %v3240, 96
        %v3278 = vpop.permute.xlu0 %3277
        %3279 = vrot.lane.b32.xlu0 %v3241, 96
        %v3280 = vpop.permute.xlu0 %3279
        %3281 = vrot.lane.b32.xlu0 %v3242, 96
        %v3282 = vpop.permute.xlu0 %3281
        %3283 = vrot.lane.b32.xlu0 %v3243, 96
        %v3284 = vpop.permute.xlu0 %3283
        %3285 = vrot.lane.b32.xlu0 %v3244, 96
        %v3286 = vpop.permute.xlu0 %3285
        %3287 = vrot.lane.b32.xlu0 %v3245, 96
        %v3288 = vpop.permute.xlu0 %3287
        %3289 = vrot.lane.b32.xlu0 %v3246, 96
        %v3290 = vpop.permute.xlu0 %3289
        %3291 = vrot.lane.b32.xlu0 %v3247, 96
        %v3292 = vpop.permute.xlu0 %3291
        %3293 = vrot.lane.b32.xlu0 %v3248, 96
        %v3294 = vpop.permute.xlu0 %3293
        %3295 = vrot.lane.b32.xlu0 %v3249, 96
        %v3296 = vpop.permute.xlu0 %3295
        %3297 = vrot.lane.b32.xlu0 %v3250, 96
        %v3298 = vpop.permute.xlu0 %3297
        %3315 = vst.msk [vmem:[%s315] sm:$0xff] %vm483, %v3268
        %3316 = vst.msk [vmem:[%s315 + $0x8] sm:$0xff] %vm483, %v3270
        %3317 = vst.msk [vmem:[%s315 + $0x10] sm:$0xff] %vm483, %v3272
        %3318 = vst.msk [vmem:[%s315 + $0x18] sm:$0xff] %vm483, %v3274
        %3319 = vst.msk [vmem:[%s315 + $0x20] sm:$0xff] %vm483, %v3276
        %3320 = vst.msk [vmem:[%s315 + $0x28] sm:$0xff] %vm483, %v3278
        %3321 = vst.msk [vmem:[%s315 + $0x30] sm:$0xff] %vm483, %v3280
        %3322 = vst.msk [vmem:[%s315 + $0x38] sm:$0xff] %vm483, %v3282
        %3323 = vst.msk [vmem:[%s315 + $0x40] sm:$0xff] %vm483, %v3284
        %3324 = vst.msk [vmem:[%s315 + $0x48] sm:$0xff] %vm483, %v3286
        %3325 = vst.msk [vmem:[%s315 + $0x50] sm:$0xff] %vm483, %v3288
        %3326 = vst.msk [vmem:[%s315 + $0x58] sm:$0xff] %vm483, %v3290
        %3327 = vst.msk [vmem:[%s315 + $0x60] sm:$0xff] %vm483, %v3292
        %3328 = vst.msk [vmem:[%s315 + $0x68] sm:$0xff] %vm483, %v3294
        %3329 = vst.msk [vmem:[%s315 + $0x70] sm:$0xff] %vm483, %v3296
        %3330 = vst.msk [vmem:[%s315 + $0x78] sm:$0xff] %vm483, %v3298
        %s3331 = smul.u32 16, %s20
        %p3332 = scmp.lt.s32.totalorder %s3331, 31
        %s3333 = scalar_select %p3332, %s3331, 31
        %s3334 = smul.addr %s3333, 8
        %s3335 = scalar_lea.vmem %s6, %s3334
        // Predicated region
        $region49: #{tpu_custom_call.1} parent=43 // pred_check
          %p3336 = pneg %p179
        $region50: #{tpu_custom_call.1} parent=43 // pred_check_branch
          %3338 = sbr.rel (%p3336) target = $region52
        $region51: #{tpu_custom_call.1} parent=43 // pred_region
          %s3339 = smul.u32 16, %s20
        $region52: #{tpu_custom_call.1} parent=43 // pred_fallthru
          _
      $region44: #{tpu_custom_call.1} parent=5 // pred_fallthru
        _
      %p3340 = scmp.le.s32.totalorder 2, %s15
      // Predicated region
      $region53: #{tpu_custom_call.1} parent=5 // pred_check
        %p3341 = pneg %p3340
      $region54: #{tpu_custom_call.1} parent=5 // pred_check_branch
        %3343 = sbr.rel (%p3341) target = $region56
      $region55: #{tpu_custom_call.1} parent=5 // pred_region
        %s3344 = ssub.s32 %s15, 2
        // Predicated region
        $region57: #{tpu_custom_call.1} parent=55 // pred_check
          %p3345 = pneg %p185
        $region58: #{tpu_custom_call.1} parent=55 // pred_check_branch
          %3347 = sbr.rel (%p3345) target = $region60
        $region59: #{tpu_custom_call.1} parent=55 // pred_region
          %s3348 = smul.u32 16, %s21
          %p3349 = scmp.lt.s32.totalorder %s3348, 31
          %s3350 = scalar_select %p3349, %s3348, 31
          %s3351 = smul.addr %s3350, 8
          %s3352 = scalar_lea.vmem %s6, %s3351
        $region60: #{tpu_custom_call.1} parent=55 // pred_fallthru
          _
      $region56: #{tpu_custom_call.1} parent=5 // pred_fallthru
        _
    $region6: #{tpu_custom_call.1} parent=1 // loop_footer
      %s19 = sadd.s32 1, %s15
    $region7: #{tpu_custom_call.1} parent=1 // loop_footer_branch
      %14 = sbr.rel target = $region3
    $region8: #{tpu_custom_call.1} parent=1 // loop_exit
      _
    %3353 = vsyncpa [#allocation4], 1
    %s3354 = scalar_lea.sflag [#allocation4], 1
    %3355 = vsyncpa %s3354, 1

</llo_original>
